<compile_context>
chip_gen: v7x
topology: tpu7x:2x2x1
jax: 0.10.0
libtpu: 0.0.40
codegen_flags: <defaults>
</compile_context>

<pallas_src>
import jax
import jax.numpy as jnp
from jax.experimental import pallas as pl
from jax.experimental.pallas import tpu as pltpu

NUM_HEADS = 4
LN_EPS = 1e-5


def _layernorm(x, gamma, beta):
    # LayerNorm over last dim, biased variance, eps=1e-5 (PyTorch defaults), f32.
    mu = jnp.mean(x, axis=-1, keepdims=True)
    var = jnp.mean((x - mu) ** 2, axis=-1, keepdims=True)
    return (x - mu) * jax.lax.rsqrt(var + LN_EPS) * gamma + beta


def _gelu_exact(x):
    # PyTorch nn.GELU() default: exact erf-based GELU (tanh approximation is NOT
    # used, to preserve module semantics).
    return 0.5 * x * (1.0 + jax.lax.erf(x * (2.0 ** -0.5)))


def transformer_block_kernel(
    x_ref,                 # (C, S)      one batch element, native channel-major layout
    ln_w_ref, ln_b_ref,    # (1, C)      shared LayerNorm params (f32)
    wqkv_ref,              # (C, 3C)     fused [Wq*scale | Wk | Wv]  (bf16)
    bqkv_ref,              # (1, 3C)     fused [bq*scale | bk | bv]  (f32)
    wo_ref,                # (NH, hd, C) per-head rows of the output projection (bf16)
    bo_ref,                # (1, C)      f32
    w1_ref, b1_ref,        # (C, 4C) bf16, (1, 4C) f32
    w2_ref, b2_ref,        # (4C, C) bf16, (1, C) f32
    o_ref,                 # (C, S)      f32
):
    C, S = x_ref.shape
    hd = C // NUM_HEADS

    # Single layout change on the way in: (C, S) -> token-major (S, C).
    x = x_ref[...].T                                                   # (S, C) f32

    # LayerNorm params read once, reused by both branches.
    gamma = ln_w_ref[...]
    beta = ln_b_ref[...]

    # ---------------- self-attention branch ----------------
    ln1 = _layernorm(x, gamma, beta)                                   # (S, C) f32

    # One fused QKV matmul (bf16 operands, f32 accumulation); 1/sqrt(hd) is already
    # folded into Wq / bq by the wrapper.
    qkv = jnp.dot(ln1.astype(jnp.bfloat16), wqkv_ref[...],
                  preferred_element_type=jnp.float32) + bqkv_ref[...]  # (S, 3C) f32

    # Head split off a single 2-D transpose: (S, 3C) -> (3C, S) -> (3*NH, hd, S).
    qkv_t = qkv.T.reshape(3 * NUM_HEADS, hd, S)                        # leading split, ~free
    q = jnp.transpose(qkv_t[:NUM_HEADS], (0, 2, 1)).astype(jnp.bfloat16)          # (NH, S, hd)
    k = qkv_t[NUM_HEADS:2 * NUM_HEADS].astype(jnp.bfloat16)                        # (NH, hd, S) pre-transposed
    v = jnp.transpose(qkv_t[2 * NUM_HEADS:], (0, 2, 1)).astype(jnp.bfloat16)       # (NH, S, hd)

    # All heads in one batched matmul; K already (hd, S) so no hidden transpose.
    s = jnp.einsum("hqd,hdk->hqk", q, k, preferred_element_type=jnp.float32)       # (NH, S, S)

    # Softmax in f32; approx reciprocal (EUP) + one Newton step -> f32-accurate rows.
    s = s - jnp.max(s, axis=-1, keepdims=True)
    p = jnp.exp(s)
    denom = jnp.sum(p, axis=-1, keepdims=True)
    r = pl.reciprocal(denom, approx=True)
    r = r * (2.0 - denom * r)
    p = (p * r).astype(jnp.bfloat16)

    ctx = jnp.einsum("hqk,hkd->hqd", p, v, preferred_element_type=jnp.float32)     # (NH, S, hd)

    # Output projection: one batched contraction + cheap sum over heads
    # (concat_h(ctx_h) @ Wo == sum_h ctx_h @ Wo_h).
    attn = jnp.einsum("hqd,hdc->hqc", ctx.astype(jnp.bfloat16), wo_ref[...],
                      preferred_element_type=jnp.float32)                          # (NH, S, C)
    attn = jnp.sum(attn, axis=0) + bo_ref[...]                                     # (S, C)

    x1 = x + attn

    # ---------------- MLP branch (same shared LayerNorm params, as in PyTorch) ----
    ln2 = _layernorm(x1, gamma, beta)
    h1 = jnp.dot(ln2.astype(jnp.bfloat16), w1_ref[...],
                 preferred_element_type=jnp.float32) + b1_ref[...]                 # (S, 4C)
    g = _gelu_exact(h1)
    y = x1 + jnp.dot(g.astype(jnp.bfloat16), w2_ref[...],
                     preferred_element_type=jnp.float32) + b2_ref[...]             # (S, C)

    # Single layout change on the way out.  NOTE(v5e): with S = 64 this is a 64-lane
    # masked store; for real workloads keep H*W >= 128 so it is fully lane-dense.
    o_ref[...] = y.T


def transformer_block(x_bchw, params):
    B, C, H, W = x_bchw.shape
    S = H * W
    hd = C // NUM_HEADS
    scale = 1.0 / float(hd) ** 0.5

    # Free reshape only; the channel-major <-> token-major transpose happens on-chip.
    x_bcs = x_bchw.reshape(B, C, S)

    f32, bf16 = jnp.float32, jnp.bfloat16
    # Trace-time weight prep: fold the attention scale into Wq/bq, fuse QKV into one
    # (C, 3C) matmul, pre-split Wo per head, and store all matmul weights in bf16
    # (f32 accumulation in-kernel).  Biases stay f32 (added post-accumulation).
    wqkv = jnp.concatenate([params["wq"] * scale, params["wk"], params["wv"]],
                           axis=1).astype(bf16)                          # (C, 3C)
    bqkv = jnp.concatenate([params["bq"] * scale, params["bk"], params["bv"]],
                           axis=1).astype(f32)                           # (1, 3C)
    wo_h = params["wo"].reshape(NUM_HEADS, hd, C).astype(bf16)           # (NH, hd, C)
    w1 = params["w1"].astype(bf16)
    w2 = params["w2"].astype(bf16)

    args = (x_bcs, params["ln_w"], params["ln_b"], wqkv, bqkv, wo_h,
            params["bo"], w1, params["b1"], w2, params["b2"])

    def full_spec(a):
        # Whole (tiny) parameter array resident in VMEM; constant block index so it
        # is not re-fetched across the batch grid.
        return pl.BlockSpec(a.shape, lambda b, _n=a.ndim: (0,) * _n)

    in_specs = [pl.BlockSpec((None, C, S), lambda b: (b, 0, 0))]
    in_specs += [full_spec(a) for a in args[1:]]

    out = pl.pallas_call(
        transformer_block_kernel,
        out_shape=jax.ShapeDtypeStruct((B, C, S), jnp.float32),
        grid=(B,),                                         # one batch element per step
        in_specs=in_specs,
        out_specs=pl.BlockSpec((None, C, S), lambda b: (b, 0, 0)),
        compiler_params=pltpu.CompilerParams(
            dimension_semantics=("parallel",)),            # uses both v7x TCs; free on v5e/v6e
    )(*args)

    # TODO(synk): when scaling beyond toy sizes, re-derive per-step block sizes
    # against v7x's 64 MiB VMEM (inputs are double-buffered) and raise
    # vmem_limit_bytes on v5e/v6e toward the 128 MiB physical budget.
    return out.reshape(B, C, H, W)


def init_params(key, dim):
    ks = jax.random.split(key, 14)
    s = 0.05
    nrm = lambda k, shape: (s * jax.random.normal(k, shape)).astype(jnp.float32)
    return {
        "ln_w": 1.0 + nrm(ks[0], (1, dim)),
        "ln_b": nrm(ks[1], (1, dim)),
        # Linear weights stored pre-transposed as (in, out) so the math is x @ W.
        "wq": nrm(ks[2], (dim, dim)),
        "wk": nrm(ks[3], (dim, dim)),
        "wv": nrm(ks[4], (dim, dim)),
        "bq": nrm(ks[5], (1, dim)),
        "bk": nrm(ks[6], (1, dim)),
        "bv": nrm(ks[7], (1, dim)),
        "wo": nrm(ks[8], (dim, dim)),
        "bo": nrm(ks[9], (1, dim)),
        "w1": nrm(ks[10], (dim, 4 * dim)),
        "b1": nrm(ks[11], (1, 4 * dim)),
        "w2": nrm(ks[12], (4 * dim, dim)),
        "b2": nrm(ks[13], (1, dim)),
    }


def reference_forward(x_bchw, p):
    """Pure-JAX f32 reference matching the PyTorch forward semantics."""
    B, C, H, W = x_bchw.shape
    S = H * W
    hd = C // NUM_HEADS
    x = jnp.transpose(x_bchw.reshape(B, C, S), (0, 2, 1))  # (B, S, C)

    def ln(v):
        mu = jnp.mean(v, -1, keepdims=True)
        var = jnp.mean((v - mu) ** 2, -1, keepdims=True)
        return (v - mu) / jnp.sqrt(var + LN_EPS) * p["ln_w"] + p["ln_b"]

    n = ln(x)
    q = n @ p["wq"] + p["bq"]
    k = n @ p["wk"] + p["bk"]
    v = n @ p["wv"] + p["bv"]
    qh = q.reshape(B, S, NUM_HEADS, hd).transpose(0, 2, 1, 3)
    kh = k.reshape(B, S, NUM_HEADS, hd).transpose(0, 2, 1, 3)
    vh = v.reshape(B, S, NUM_HEADS, hd).transpose(0, 2, 1, 3)
    scores = jnp.einsum("bhqd,bhkd->bhqk", qh, kh) / (hd ** 0.5)
    probs = jax.nn.softmax(scores, axis=-1)
    a = jnp.einsum("bhqk,bhkd->bhqd", probs, vh).transpose(0, 2, 1, 3).reshape(B, S, C)
    a = a @ p["wo"] + p["bo"]
    x1 = x + a
    n2 = ln(x1)
    h1 = n2 @ p["w1"] + p["b1"]
    g = 0.5 * h1 * (1.0 + jax.lax.erf(h1 / jnp.sqrt(2.0)))
    out = x1 + (g @ p["w2"] + p["b2"])
    return jnp.transpose(out, (0, 2, 1)).reshape(B, C, H, W)


if __name__ == "__main__":
    B, C, H, W = 2, 32, 8, 8   # dim=32 (divisible by 4 heads), S = 64 tokens
    key = jax.random.PRNGKey(0)
    kx, kp = jax.random.split(key)
    x = jax.random.normal(kx, (B, C, H, W), dtype=jnp.float32)
    params = init_params(kp, C)

    fwd = jax.jit(transformer_block)
    y = jax.block_until_ready(fwd(x, params))

    y_ref = reference_forward(x, params)
    assert y.shape == (B, C, H, W)
    # bf16 matmul inputs with f32 accumulation land well inside this tolerance.
    assert jnp.allclose(y, y_ref, rtol=2e-3, atol=2e-3), "mismatch vs reference"
    print("KERNEL_OK")
</pallas_src>

<mosaic_0001>
module attributes {stable_mosaic.version = 11 : i64} {
  func.func @transformer_block_kernel(%arg0: i32, %arg1: memref<1x32x64xf32, #tpu.memory_space<vmem>>, %arg2: memref<1x32xf32, #tpu.memory_space<vmem>>, %arg3: memref<1x32xf32, #tpu.memory_space<vmem>>, %arg4: memref<32x96xbf16, #tpu.memory_space<vmem>>, %arg5: memref<1x96xf32, #tpu.memory_space<vmem>>, %arg6: memref<4x8x32xbf16, #tpu.memory_space<vmem>>, %arg7: memref<1x32xf32, #tpu.memory_space<vmem>>, %arg8: memref<32x128xbf16, #tpu.memory_space<vmem>>, %arg9: memref<1x128xf32, #tpu.memory_space<vmem>>, %arg10: memref<128x32xbf16, #tpu.memory_space<vmem>>, %arg11: memref<1x32xf32, #tpu.memory_space<vmem>>, %arg12: memref<1x32x64xf32, #tpu.memory_space<vmem>>) attributes {dimension_semantics = [#tpu.dimension_semantics<parallel>], iteration_bounds = array<i64: 2>, scalar_prefetch = 0 : i64, scratch_operands = 0 : i64, tpu.core_type = #tpu.core_type<tc>, window_params = [{transform_indices = @transform_0, window_bounds = array<i64: 1, 32, 64>}, {pipeline_mode = #tpu.pipeline_mode<synchronous>, transform_indices = @transform_1, window_bounds = array<i64: 1, 32>}, {pipeline_mode = #tpu.pipeline_mode<synchronous>, transform_indices = @transform_2, window_bounds = array<i64: 1, 32>}, {pipeline_mode = #tpu.pipeline_mode<synchronous>, transform_indices = @transform_3, window_bounds = array<i64: 32, 96>}, {pipeline_mode = #tpu.pipeline_mode<synchronous>, transform_indices = @transform_4, window_bounds = array<i64: 1, 96>}, {pipeline_mode = #tpu.pipeline_mode<synchronous>, transform_indices = @transform_5, window_bounds = array<i64: 4, 8, 32>}, {pipeline_mode = #tpu.pipeline_mode<synchronous>, transform_indices = @transform_6, window_bounds = array<i64: 1, 32>}, {pipeline_mode = #tpu.pipeline_mode<synchronous>, transform_indices = @transform_7, window_bounds = array<i64: 32, 128>}, {pipeline_mode = #tpu.pipeline_mode<synchronous>, transform_indices = @transform_8, window_bounds = array<i64: 1, 128>}, {pipeline_mode = #tpu.pipeline_mode<synchronous>, transform_indices = @transform_9, window_bounds = array<i64: 128, 32>}, {pipeline_mode = #tpu.pipeline_mode<synchronous>, transform_indices = @transform_10, window_bounds = array<i64: 1, 32>}, {transform_indices = @transform_11, window_bounds = array<i64: 1, 32, 64>}]} {
    %c0 = arith.constant 0 : index
    %c0_0 = arith.constant 0 : index
    %c0_1 = arith.constant 0 : index
    %0 = vector.load %arg1[%c0, %c0_0, %c0_1] : memref<1x32x64xf32, #tpu.memory_space<vmem>>, vector<1x32x64xf32>
    %1 = vector.shape_cast %0 : vector<1x32x64xf32> to vector<32x64xf32>
    %2 = tpu.transpose %1, [1, 0] : vector<32x64xf32> -> vector<64x32xf32>
    %c0_2 = arith.constant 0 : index
    %c0_3 = arith.constant 0 : index
    %3 = vector.load %arg2[%c0_2, %c0_3] : memref<1x32xf32, #tpu.memory_space<vmem>>, vector<1x32xf32>
    %c0_4 = arith.constant 0 : index
    %c0_5 = arith.constant 0 : index
    %4 = vector.load %arg3[%c0_4, %c0_5] : memref<1x32xf32, #tpu.memory_space<vmem>>, vector<1x32xf32>
    %cst = arith.constant dense<0.000000e+00> : vector<64xf32>
    %5 = vector.multi_reduction <add>, %2, %cst [1] : vector<64x32xf32> to vector<64xf32>
    %6 = vector.shape_cast %5 : vector<64xf32> to vector<64x1xf32>
    %cst_6 = arith.constant 3.200000e+01 : f32
    %7 = vector.broadcast %cst_6 : f32 to vector<64x1xf32>
    %8 = arith.divf %6, %7 : vector<64x1xf32>
    %9 = vector.broadcast %8 : vector<64x1xf32> to vector<64x32xf32>
    %10 = arith.subf %2, %9 : vector<64x32xf32>
    %11 = arith.mulf %10, %10 : vector<64x32xf32>
    %cst_7 = arith.constant dense<0.000000e+00> : vector<64xf32>
    %12 = vector.multi_reduction <add>, %11, %cst_7 [1] : vector<64x32xf32> to vector<64xf32>
    %13 = vector.shape_cast %12 : vector<64xf32> to vector<64x1xf32>
    %cst_8 = arith.constant 3.200000e+01 : f32
    %14 = vector.broadcast %cst_8 : f32 to vector<64x1xf32>
    %15 = arith.divf %13, %14 : vector<64x1xf32>
    %16 = vector.broadcast %8 : vector<64x1xf32> to vector<64x32xf32>
    %17 = arith.subf %2, %16 : vector<64x32xf32>
    %cst_9 = arith.constant 9.99999974E-6 : f32
    %18 = vector.broadcast %cst_9 : f32 to vector<64x1xf32>
    %19 = arith.addf %15, %18 : vector<64x1xf32>
    %20 = math.rsqrt %19 : vector<64x1xf32>
    %21 = vector.broadcast %20 : vector<64x1xf32> to vector<64x32xf32>
    %22 = arith.mulf %17, %21 : vector<64x32xf32>
    %23 = vector.broadcast %3 : vector<1x32xf32> to vector<64x32xf32>
    %24 = arith.mulf %22, %23 : vector<64x32xf32>
    %25 = vector.broadcast %4 : vector<1x32xf32> to vector<64x32xf32>
    %26 = arith.addf %24, %25 : vector<64x32xf32>
    %27 = arith.truncf %26 : vector<64x32xf32> to vector<64x32xbf16>
    %c0_10 = arith.constant 0 : index
    %c0_11 = arith.constant 0 : index
    %28 = vector.load %arg4[%c0_10, %c0_11] : memref<32x96xbf16, #tpu.memory_space<vmem>>, vector<32x96xbf16>
    %cst_12 = arith.constant dense<0.000000e+00> : vector<64x96xf32>
    %29 = tpu.matmul %27, %28, %cst_12 {dimension_numbers = #tpu.dot_dimension_numbers<[1], [0], [0], [1], [0, 0, 1, 1], [], []>} : vector<64x32xbf16>, vector<32x96xbf16>, vector<64x96xf32> -> vector<64x96xf32>
    %c0_13 = arith.constant 0 : index
    %c0_14 = arith.constant 0 : index
    %30 = vector.load %arg5[%c0_13, %c0_14] : memref<1x96xf32, #tpu.memory_space<vmem>>, vector<1x96xf32>
    %31 = vector.broadcast %30 : vector<1x96xf32> to vector<64x96xf32>
    %32 = arith.addf %29, %31 : vector<64x96xf32>
    %33 = tpu.transpose %32, [1, 0] : vector<64x96xf32> -> vector<96x64xf32>
    %34 = vector.shape_cast %33 : vector<96x64xf32> to vector<12x8x64xf32>
    %35 = vector.extract_strided_slice %34 {offsets = [0, 0, 0], sizes = [4, 8, 64], strides = [1, 1, 1]} : vector<12x8x64xf32> to vector<4x8x64xf32>
    %36 = tpu.transpose %35, [0, 2, 1] : vector<4x8x64xf32> -> vector<4x64x8xf32>
    %37 = arith.truncf %36 : vector<4x64x8xf32> to vector<4x64x8xbf16>
    %38 = vector.extract_strided_slice %34 {offsets = [4, 0, 0], sizes = [4, 8, 64], strides = [1, 1, 1]} : vector<12x8x64xf32> to vector<4x8x64xf32>
    %39 = arith.truncf %38 : vector<4x8x64xf32> to vector<4x8x64xbf16>
    %40 = vector.extract_strided_slice %34 {offsets = [8, 0, 0], sizes = [4, 8, 64], strides = [1, 1, 1]} : vector<12x8x64xf32> to vector<4x8x64xf32>
    %41 = tpu.transpose %40, [0, 2, 1] : vector<4x8x64xf32> -> vector<4x64x8xf32>
    %42 = arith.truncf %41 : vector<4x64x8xf32> to vector<4x64x8xbf16>
    "tpu.trace_start"() <{level = 10 : i32, message = "hqd,hdk->hqk"}> : () -> ()
    %cst_15 = arith.constant dense<0.000000e+00> : vector<4x64x64xf32>
    %43 = tpu.matmul %37, %39, %cst_15 {dimension_numbers = #tpu.dot_dimension_numbers<[2], [1], [1], [2], [0, 0, 0, 1, 1, 2], [0], [0]>} : vector<4x64x8xbf16>, vector<4x8x64xbf16>, vector<4x64x64xf32> -> vector<4x64x64xf32>
    "tpu.trace_stop"() : () -> ()
    %cst_16 = arith.constant dense<0xFF800000> : vector<4x64xf32>
    %44 = vector.multi_reduction <maximumf>, %43, %cst_16 [2] : vector<4x64x64xf32> to vector<4x64xf32>
    %45 = vector.shape_cast %44 : vector<4x64xf32> to vector<4x64x1xf32>
    %46 = vector.broadcast %45 : vector<4x64x1xf32> to vector<4x64x64xf32>
    %47 = arith.subf %43, %46 : vector<4x64x64xf32>
    %48 = math.exp %47 : vector<4x64x64xf32>
    %cst_17 = arith.constant dense<0.000000e+00> : vector<4x64xf32>
    %49 = vector.multi_reduction <add>, %48, %cst_17 [2] : vector<4x64x64xf32> to vector<4x64xf32>
    %50 = vector.shape_cast %49 : vector<4x64xf32> to vector<4x64x1xf32>
    %51 = tpu.reciprocal %50 {approx = true} : vector<4x64x1xf32> -> vector<4x64x1xf32>
    %52 = arith.mulf %50, %51 : vector<4x64x1xf32>
    %cst_18 = arith.constant 2.000000e+00 : f32
    %53 = vector.broadcast %cst_18 : f32 to vector<4x64x1xf32>
    %54 = arith.subf %53, %52 : vector<4x64x1xf32>
    %55 = arith.mulf %51, %54 : vector<4x64x1xf32>
    %56 = vector.broadcast %55 : vector<4x64x1xf32> to vector<4x64x64xf32>
    %57 = arith.mulf %48, %56 : vector<4x64x64xf32>
    %58 = arith.truncf %57 : vector<4x64x64xf32> to vector<4x64x64xbf16>
    "tpu.trace_start"() <{level = 10 : i32, message = "hqk,hkd->hqd"}> : () -> ()
    %cst_19 = arith.constant dense<0.000000e+00> : vector<4x64x8xf32>
    %59 = tpu.matmul %58, %42, %cst_19 {dimension_numbers = #tpu.dot_dimension_numbers<[2], [1], [1], [2], [0, 0, 0, 1, 1, 2], [0], [0]>} : vector<4x64x64xbf16>, vector<4x64x8xbf16>, vector<4x64x8xf32> -> vector<4x64x8xf32>
    "tpu.trace_stop"() : () -> ()
    %60 = arith.truncf %59 : vector<4x64x8xf32> to vector<4x64x8xbf16>
    %c0_20 = arith.constant 0 : index
    %c0_21 = arith.constant 0 : index
    %c0_22 = arith.constant 0 : index
    %61 = vector.load %arg6[%c0_20, %c0_21, %c0_22] : memref<4x8x32xbf16, #tpu.memory_space<vmem>>, vector<4x8x32xbf16>
    "tpu.trace_start"() <{level = 10 : i32, message = "hqd,hdc->hqc"}> : () -> ()
    %cst_23 = arith.constant dense<0.000000e+00> : vector<4x64x32xf32>
    %62 = tpu.matmul %60, %61, %cst_23 {dimension_numbers = #tpu.dot_dimension_numbers<[2], [1], [1], [2], [0, 0, 0, 1, 1, 2], [0], [0]>} : vector<4x64x8xbf16>, vector<4x8x32xbf16>, vector<4x64x32xf32> -> vector<4x64x32xf32>
    "tpu.trace_stop"() : () -> ()
    %cst_24 = arith.constant dense<0.000000e+00> : vector<64x32xf32>
    %63 = vector.multi_reduction <add>, %62, %cst_24 [0] : vector<4x64x32xf32> to vector<64x32xf32>
    %c0_25 = arith.constant 0 : index
    %c0_26 = arith.constant 0 : index
    %64 = vector.load %arg7[%c0_25, %c0_26] : memref<1x32xf32, #tpu.memory_space<vmem>>, vector<1x32xf32>
    %65 = vector.broadcast %64 : vector<1x32xf32> to vector<64x32xf32>
    %66 = arith.addf %63, %65 : vector<64x32xf32>
    %67 = arith.addf %2, %66 : vector<64x32xf32>
    %cst_27 = arith.constant dense<0.000000e+00> : vector<64xf32>
    %68 = vector.multi_reduction <add>, %67, %cst_27 [1] : vector<64x32xf32> to vector<64xf32>
    %69 = vector.shape_cast %68 : vector<64xf32> to vector<64x1xf32>
    %cst_28 = arith.constant 3.200000e+01 : f32
    %70 = vector.broadcast %cst_28 : f32 to vector<64x1xf32>
    %71 = arith.divf %69, %70 : vector<64x1xf32>
    %72 = vector.broadcast %71 : vector<64x1xf32> to vector<64x32xf32>
    %73 = arith.subf %67, %72 : vector<64x32xf32>
    %74 = arith.mulf %73, %73 : vector<64x32xf32>
    %cst_29 = arith.constant dense<0.000000e+00> : vector<64xf32>
    %75 = vector.multi_reduction <add>, %74, %cst_29 [1] : vector<64x32xf32> to vector<64xf32>
    %76 = vector.shape_cast %75 : vector<64xf32> to vector<64x1xf32>
    %cst_30 = arith.constant 3.200000e+01 : f32
    %77 = vector.broadcast %cst_30 : f32 to vector<64x1xf32>
    %78 = arith.divf %76, %77 : vector<64x1xf32>
    %79 = vector.broadcast %71 : vector<64x1xf32> to vector<64x32xf32>
    %80 = arith.subf %67, %79 : vector<64x32xf32>
    %cst_31 = arith.constant 9.99999974E-6 : f32
    %81 = vector.broadcast %cst_31 : f32 to vector<64x1xf32>
    %82 = arith.addf %78, %81 : vector<64x1xf32>
    %83 = math.rsqrt %82 : vector<64x1xf32>
    %84 = vector.broadcast %83 : vector<64x1xf32> to vector<64x32xf32>
    %85 = arith.mulf %80, %84 : vector<64x32xf32>
    %86 = vector.broadcast %3 : vector<1x32xf32> to vector<64x32xf32>
    %87 = arith.mulf %85, %86 : vector<64x32xf32>
    %88 = vector.broadcast %4 : vector<1x32xf32> to vector<64x32xf32>
    %89 = arith.addf %87, %88 : vector<64x32xf32>
    %90 = arith.truncf %89 : vector<64x32xf32> to vector<64x32xbf16>
    %c0_32 = arith.constant 0 : index
    %c0_33 = arith.constant 0 : index
    %91 = vector.load %arg8[%c0_32, %c0_33] : memref<32x128xbf16, #tpu.memory_space<vmem>>, vector<32x128xbf16>
    %cst_34 = arith.constant dense<0.000000e+00> : vector<64x128xf32>
    %92 = tpu.matmul %90, %91, %cst_34 {dimension_numbers = #tpu.dot_dimension_numbers<[1], [0], [0], [1], [0, 0, 1, 1], [], []>} : vector<64x32xbf16>, vector<32x128xbf16>, vector<64x128xf32> -> vector<64x128xf32>
    %c0_35 = arith.constant 0 : index
    %c0_36 = arith.constant 0 : index
    %93 = vector.load %arg9[%c0_35, %c0_36] : memref<1x128xf32, #tpu.memory_space<vmem>>, vector<1x128xf32>
    %94 = vector.broadcast %93 : vector<1x128xf32> to vector<64x128xf32>
    %95 = arith.addf %92, %94 : vector<64x128xf32>
    %cst_37 = arith.constant 5.000000e-01 : f32
    %96 = vector.broadcast %cst_37 : f32 to vector<64x128xf32>
    %97 = arith.mulf %96, %95 : vector<64x128xf32>
    %cst_38 = arith.constant 0.707106769 : f32
    %98 = vector.broadcast %cst_38 : f32 to vector<64x128xf32>
    %99 = arith.mulf %95, %98 : vector<64x128xf32>
    %100 = math.erf %99 : vector<64x128xf32>
    %cst_39 = arith.constant 1.000000e+00 : f32
    %101 = vector.broadcast %cst_39 : f32 to vector<64x128xf32>
    %102 = arith.addf %101, %100 : vector<64x128xf32>
    %103 = arith.mulf %97, %102 : vector<64x128xf32>
    %104 = arith.truncf %103 : vector<64x128xf32> to vector<64x128xbf16>
    %c0_40 = arith.constant 0 : index
    %c0_41 = arith.constant 0 : index
    %105 = vector.load %arg10[%c0_40, %c0_41] : memref<128x32xbf16, #tpu.memory_space<vmem>>, vector<128x32xbf16>
    %cst_42 = arith.constant dense<0.000000e+00> : vector<64x32xf32>
    %106 = tpu.matmul %104, %105, %cst_42 {dimension_numbers = #tpu.dot_dimension_numbers<[1], [0], [0], [1], [0, 0, 1, 1], [], []>} : vector<64x128xbf16>, vector<128x32xbf16>, vector<64x32xf32> -> vector<64x32xf32>
    %107 = arith.addf %67, %106 : vector<64x32xf32>
    %c0_43 = arith.constant 0 : index
    %c0_44 = arith.constant 0 : index
    %108 = vector.load %arg11[%c0_43, %c0_44] : memref<1x32xf32, #tpu.memory_space<vmem>>, vector<1x32xf32>
    %109 = vector.broadcast %108 : vector<1x32xf32> to vector<64x32xf32>
    %110 = arith.addf %107, %109 : vector<64x32xf32>
    %111 = tpu.transpose %110, [1, 0] : vector<64x32xf32> -> vector<32x64xf32>
    %c0_45 = arith.constant 0 : index
    %c0_46 = arith.constant 0 : index
    %c0_47 = arith.constant 0 : index
    %112 = vector.load %arg12[%c0_45, %c0_46, %c0_47] : memref<1x32x64xf32, #tpu.memory_space<vmem>>, vector<1x32x64xf32>
    %113 = vector.shape_cast %112 : vector<1x32x64xf32> to vector<32x64xf32>
    %114 = vector.shape_cast %111 : vector<32x64xf32> to vector<1x32x64xf32>
    tpu.vector_store %arg12[%c0_45, %c0_46, %c0_47], %114 {strides = array<i32>} : memref<1x32x64xf32, #tpu.memory_space<vmem>>, vector<1x32x64xf32>,
    return
  }
  func.func @transform_0(%arg0: i32) -> (i32, i32, i32) {
    %c0_i32 = arith.constant 0 : i32
    %c0_i32_0 = arith.constant 0 : i32
    %c0_i32_1 = arith.constant 0 : i32
    return %arg0, %c0_i32, %c0_i32_0 : i32, i32, i32
  }
  func.func @transform_1(%arg0: i32) -> (i32, i32) {
    %c0_i32 = arith.constant 0 : i32
    %c0_i32_0 = arith.constant 0 : i32
    %c0_i32_1 = arith.constant 0 : i32
    return %c0_i32, %c0_i32_0 : i32, i32
  }
  func.func @transform_2(%arg0: i32) -> (i32, i32) {
    %c0_i32 = arith.constant 0 : i32
    %c0_i32_0 = arith.constant 0 : i32
    %c0_i32_1 = arith.constant 0 : i32
    return %c0_i32, %c0_i32_0 : i32, i32
  }
  func.func @transform_3(%arg0: i32) -> (i32, i32) {
    %c0_i32 = arith.constant 0 : i32
    %c0_i32_0 = arith.constant 0 : i32
    %c0_i32_1 = arith.constant 0 : i32
    return %c0_i32, %c0_i32_0 : i32, i32
  }
  func.func @transform_4(%arg0: i32) -> (i32, i32) {
    %c0_i32 = arith.constant 0 : i32
    %c0_i32_0 = arith.constant 0 : i32
    %c0_i32_1 = arith.constant 0 : i32
    return %c0_i32, %c0_i32_0 : i32, i32
  }
  func.func @transform_5(%arg0: i32) -> (i32, i32, i32) {
    %c0_i32 = arith.constant 0 : i32
    %c0_i32_0 = arith.constant 0 : i32
    %c0_i32_1 = arith.constant 0 : i32
    %c0_i32_2 = arith.constant 0 : i32
    return %c0_i32, %c0_i32_0, %c0_i32_1 : i32, i32, i32
  }
  func.func @transform_6(%arg0: i32) -> (i32, i32) {
    %c0_i32 = arith.constant 0 : i32
    %c0_i32_0 = arith.constant 0 : i32
    %c0_i32_1 = arith.constant 0 : i32
    return %c0_i32, %c0_i32_0 : i32, i32
  }
  func.func @transform_7(%arg0: i32) -> (i32, i32) {
    %c0_i32 = arith.constant 0 : i32
    %c0_i32_0 = arith.constant 0 : i32
    %c0_i32_1 = arith.constant 0 : i32
    return %c0_i32, %c0_i32_0 : i32, i32
  }
  func.func @transform_8(%arg0: i32) -> (i32, i32) {
    %c0_i32 = arith.constant 0 : i32
    %c0_i32_0 = arith.constant 0 : i32
    %c0_i32_1 = arith.constant 0 : i32
    return %c0_i32, %c0_i32_0 : i32, i32
  }
  func.func @transform_9(%arg0: i32) -> (i32, i32) {
    %c0_i32 = arith.constant 0 : i32
    %c0_i32_0 = arith.constant 0 : i32
    %c0_i32_1 = arith.constant 0 : i32
    return %c0_i32, %c0_i32_0 : i32, i32
  }
  func.func @transform_10(%arg0: i32) -> (i32, i32) {
    %c0_i32 = arith.constant 0 : i32
    %c0_i32_0 = arith.constant 0 : i32
    %c0_i32_1 = arith.constant 0 : i32
    return %c0_i32, %c0_i32_0 : i32, i32
  }
  func.func @transform_11(%arg0: i32) -> (i32, i32, i32) {
    %c0_i32 = arith.constant 0 : i32
    %c0_i32_0 = arith.constant 0 : i32
    %c0_i32_1 = arith.constant 0 : i32
    return %arg0, %c0_i32, %c0_i32_0 : i32, i32, i32
  }
}

</mosaic_0001>

<llo_original>
// kernel: transformer_block.1
$region0: #{transformer_block.1}
  #allocation0 [shape = 'u32[]', space=smem, size = 0x4, offset = 0x4, fixed_abs, tag = 'smem constant byte address 0x4 - core index']
  #allocation1 [shape = 'u32[144,128]{1,0:T(1,128)}', space=vmem, size = 0x12000, scoped, tag = 'internal scratch']
  %s0 = inlined_call_operand.vmem [shape: f32[2,32,64], index: 0, kind: input, shape index: {}]
  %s1 = inlined_call_operand.vmem [shape: f32[1,32], index: 1, kind: input, shape index: {}]
  %s2 = inlined_call_operand.vmem [shape: f32[1,32], index: 2, kind: input, shape index: {}]
  %s3 = inlined_call_operand.vmem [shape: bf16[32,96], index: 3, kind: input, shape index: {}]
  %s4 = inlined_call_operand.vmem [shape: f32[1,96], index: 4, kind: input, shape index: {}]
  %s5 = inlined_call_operand.vmem [shape: bf16[4,8,32], index: 5, kind: input, shape index: {}]
  %s6 = inlined_call_operand.vmem [shape: f32[1,32], index: 6, kind: input, shape index: {}]
  %s7 = inlined_call_operand.vmem [shape: bf16[32,128], index: 7, kind: input, shape index: {}]
  %s8 = inlined_call_operand.vmem [shape: f32[1,128], index: 8, kind: input, shape index: {}]
  %s9 = inlined_call_operand.vmem [shape: bf16[128,32], index: 9, kind: input, shape index: {}]
  %s10 = inlined_call_operand.vmem [shape: f32[1,32], index: 10, kind: input, shape index: {}]
  %s11 = inlined_call_operand.vmem [shape: f32[2,32,64], index: 11, kind: output, shape index: {}]
  %s12 = sld [smem:[#allocation0]]
  $region77: #{transformer_block.1} parent=0
    _
  %s14 = ssub.s32 1, %s12
  %s15 = scalar_select 0, %s14, %s12
  loop: start=0, step=1, limit=4
  $region2: #{transformer_block.1} parent=0 // loop_pre_header
    _
  $region3: #{transformer_block.1} parent=0 // loop_header
    %s17 = sphi 0, %s21
    %p18 = scmp.ge.s32.totalorder %s17, 4
    %s27 = sphi 0, %s29
    %s30 = sphi 0, %s27
    %s31 = sphi 0, %s30
    %s47 = sphi 0, %s31
    %s51 = sphi 0, %s51
    %s53 = sphi 0, %s51
    %s54 = sphi 0, %s53
    %s68 = sphi 0, %s54
    %s72 = sphi 0, %s72
    %s74 = sphi 0, %s72
    %s75 = sphi 0, %s74
    %s89 = sphi 0, %s75
    %s93 = sphi 0, %s93
    %s95 = sphi 0, %s93
    %s96 = sphi 0, %s95
    %s110 = sphi 0, %s96
    %s114 = sphi 0, %s114
    %s116 = sphi 0, %s114
    %s117 = sphi 0, %s116
    %s131 = sphi 0, %s117
    %s135 = sphi 0, %s135
    %s137 = sphi 0, %s135
    %s138 = sphi 0, %s137
    %s152 = sphi 0, %s138
    %s156 = sphi 0, %s156
    %s158 = sphi 0, %s156
    %s159 = sphi 0, %s158
    %s173 = sphi 0, %s159
    %s177 = sphi 0, %s177
    %s179 = sphi 0, %s177
    %s180 = sphi 0, %s179
    %s194 = sphi 0, %s180
    %s198 = sphi 0, %s198
    %s200 = sphi 0, %s198
    %s201 = sphi 0, %s200
    %s215 = sphi 0, %s201
    %s219 = sphi 0, %s219
    %s221 = sphi 0, %s219
    %s222 = sphi 0, %s221
    %s236 = sphi 0, %s222
    %s240 = sphi 0, %s240
    %s242 = sphi 0, %s240
    %s243 = sphi 0, %s242
    %s257 = sphi 0, %s243
    %s263 = sphi 0, %s265
    %s266 = sphi 0, %s263
    %s267 = sphi 0, %s266
    %s283 = sphi 0, %s267
  $region4: #{transformer_block.1} parent=0 // loop_header_branch
    %20 = sbr.rel (%p18) target = $region8
  $region5: #{transformer_block.1} parent=0 // loop_body
    %s22 = ssub.s32 %s17, 1
    %s23 = ssub.s32 %s17, 2
    %s24 = sadd.s32 %s17, 1
    %s25 = ssub.s32 %s17, %s24
    %p26 = scmp.eq.s32.totalorder %s25, 0
    %s28 = sadd.s32 %s27, 1
    %s29 = scalar_select %p26, %s27, %s28
    %p32 = pneg %p26
    %p33 = scmp.eq.s32.totalorder %s17, 1
    %p34 = por %p32, %p33
    %p35 = scmp.ne.s32.totalorder %s27, %s30
    %p36 = scmp.eq.s32.totalorder %s17, 0
    %p37 = por %p35, %p36
    %p38 = scmp.ne.s32.totalorder %s27, %s30
    %p39 = scmp.eq.s32.totalorder %s22, 1
    %p40 = por %p38, %p39
    %p41 = scmp.ne.s32.totalorder %s30, %s31
    %p42 = scmp.eq.s32.totalorder %s22, 0
    %p43 = por %p41, %p42
    %p44 = scmp.ne.s32.totalorder %s30, %s31
    %p45 = scmp.eq.s32.totalorder %s23, 1
    %p46 = por %p44, %p45
    %p48 = scmp.ne.s32.totalorder %s31, %s47
    %p49 = scmp.eq.s32.totalorder %s23, 0
    %p50 = por %p48, %p49
    %s52 = sadd.s32 %s51, 1
    %p55 = scmp.eq.s32.totalorder %s17, 1
    %p56 = scmp.ne.s32.totalorder %s51, %s53
    %p57 = scmp.eq.s32.totalorder %s17, 0
    %p58 = por %p56, %p57
    %p59 = scmp.ne.s32.totalorder %s51, %s53
    %p60 = scmp.eq.s32.totalorder %s22, 1
    %p61 = por %p59, %p60
    %p62 = scmp.ne.s32.totalorder %s53, %s54
    %p63 = scmp.eq.s32.totalorder %s22, 0
    %p64 = por %p62, %p63
    %p65 = scmp.ne.s32.totalorder %s53, %s54
    %p66 = scmp.eq.s32.totalorder %s23, 1
    %p67 = por %p65, %p66
    %p69 = scmp.ne.s32.totalorder %s54, %s68
    %p70 = scmp.eq.s32.totalorder %s23, 0
    %p71 = por %p69, %p70
    %s73 = sadd.s32 %s72, 1
    %p76 = scmp.eq.s32.totalorder %s17, 1
    %p77 = scmp.ne.s32.totalorder %s72, %s74
    %p78 = scmp.eq.s32.totalorder %s17, 0
    %p79 = por %p77, %p78
    %p80 = scmp.ne.s32.totalorder %s72, %s74
    %p81 = scmp.eq.s32.totalorder %s22, 1
    %p82 = por %p80, %p81
    %p83 = scmp.ne.s32.totalorder %s74, %s75
    %p84 = scmp.eq.s32.totalorder %s22, 0
    %p85 = por %p83, %p84
    %p86 = scmp.ne.s32.totalorder %s74, %s75
    %p87 = scmp.eq.s32.totalorder %s23, 1
    %p88 = por %p86, %p87
    %p90 = scmp.ne.s32.totalorder %s75, %s89
    %p91 = scmp.eq.s32.totalorder %s23, 0
    %p92 = por %p90, %p91
    %s94 = sadd.s32 %s93, 1
    %p97 = scmp.eq.s32.totalorder %s17, 1
    %p98 = scmp.ne.s32.totalorder %s93, %s95
    %p99 = scmp.eq.s32.totalorder %s17, 0
    %p100 = por %p98, %p99
    %p101 = scmp.ne.s32.totalorder %s93, %s95
    %p102 = scmp.eq.s32.totalorder %s22, 1
    %p103 = por %p101, %p102
    %p104 = scmp.ne.s32.totalorder %s95, %s96
    %p105 = scmp.eq.s32.totalorder %s22, 0
    %p106 = por %p104, %p105
    %p107 = scmp.ne.s32.totalorder %s95, %s96
    %p108 = scmp.eq.s32.totalorder %s23, 1
    %p109 = por %p107, %p108
    %p111 = scmp.ne.s32.totalorder %s96, %s110
    %p112 = scmp.eq.s32.totalorder %s23, 0
    %p113 = por %p111, %p112
    %s115 = sadd.s32 %s114, 1
    %p118 = scmp.eq.s32.totalorder %s17, 1
    %p119 = scmp.ne.s32.totalorder %s114, %s116
    %p120 = scmp.eq.s32.totalorder %s17, 0
    %p121 = por %p119, %p120
    %p122 = scmp.ne.s32.totalorder %s114, %s116
    %p123 = scmp.eq.s32.totalorder %s22, 1
    %p124 = por %p122, %p123
    %p125 = scmp.ne.s32.totalorder %s116, %s117
    %p126 = scmp.eq.s32.totalorder %s22, 0
    %p127 = por %p125, %p126
    %p128 = scmp.ne.s32.totalorder %s116, %s117
    %p129 = scmp.eq.s32.totalorder %s23, 1
    %p130 = por %p128, %p129
    %p132 = scmp.ne.s32.totalorder %s117, %s131
    %p133 = scmp.eq.s32.totalorder %s23, 0
    %p134 = por %p132, %p133
    %s136 = sadd.s32 %s135, 1
    %p139 = scmp.eq.s32.totalorder %s17, 1
    %p140 = scmp.ne.s32.totalorder %s135, %s137
    %p141 = scmp.eq.s32.totalorder %s17, 0
    %p142 = por %p140, %p141
    %p143 = scmp.ne.s32.totalorder %s135, %s137
    %p144 = scmp.eq.s32.totalorder %s22, 1
    %p145 = por %p143, %p144
    %p146 = scmp.ne.s32.totalorder %s137, %s138
    %p147 = scmp.eq.s32.totalorder %s22, 0
    %p148 = por %p146, %p147
    %p149 = scmp.ne.s32.totalorder %s137, %s138
    %p150 = scmp.eq.s32.totalorder %s23, 1
    %p151 = por %p149, %p150
    %p153 = scmp.ne.s32.totalorder %s138, %s152
    %p154 = scmp.eq.s32.totalorder %s23, 0
    %p155 = por %p153, %p154
    %s157 = sadd.s32 %s156, 1
    %p160 = scmp.eq.s32.totalorder %s17, 1
    %p161 = scmp.ne.s32.totalorder %s156, %s158
    %p162 = scmp.eq.s32.totalorder %s17, 0
    %p163 = por %p161, %p162
    %p164 = scmp.ne.s32.totalorder %s156, %s158
    %p165 = scmp.eq.s32.totalorder %s22, 1
    %p166 = por %p164, %p165
    %p167 = scmp.ne.s32.totalorder %s158, %s159
    %p168 = scmp.eq.s32.totalorder %s22, 0
    %p169 = por %p167, %p168
    %p170 = scmp.ne.s32.totalorder %s158, %s159
    %p171 = scmp.eq.s32.totalorder %s23, 1
    %p172 = por %p170, %p171
    %p174 = scmp.ne.s32.totalorder %s159, %s173
    %p175 = scmp.eq.s32.totalorder %s23, 0
    %p176 = por %p174, %p175
    %s178 = sadd.s32 %s177, 1
    %p181 = scmp.eq.s32.totalorder %s17, 1
    %p182 = scmp.ne.s32.totalorder %s177, %s179
    %p183 = scmp.eq.s32.totalorder %s17, 0
    %p184 = por %p182, %p183
    %p185 = scmp.ne.s32.totalorder %s177, %s179
    %p186 = scmp.eq.s32.totalorder %s22, 1
    %p187 = por %p185, %p186
    %p188 = scmp.ne.s32.totalorder %s179, %s180
    %p189 = scmp.eq.s32.totalorder %s22, 0
    %p190 = por %p188, %p189
    %p191 = scmp.ne.s32.totalorder %s179, %s180
    %p192 = scmp.eq.s32.totalorder %s23, 1
    %p193 = por %p191, %p192
    %p195 = scmp.ne.s32.totalorder %s180, %s194
    %p196 = scmp.eq.s32.totalorder %s23, 0
    %p197 = por %p195, %p196
    %s199 = sadd.s32 %s198, 1
    %p202 = scmp.eq.s32.totalorder %s17, 1
    %p203 = scmp.ne.s32.totalorder %s198, %s200
    %p204 = scmp.eq.s32.totalorder %s17, 0
    %p205 = por %p203, %p204
    %p206 = scmp.ne.s32.totalorder %s198, %s200
    %p207 = scmp.eq.s32.totalorder %s22, 1
    %p208 = por %p206, %p207
    %p209 = scmp.ne.s32.totalorder %s200, %s201
    %p210 = scmp.eq.s32.totalorder %s22, 0
    %p211 = por %p209, %p210
    %p212 = scmp.ne.s32.totalorder %s200, %s201
    %p213 = scmp.eq.s32.totalorder %s23, 1
    %p214 = por %p212, %p213
    %p216 = scmp.ne.s32.totalorder %s201, %s215
    %p217 = scmp.eq.s32.totalorder %s23, 0
    %p218 = por %p216, %p217
    %s220 = sadd.s32 %s219, 1
    %p223 = scmp.eq.s32.totalorder %s17, 1
    %p224 = scmp.ne.s32.totalorder %s219, %s221
    %p225 = scmp.eq.s32.totalorder %s17, 0
    %p226 = por %p224, %p225
    %p227 = scmp.ne.s32.totalorder %s219, %s221
    %p228 = scmp.eq.s32.totalorder %s22, 1
    %p229 = por %p227, %p228
    %p230 = scmp.ne.s32.totalorder %s221, %s222
    %p231 = scmp.eq.s32.totalorder %s22, 0
    %p232 = por %p230, %p231
    %p233 = scmp.ne.s32.totalorder %s221, %s222
    %p234 = scmp.eq.s32.totalorder %s23, 1
    %p235 = por %p233, %p234
    %p237 = scmp.ne.s32.totalorder %s222, %s236
    %p238 = scmp.eq.s32.totalorder %s23, 0
    %p239 = por %p237, %p238
    %s241 = sadd.s32 %s240, 1
    %p244 = scmp.eq.s32.totalorder %s17, 1
    %p245 = scmp.ne.s32.totalorder %s240, %s242
    %p246 = scmp.eq.s32.totalorder %s17, 0
    %p247 = por %p245, %p246
    %p248 = scmp.ne.s32.totalorder %s240, %s242
    %p249 = scmp.eq.s32.totalorder %s22, 1
    %p250 = por %p248, %p249
    %p251 = scmp.ne.s32.totalorder %s242, %s243
    %p252 = scmp.eq.s32.totalorder %s22, 0
    %p253 = por %p251, %p252
    %p254 = scmp.ne.s32.totalorder %s242, %s243
    %p255 = scmp.eq.s32.totalorder %s23, 1
    %p256 = por %p254, %p255
    %p258 = scmp.ne.s32.totalorder %s243, %s257
    %p259 = scmp.eq.s32.totalorder %s23, 0
    %p260 = por %p258, %p259
    %s261 = ssub.s32 %s17, %s24
    %p262 = scmp.eq.s32.totalorder %s261, 0
    %s264 = sadd.s32 %s263, 1
    %s265 = scalar_select %p262, %s263, %s264
    %p268 = pneg %p262
    %p269 = scmp.eq.s32.totalorder %s17, 1
    %p270 = por %p268, %p269
    %p271 = scmp.ne.s32.totalorder %s263, %s266
    %p272 = scmp.eq.s32.totalorder %s17, 0
    %p273 = por %p271, %p272
    %p274 = scmp.ne.s32.totalorder %s263, %s266
    %p275 = scmp.eq.s32.totalorder %s22, 1
    %p276 = por %p274, %p275
    %p277 = scmp.ne.s32.totalorder %s266, %s267
    %p278 = scmp.eq.s32.totalorder %s22, 0
    %p279 = por %p277, %p278
    %p280 = scmp.ne.s32.totalorder %s266, %s267
    %p281 = scmp.eq.s32.totalorder %s23, 1
    %p282 = por %p280, %p281
    %p284 = scmp.ne.s32.totalorder %s267, %s283
    %p285 = scmp.eq.s32.totalorder %s23, 0
    %p286 = por %p284, %p285
    %p287 = scmp.le.s32.totalorder 1, %s17
    %p288 = scmp.lt.s32.totalorder %s17, 3
    %p289 = pnand %p287, %p288
    %p290 = pneg %p289
    // Predicated region
    $region9: #{transformer_block.1} parent=5 // pred_check
      _
    $region10: #{transformer_block.1} parent=5 // pred_check_branch
      %292 = sbr.rel (%p289) target = $region12
    $region11: #{transformer_block.1} parent=5 // pred_region
      %s293 = ssub.s32 %s17, 1
      // Predicated region
      $region13: #{transformer_block.1} parent=11 // pred_check
        %p294 = pneg %p64
      $region14: #{transformer_block.1} parent=11 // pred_check_branch
        %296 = sbr.rel (%p294) target = $region16
      $region15: #{transformer_block.1} parent=11 // pred_region
        _
      $region16: #{transformer_block.1} parent=11 // pred_fallthru
        _
      // Predicated region
      $region17: #{transformer_block.1} parent=11 // pred_check
        %p297 = pneg %p85
      $region18: #{transformer_block.1} parent=11 // pred_check_branch
        %299 = sbr.rel (%p297) target = $region20
      $region19: #{transformer_block.1} parent=11 // pred_region
        _
      $region20: #{transformer_block.1} parent=11 // pred_fallthru
        _
      // Predicated region
      $region21: #{transformer_block.1} parent=11 // pred_check
        %p300 = pneg %p106
      $region22: #{transformer_block.1} parent=11 // pred_check_branch
        %302 = sbr.rel (%p300) target = $region24
      $region23: #{transformer_block.1} parent=11 // pred_region
        _
      $region24: #{transformer_block.1} parent=11 // pred_fallthru
        _
      // Predicated region
      $region25: #{transformer_block.1} parent=11 // pred_check
        %p303 = pneg %p127
      $region26: #{transformer_block.1} parent=11 // pred_check_branch
        %305 = sbr.rel (%p303) target = $region28
      $region27: #{transformer_block.1} parent=11 // pred_region
        _
      $region28: #{transformer_block.1} parent=11 // pred_fallthru
        _
      // Predicated region
      $region29: #{transformer_block.1} parent=11 // pred_check
        %p306 = pneg %p148
      $region30: #{transformer_block.1} parent=11 // pred_check_branch
        %308 = sbr.rel (%p306) target = $region32
      $region31: #{transformer_block.1} parent=11 // pred_region
        _
      $region32: #{transformer_block.1} parent=11 // pred_fallthru
        _
      // Predicated region
      $region33: #{transformer_block.1} parent=11 // pred_check
        %p309 = pneg %p169
      $region34: #{transformer_block.1} parent=11 // pred_check_branch
        %311 = sbr.rel (%p309) target = $region36
      $region35: #{transformer_block.1} parent=11 // pred_region
        _
      $region36: #{transformer_block.1} parent=11 // pred_fallthru
        _
      // Predicated region
      $region37: #{transformer_block.1} parent=11 // pred_check
        %p312 = pneg %p190
      $region38: #{transformer_block.1} parent=11 // pred_check_branch
        %314 = sbr.rel (%p312) target = $region40
      $region39: #{transformer_block.1} parent=11 // pred_region
        _
      $region40: #{transformer_block.1} parent=11 // pred_fallthru
        _
      // Predicated region
      $region41: #{transformer_block.1} parent=11 // pred_check
        %p315 = pneg %p211
      $region42: #{transformer_block.1} parent=11 // pred_check_branch
        %317 = sbr.rel (%p315) target = $region44
      $region43: #{transformer_block.1} parent=11 // pred_region
        _
      $region44: #{transformer_block.1} parent=11 // pred_fallthru
        _
      // Predicated region
      $region45: #{transformer_block.1} parent=11 // pred_check
        %p318 = pneg %p232
      $region46: #{transformer_block.1} parent=11 // pred_check_branch
        %320 = sbr.rel (%p318) target = $region48
      $region47: #{transformer_block.1} parent=11 // pred_region
        _
      $region48: #{transformer_block.1} parent=11 // pred_fallthru
        _
      // Predicated region
      $region49: #{transformer_block.1} parent=11 // pred_check
        %p321 = pneg %p253
      $region50: #{transformer_block.1} parent=11 // pred_check_branch
        %323 = sbr.rel (%p321) target = $region52
      $region51: #{transformer_block.1} parent=11 // pred_region
        _
      $region52: #{transformer_block.1} parent=11 // pred_fallthru
        _
    $region12: #{transformer_block.1} parent=5 // pred_fallthru
      _
    %p324 = scmp.lt.s32.totalorder %s17, 2
    // Predicated region
    $region53: #{transformer_block.1} parent=5 // pred_check
      %p325 = pneg %p324
    $region54: #{transformer_block.1} parent=5 // pred_check_branch
      %327 = sbr.rel (%p325) target = $region56
    $region55: #{transformer_block.1} parent=5 // pred_region
      // Predicated region
      $region57: #{transformer_block.1} parent=55 // pred_check
        %p328 = pneg %p37
      $region58: #{transformer_block.1} parent=55 // pred_check_branch
        %330 = sbr.rel (%p328) target = $region60
      $region59: #{transformer_block.1} parent=55 // pred_region
        %p331 = scmp.lt.s32.totalorder %s17, 1
        %s332 = scalar_select %p331, %s17, 1
        %s333 = smul.addr %s332, 4
        %s334 = smul.addr %s333, 8
        %s335 = scalar_lea.vmem %s0, %s334
      $region60: #{transformer_block.1} parent=55 // pred_fallthru
        _
    $region56: #{transformer_block.1} parent=5 // pred_fallthru
      _
    %p336 = scmp.le.s32.totalorder 1, %s17
    %p337 = scmp.lt.s32.totalorder %s17, 3
    %p338 = pnand %p336, %p337
    %p339 = pneg %p338
    // Predicated region
    $region61: #{transformer_block.1} parent=5 // pred_check
      _
    $region62: #{transformer_block.1} parent=5 // pred_check_branch
      %341 = sbr.rel (%p338) target = $region64
    $region63: #{transformer_block.1} parent=5 // pred_region
      %s342 = ssub.s32 %s17, 1
      %p343 = scmp.lt.s32.totalorder %s22, 1
      %s344 = scalar_select %p343, %s22, 1
      %s345 = smul.addr %s344, 4
      %s346 = smul.addr %s345, 8
      %s347 = scalar_lea.vmem %s0, %s346
      %p348 = pneg %p43
      %p349 = pneg %p40
      %p350 = pneg %p64
      %p351 = pneg %p61
      %p352 = pneg %p85
      %p353 = pneg %p82
      %p354 = pneg %p106
      %p355 = pneg %p103
      %p356 = pneg %p127
      %p357 = pneg %p124
      %p358 = pneg %p148
      %p359 = pneg %p145
      %p360 = pneg %p169
      %p361 = pneg %p166
      %p362 = pneg %p190
      %p363 = pneg %p187
      %p364 = pneg %p211
      %p365 = pneg %p208
      %p366 = pneg %p232
      %p367 = pneg %p229
      %p368 = pneg %p253
      %p369 = pneg %p250
      %p370 = pneg %p279
      %p371 = pneg %p276
      %p372 = scmp.lt.s32.totalorder %s22, 1
      %s373 = scalar_select %p372, %s22, 1
      %s374 = smul.addr %s373, 4
      %s375 = smul.addr %s374, 8
      %s376 = scalar_lea.vmem %s11, %s375
      %p377 = scmp.lt.s32.totalorder %s22, 1
      %s378 = scalar_select %p377, %s22, 1
      %s379 = smul.addr %s378, 4
      %s380 = smul.addr %s379, 8
      %s381 = scalar_lea.vmem %s0, %s380
      %p382 = scmp.lt.s32.totalorder %s22, 1
      %s383 = scalar_select %p382, %s22, 1
      %s384 = smul.addr %s383, 4
      %s385 = smul.addr %s384, 8
      %s386 = scalar_lea.vmem %s11, %s385
      %v388 = vld [vmem:[%s381] sm:$0xff]
      %v389 = vld [vmem:[%s381 + $0x8] sm:$0xff]
      %v390 = vld [vmem:[%s381 + $0x10] sm:$0xff]
      %v391 = vld [vmem:[%s381 + $0x18] sm:$0xff]
      %392 = vxpose.xlu0.b32.start [1/16] %v388, 128
      %393 = vxpose.xlu0.b32.cont [2/16] %v389, 128
      %394 = vxpose.xlu0.b32.cont [3/16] %v390, 128
      %395 = vxpose.xlu0.b32.cont [4/16] %v391, 128
      %396 = vxpose.xlu0.b32.cont [5/16] 0.0, 128
      %397 = vxpose.xlu0.b32.cont [6/16] 0.0, 128
      %398 = vxpose.xlu0.b32.cont [7/16] 0.0, 128
      %399 = vxpose.xlu0.b32.cont [8/16] 0.0, 128
      %400 = vxpose.xlu0.b32.cont [9/16] 0.0, 128
      %401 = vxpose.xlu0.b32.cont [10/16] 0.0, 128
      %402 = vxpose.xlu0.b32.cont [11/16] 0.0, 128
      %403 = vxpose.xlu0.b32.cont [12/16] 0.0, 128
      %404 = vxpose.xlu0.b32.cont [13/16] 0.0, 128
      %405 = vxpose.xlu0.b32.cont [14/16] 0.0, 128
      %406 = vxpose.xlu0.b32.cont [15/16] 0.0, 128
      %407 = vxpose.xlu0.b32.end [16/16] 0.0, 128
      %v408 = vpop.trf.xlu0
      %v409 = vpop.trf.xlu0
      %v410 = vpop.trf.xlu0
      %v411 = vpop.trf.xlu0
      %v412 = vpop.trf.xlu0
      %v413 = vpop.trf.xlu0
      %v414 = vpop.trf.xlu0
      %v415 = vpop.trf.xlu0
      %v416 = vpop.trf.xlu0
      %v417 = vpop.trf.xlu0
      %v418 = vpop.trf.xlu0
      %v419 = vpop.trf.xlu0
      %v420 = vpop.trf.xlu0
      %v421 = vpop.trf.xlu0
      %v422 = vpop.trf.xlu0
      %v423 = vpop.trf.xlu0
      %v424 = vld [vmem:[%s1] sm:$0x1]
      %v425 = vld [vmem:[%s2] sm:$0x1]
      %vm426 = vcmask 261120
      %v427 = vsel %vm426, %v408, 0.0
      %428 = vadd.xlane.f32.xlu0 %v427
      %v429 = vpop.xlane.xlu0 %428
      %v430 = vsel %vm426, %v409, 0.0
      %431 = vadd.xlane.f32.xlu0 %v430
      %v432 = vpop.xlane.xlu0 %431
      %v433 = vsel %vm426, %v410, 0.0
      %434 = vadd.xlane.f32.xlu0 %v433
      %v435 = vpop.xlane.xlu0 %434
      %v436 = vsel %vm426, %v411, 0.0
      %437 = vadd.xlane.f32.xlu0 %v436
      %v438 = vpop.xlane.xlu0 %437
      %v439 = vsel %vm426, %v412, 0.0
      %440 = vadd.xlane.f32.xlu0 %v439
      %v441 = vpop.xlane.xlu0 %440
      %v442 = vsel %vm426, %v413, 0.0
      %443 = vadd.xlane.f32.xlu0 %v442
      %v444 = vpop.xlane.xlu0 %443
      %v445 = vsel %vm426, %v414, 0.0
      %446 = vadd.xlane.f32.xlu0 %v445
      %v447 = vpop.xlane.xlu0 %446
      %v448 = vsel %vm426, %v415, 0.0
      %449 = vadd.xlane.f32.xlu0 %v448
      %v450 = vpop.xlane.xlu0 %449
      %v451 = vrcp.pop 32.0
      %v452 = vmul.f32 %v429, %v451
      %v453 = vmul.f32 %v432, %v451
      %v454 = vmul.f32 %v435, %v451
      %v455 = vmul.f32 %v438, %v451
      %v456 = vmul.f32 %v441, %v451
      %v457 = vmul.f32 %v444, %v451
      %v458 = vmul.f32 %v447, %v451
      %v459 = vmul.f32 %v450, %v451
      %v460 = vsub.f32 %v408, %v452
      %v461 = vsub.f32 %v409, %v453
      %v462 = vsub.f32 %v410, %v454
      %v463 = vsub.f32 %v411, %v455
      %v464 = vsub.f32 %v412, %v456
      %v465 = vsub.f32 %v413, %v457
      %v466 = vsub.f32 %v414, %v458
      %v467 = vsub.f32 %v415, %v459
      %v468 = vmul.f32 %v460, %v460
      %v469 = vmul.f32 %v461, %v461
      %v470 = vmul.f32 %v462, %v462
      %v471 = vmul.f32 %v463, %v463
      %v472 = vmul.f32 %v464, %v464
      %v473 = vmul.f32 %v465, %v465
      %v474 = vmul.f32 %v466, %v466
      %v475 = vmul.f32 %v467, %v467
      %v476 = vsel %vm426, %v468, 0.0
      %477 = vadd.xlane.f32.xlu0 %v476
      %v478 = vpop.xlane.xlu0 %477
      %v479 = vsel %vm426, %v469, 0.0
      %480 = vadd.xlane.f32.xlu0 %v479
      %v481 = vpop.xlane.xlu0 %480
      %v482 = vsel %vm426, %v470, 0.0
      %483 = vadd.xlane.f32.xlu0 %v482
      %v484 = vpop.xlane.xlu0 %483
      %v485 = vsel %vm426, %v471, 0.0
      %486 = vadd.xlane.f32.xlu0 %v485
      %v487 = vpop.xlane.xlu0 %486
      %v488 = vsel %vm426, %v472, 0.0
      %489 = vadd.xlane.f32.xlu0 %v488
      %v490 = vpop.xlane.xlu0 %489
      %v491 = vsel %vm426, %v473, 0.0
      %492 = vadd.xlane.f32.xlu0 %v491
      %v493 = vpop.xlane.xlu0 %492
      %v494 = vsel %vm426, %v474, 0.0
      %495 = vadd.xlane.f32.xlu0 %v494
      %v496 = vpop.xlane.xlu0 %495
      %v497 = vsel %vm426, %v475, 0.0
      %498 = vadd.xlane.f32.xlu0 %v497
      %v499 = vpop.xlane.xlu0 %498
      %v500 = vmul.f32 %v478, %v451
      %v501 = vmul.f32 %v481, %v451
      %v502 = vmul.f32 %v484, %v451
      %v503 = vmul.f32 %v487, %v451
      %v504 = vmul.f32 %v490, %v451
      %v505 = vmul.f32 %v493, %v451
      %v506 = vmul.f32 %v496, %v451
      %v507 = vmul.f32 %v499, %v451
      %v508 = vadd.f32 %v500, 1e-05
      %v509 = vadd.f32 %v501, 1e-05
      %v510 = vadd.f32 %v502, 1e-05
      %v511 = vadd.f32 %v503, 1e-05
      %v512 = vadd.f32 %v504, 1e-05
      %v513 = vadd.f32 %v505, 1e-05
      %v514 = vadd.f32 %v506, 1e-05
      %v515 = vadd.f32 %v507, 1e-05
      %v516 = vrsqrt.pop %v508
      %v517 = vrsqrt.pop %v509
      %v518 = vrsqrt.pop %v510
      %v519 = vrsqrt.pop %v511
      %v520 = vrsqrt.pop %v512
      %v521 = vrsqrt.pop %v513
      %v522 = vrsqrt.pop %v514
      %v523 = vrsqrt.pop %v515
      %v524 = vmul.f32 %v460, %v516
      %v525 = vmul.f32 %v461, %v517
      %v526 = vmul.f32 %v462, %v518
      %v527 = vmul.f32 %v463, %v519
      %v528 = vmul.f32 %v464, %v520
      %v529 = vmul.f32 %v465, %v521
      %v530 = vmul.f32 %v466, %v522
      %v531 = vmul.f32 %v467, %v523
      %v533 = vlaneseq
      %v534 = vshrl.u32 %v533, 7
      %v535 = vsub.s32 0, %v534
      %v536 = vrot.slane %v424, %v535
      %v538 = vmul.f32 %v524, %v536
      %v539 = vmul.f32 %v525, %v536
      %v540 = vmul.f32 %v526, %v536
      %v541 = vmul.f32 %v527, %v536
      %v542 = vmul.f32 %v528, %v536
      %v543 = vmul.f32 %v529, %v536
      %v544 = vmul.f32 %v530, %v536
      %v545 = vmul.f32 %v531, %v536
      %v547 = vlaneseq
      %v548 = vshrl.u32 %v547, 7
      %v549 = vsub.s32 0, %v548
      %v550 = vrot.slane %v425, %v549
      %v552 = vadd.f32 %v538, %v550
      %v553 = vadd.f32 %v539, %v550
      %v554 = vadd.f32 %v540, %v550
      %v555 = vadd.f32 %v541, %v550
      %v556 = vadd.f32 %v542, %v550
      %v557 = vadd.f32 %v543, %v550
      %v558 = vadd.f32 %v544, %v550
      %v559 = vadd.f32 %v545, %v550
      %v560 = vpack.c.bf16 %v553, %v552
      %v561 = vpack.c.bf16 %v555, %v554
      %v562 = vpack.c.bf16 %v557, %v556
      %v563 = vpack.c.bf16 %v559, %v558
      %v564 = vld [vmem:[%s3] sm:$0xf]
      %v565 = vld [vmem:[%s3 + $0x4] sm:$0xf]
      %v566 = vld [vmem:[%s3 + $0x8] sm:$0xf]
      %v567 = vld [vmem:[%s3 + $0xc] sm:$0xf]
      %v568 = vld [vmem:[%s4] sm:$0x1]
      %v570 = vlaneseq
      %v571 = vshrl.u32 %v570, 7
      %v572 = vsub.s32 0, %v571
      %v573 = vrot.slane %v568, %v572
      %v579 = vunpack.c.l.b16 %v564
      %v580 = vunpack.c.l.b16 %v565
      %v581 = vunpack.c.l.b16 %v566
      %v582 = vunpack.c.l.b16 %v567
      %v583 = vpack.c.b16 %v580, %v579
      %v584 = vpack.c.b16 %v582, %v581
      %v588 = vsel %vm426, %v560, 0
      %v591 = vsel %vm426, %v561, 0
      %v594 = vsel %vm426, %v562, 0
      %v597 = vsel %vm426, %v563, 0
      %599 = vmatprep.subr.bf16.mxu0 0
      %600 = vmatpush1.bf16.msra.mxu0 %v583
      %601 = vmatprep.subr.bf16.mxu0 0
      %602 = vmatpush1.bf16.msra.mxu0 %v584
      %603 = vmatprep.subr.bf16.mxu0 0
      %604 = vmatpush1.bf16.msra.mxu0 0
      %605 = vmatprep.subr.bf16.mxu0 0
      %606 = vmatpush1.bf16.msra.mxu0 0
      %607 = vmatprep.subr.bf16.mxu0 0
      %608 = vmatpush1.bf16.msra.mxu0 0
      %609 = vmatprep.subr.bf16.mxu0 0
      %610 = vmatpush1.bf16.msra.mxu0 0
      %611 = vmatprep.subr.bf16.mxu0 0
      %612 = vmatpush1.bf16.msra.mxu0 0
      %613 = vmatprep.subr.bf16.mxu0 0
      %614 = vmatpush1.bf16.msra.mxu0 0
      %615 = vmatprep.subr.bf16.mxu0 0
      %616 = vmatpush1.bf16.msra.mxu0 0
      %617 = vmatprep.subr.bf16.mxu0 0
      %618 = vmatpush1.bf16.msra.mxu0 0
      %619 = vmatprep.subr.bf16.mxu0 0
      %620 = vmatpush1.bf16.msra.mxu0 0
      %621 = vmatprep.subr.bf16.mxu0 0
      %622 = vmatpush1.bf16.msra.mxu0 0
      %623 = vmatprep.subr.bf16.mxu0 0
      %624 = vmatpush1.bf16.msra.mxu0 0
      %625 = vmatprep.subr.bf16.mxu0 0
      %626 = vmatpush1.bf16.msra.mxu0 0
      %627 = vmatprep.subr.bf16.mxu0 0
      %628 = vmatpush1.bf16.msra.mxu0 0
      %629 = vmatprep.subr.bf16.mxu0 0
      %630 = vmatpush1.bf16.msra.mxu0 0
      %631 = vmatprep.mubr.bf16.mxu0 0
      %632 = vmatmul.mubr.bf16.gmra.mrb[0].mxu0 %v588
      %v633 = vpop.f32.mrb[0].mxu0
      %v634 = vadd.f32 %v573, %v633
      %v635 = vpop.f32.mrb[0].mxu0
      %v636 = vpop.f32.mrb[0].mxu0
      %v637 = vadd.f32 %v573, %v636
      %v638 = vpop.f32.mrb[0].mxu0
      %639 = vmatprep.mubr.bf16.mxu0 0
      %640 = vmatmul.mubr.bf16.gmra.mrb[0].mxu0 %v591
      %v641 = vpop.f32.mrb[0].mxu0
      %v642 = vadd.f32 %v573, %v641
      %v643 = vpop.f32.mrb[0].mxu0
      %v644 = vpop.f32.mrb[0].mxu0
      %v645 = vadd.f32 %v573, %v644
      %v646 = vpop.f32.mrb[0].mxu0
      %647 = vmatprep.mubr.bf16.mxu0 0
      %648 = vmatmul.mubr.bf16.gmra.mrb[0].mxu0 %v594
      %v649 = vpop.f32.mrb[0].mxu0
      %v650 = vadd.f32 %v573, %v649
      %v651 = vpop.f32.mrb[0].mxu0
      %v652 = vpop.f32.mrb[0].mxu0
      %v653 = vadd.f32 %v573, %v652
      %v654 = vpop.f32.mrb[0].mxu0
      %655 = vmatprep.mubr.bf16.mxu0 0
      %656 = vmatmul.mubr.bf16.gmra.mrb[0].mxu0 %v597
      %v657 = vpop.f32.mrb[0].mxu0
      %v658 = vadd.f32 %v573, %v657
      %v659 = vpop.f32.mrb[0].mxu0
      %v660 = vpop.f32.mrb[0].mxu0
      %v661 = vadd.f32 %v573, %v660
      %v662 = vpop.f32.mrb[0].mxu0
      %663 = vdwg.mxu0
      %664 = vxpose.xlu0.b32.start [1/16] %v634, 128
      %665 = vxpose.xlu0.b32.cont [2/16] %v637, 128
      %666 = vxpose.xlu0.b32.cont [3/16] %v642, 128
      %667 = vxpose.xlu0.b32.cont [4/16] %v645, 128
      %668 = vxpose.xlu0.b32.cont [5/16] %v650, 128
      %669 = vxpose.xlu0.b32.cont [6/16] %v653, 128
      %670 = vxpose.xlu0.b32.cont [7/16] %v658, 128
      %671 = vxpose.xlu0.b32.cont [8/16] %v661, 128
      %672 = vxpose.xlu0.b32.cont [9/16] 0.0, 128
      %673 = vxpose.xlu0.b32.cont [10/16] 0.0, 128
      %674 = vxpose.xlu0.b32.cont [11/16] 0.0, 128
      %675 = vxpose.xlu0.b32.cont [12/16] 0.0, 128
      %676 = vxpose.xlu0.b32.cont [13/16] 0.0, 128
      %677 = vxpose.xlu0.b32.cont [14/16] 0.0, 128
      %678 = vxpose.xlu0.b32.cont [15/16] 0.0, 128
      %679 = vxpose.xlu0.b32.end [16/16] 0.0, 128
      %v680 = vpop.trf.xlu0
      %v681 = vpop.trf.xlu0
      %v682 = vpop.trf.xlu0
      %v683 = vpop.trf.xlu0
      %v684 = vpop.trf.xlu0
      %v685 = vpop.trf.xlu0
      %v686 = vpop.trf.xlu0
      %v687 = vpop.trf.xlu0
      %v688 = vpop.trf.xlu0
      %v689 = vpop.trf.xlu0
      %v690 = vpop.trf.xlu0
      %v691 = vpop.trf.xlu0
      %v692 = vpop.trf.xlu0
      %v693 = vpop.trf.xlu0
      %v694 = vpop.trf.xlu0
      %v695 = vpop.trf.xlu0
      %696 = vxpose.xlu0.b32.start [1/16] %v680, 128
      %697 = vxpose.xlu0.b32.cont [2/16] 0.0, 128
      %698 = vxpose.xlu0.b32.cont [3/16] 0.0, 128
      %699 = vxpose.xlu0.b32.cont [4/16] 0.0, 128
      %700 = vxpose.xlu0.b32.cont [5/16] 0.0, 128
      %701 = vxpose.xlu0.b32.cont [6/16] 0.0, 128
      %702 = vxpose.xlu0.b32.cont [7/16] 0.0, 128
      %703 = vxpose.xlu0.b32.cont [8/16] 0.0, 128
      %704 = vxpose.xlu0.b32.cont [9/16] 0.0, 128
      %705 = vxpose.xlu0.b32.cont [10/16] 0.0, 128
      %706 = vxpose.xlu0.b32.cont [11/16] 0.0, 128
      %707 = vxpose.xlu0.b32.cont [12/16] 0.0, 128
      %708 = vxpose.xlu0.b32.cont [13/16] 0.0, 128
      %709 = vxpose.xlu0.b32.cont [14/16] 0.0, 128
      %710 = vxpose.xlu0.b32.cont [15/16] 0.0, 128
      %711 = vxpose.xlu0.b32.end [16/16] 0.0, 128
      %v712 = vpop.trf.xlu0
      %v713 = vpop.trf.xlu0
      %v714 = vpop.trf.xlu0
      %v715 = vpop.trf.xlu0
      %v716 = vpop.trf.xlu0
      %v717 = vpop.trf.xlu0
      %v718 = vpop.trf.xlu0
      %v719 = vpop.trf.xlu0
      %v720 = vpop.trf.xlu0
      %v721 = vpop.trf.xlu0
      %v722 = vpop.trf.xlu0
      %v723 = vpop.trf.xlu0
      %v724 = vpop.trf.xlu0
      %v725 = vpop.trf.xlu0
      %v726 = vpop.trf.xlu0
      %v727 = vpop.trf.xlu0
      %728 = vxpose.xlu0.b32.start [1/16] %v681, 128
      %729 = vxpose.xlu0.b32.cont [2/16] 0.0, 128
      %730 = vxpose.xlu0.b32.cont [3/16] 0.0, 128
      %731 = vxpose.xlu0.b32.cont [4/16] 0.0, 128
      %732 = vxpose.xlu0.b32.cont [5/16] 0.0, 128
      %733 = vxpose.xlu0.b32.cont [6/16] 0.0, 128
      %734 = vxpose.xlu0.b32.cont [7/16] 0.0, 128
      %735 = vxpose.xlu0.b32.cont [8/16] 0.0, 128
      %736 = vxpose.xlu0.b32.cont [9/16] 0.0, 128
      %737 = vxpose.xlu0.b32.cont [10/16] 0.0, 128
      %738 = vxpose.xlu0.b32.cont [11/16] 0.0, 128
      %739 = vxpose.xlu0.b32.cont [12/16] 0.0, 128
      %740 = vxpose.xlu0.b32.cont [13/16] 0.0, 128
      %741 = vxpose.xlu0.b32.cont [14/16] 0.0, 128
      %742 = vxpose.xlu0.b32.cont [15/16] 0.0, 128
      %743 = vxpose.xlu0.b32.end [16/16] 0.0, 128
      %v744 = vpop.trf.xlu0
      %v745 = vpop.trf.xlu0
      %v746 = vpop.trf.xlu0
      %v747 = vpop.trf.xlu0
      %v748 = vpop.trf.xlu0
      %v749 = vpop.trf.xlu0
      %v750 = vpop.trf.xlu0
      %v751 = vpop.trf.xlu0
      %v752 = vpop.trf.xlu0
      %v753 = vpop.trf.xlu0
      %v754 = vpop.trf.xlu0
      %v755 = vpop.trf.xlu0
      %v756 = vpop.trf.xlu0
      %v757 = vpop.trf.xlu0
      %v758 = vpop.trf.xlu0
      %v759 = vpop.trf.xlu0
      %760 = vxpose.xlu0.b32.start [1/16] %v682, 128
      %761 = vxpose.xlu0.b32.cont [2/16] 0.0, 128
      %762 = vxpose.xlu0.b32.cont [3/16] 0.0, 128
      %763 = vxpose.xlu0.b32.cont [4/16] 0.0, 128
      %764 = vxpose.xlu0.b32.cont [5/16] 0.0, 128
      %765 = vxpose.xlu0.b32.cont [6/16] 0.0, 128
      %766 = vxpose.xlu0.b32.cont [7/16] 0.0, 128
      %767 = vxpose.xlu0.b32.cont [8/16] 0.0, 128
      %768 = vxpose.xlu0.b32.cont [9/16] 0.0, 128
      %769 = vxpose.xlu0.b32.cont [10/16] 0.0, 128
      %770 = vxpose.xlu0.b32.cont [11/16] 0.0, 128
      %771 = vxpose.xlu0.b32.cont [12/16] 0.0, 128
      %772 = vxpose.xlu0.b32.cont [13/16] 0.0, 128
      %773 = vxpose.xlu0.b32.cont [14/16] 0.0, 128
      %774 = vxpose.xlu0.b32.cont [15/16] 0.0, 128
      %775 = vxpose.xlu0.b32.end [16/16] 0.0, 128
      %v776 = vpop.trf.xlu0
      %v777 = vpop.trf.xlu0
      %v778 = vpop.trf.xlu0
      %v779 = vpop.trf.xlu0
      %v780 = vpop.trf.xlu0
      %v781 = vpop.trf.xlu0
      %v782 = vpop.trf.xlu0
      %v783 = vpop.trf.xlu0
      %v784 = vpop.trf.xlu0
      %v785 = vpop.trf.xlu0
      %v786 = vpop.trf.xlu0
      %v787 = vpop.trf.xlu0
      %v788 = vpop.trf.xlu0
      %v789 = vpop.trf.xlu0
      %v790 = vpop.trf.xlu0
      %v791 = vpop.trf.xlu0
      %792 = vxpose.xlu0.b32.start [1/16] %v683, 128
      %793 = vxpose.xlu0.b32.cont [2/16] 0.0, 128
      %794 = vxpose.xlu0.b32.cont [3/16] 0.0, 128
      %795 = vxpose.xlu0.b32.cont [4/16] 0.0, 128
      %796 = vxpose.xlu0.b32.cont [5/16] 0.0, 128
      %797 = vxpose.xlu0.b32.cont [6/16] 0.0, 128
      %798 = vxpose.xlu0.b32.cont [7/16] 0.0, 128
      %799 = vxpose.xlu0.b32.cont [8/16] 0.0, 128
      %800 = vxpose.xlu0.b32.cont [9/16] 0.0, 128
      %801 = vxpose.xlu0.b32.cont [10/16] 0.0, 128
      %802 = vxpose.xlu0.b32.cont [11/16] 0.0, 128
      %803 = vxpose.xlu0.b32.cont [12/16] 0.0, 128
      %804 = vxpose.xlu0.b32.cont [13/16] 0.0, 128
      %805 = vxpose.xlu0.b32.cont [14/16] 0.0, 128
      %806 = vxpose.xlu0.b32.cont [15/16] 0.0, 128
      %807 = vxpose.xlu0.b32.end [16/16] 0.0, 128
      %v808 = vpop.trf.xlu0
      %v809 = vpop.trf.xlu0
      %v810 = vpop.trf.xlu0
      %v811 = vpop.trf.xlu0
      %v812 = vpop.trf.xlu0
      %v813 = vpop.trf.xlu0
      %v814 = vpop.trf.xlu0
      %v815 = vpop.trf.xlu0
      %v816 = vpop.trf.xlu0
      %v817 = vpop.trf.xlu0
      %v818 = vpop.trf.xlu0
      %v819 = vpop.trf.xlu0
      %v820 = vpop.trf.xlu0
      %v821 = vpop.trf.xlu0
      %v822 = vpop.trf.xlu0
      %v823 = vpop.trf.xlu0
      %v824 = vpack.c.bf16 %v713, %v712
      %v825 = vpack.c.bf16 %v715, %v714
      %v826 = vpack.c.bf16 %v717, %v716
      %v827 = vpack.c.bf16 %v719, %v718
      %v828 = vpack.c.bf16 %v745, %v744
      %v829 = vpack.c.bf16 %v747, %v746
      %v830 = vpack.c.bf16 %v749, %v748
      %v831 = vpack.c.bf16 %v751, %v750
      %v832 = vpack.c.bf16 %v777, %v776
      %v833 = vpack.c.bf16 %v779, %v778
      %v834 = vpack.c.bf16 %v781, %v780
      %v835 = vpack.c.bf16 %v783, %v782
      %v836 = vpack.c.bf16 %v809, %v808
      %v837 = vpack.c.bf16 %v811, %v810
      %v838 = vpack.c.bf16 %v813, %v812
      %v839 = vpack.c.bf16 %v815, %v814
      %v840 = vpack.c.bf16 %v684, %v684
      %v841 = vpack.c.bf16 %v685, %v685
      %v842 = vpack.c.bf16 %v686, %v686
      %v843 = vpack.c.bf16 %v687, %v687
      %844 = vxpose.xlu0.b32.start [1/16] %v688, 128
      %845 = vxpose.xlu0.b32.cont [2/16] 0.0, 128
      %846 = vxpose.xlu0.b32.cont [3/16] 0.0, 128
      %847 = vxpose.xlu0.b32.cont [4/16] 0.0, 128
      %848 = vxpose.xlu0.b32.cont [5/16] 0.0, 128
      %849 = vxpose.xlu0.b32.cont [6/16] 0.0, 128
      %850 = vxpose.xlu0.b32.cont [7/16] 0.0, 128
      %851 = vxpose.xlu0.b32.cont [8/16] 0.0, 128
      %852 = vxpose.xlu0.b32.cont [9/16] 0.0, 128
      %853 = vxpose.xlu0.b32.cont [10/16] 0.0, 128
      %854 = vxpose.xlu0.b32.cont [11/16] 0.0, 128
      %855 = vxpose.xlu0.b32.cont [12/16] 0.0, 128
      %856 = vxpose.xlu0.b32.cont [13/16] 0.0, 128
      %857 = vxpose.xlu0.b32.cont [14/16] 0.0, 128
      %858 = vxpose.xlu0.b32.cont [15/16] 0.0, 128
      %859 = vxpose.xlu0.b32.end [16/16] 0.0, 128
      %v860 = vpop.trf.xlu0
      %v861 = vpop.trf.xlu0
      %v862 = vpop.trf.xlu0
      %v863 = vpop.trf.xlu0
      %v864 = vpop.trf.xlu0
      %v865 = vpop.trf.xlu0
      %v866 = vpop.trf.xlu0
      %v867 = vpop.trf.xlu0
      %v868 = vpop.trf.xlu0
      %v869 = vpop.trf.xlu0
      %v870 = vpop.trf.xlu0
      %v871 = vpop.trf.xlu0
      %v872 = vpop.trf.xlu0
      %v873 = vpop.trf.xlu0
      %v874 = vpop.trf.xlu0
      %v875 = vpop.trf.xlu0
      %876 = vxpose.xlu0.b32.start [1/16] %v689, 128
      %877 = vxpose.xlu0.b32.cont [2/16] 0.0, 128
      %878 = vxpose.xlu0.b32.cont [3/16] 0.0, 128
      %879 = vxpose.xlu0.b32.cont [4/16] 0.0, 128
      %880 = vxpose.xlu0.b32.cont [5/16] 0.0, 128
      %881 = vxpose.xlu0.b32.cont [6/16] 0.0, 128
      %882 = vxpose.xlu0.b32.cont [7/16] 0.0, 128
      %883 = vxpose.xlu0.b32.cont [8/16] 0.0, 128
      %884 = vxpose.xlu0.b32.cont [9/16] 0.0, 128
      %885 = vxpose.xlu0.b32.cont [10/16] 0.0, 128
      %886 = vxpose.xlu0.b32.cont [11/16] 0.0, 128
      %887 = vxpose.xlu0.b32.cont [12/16] 0.0, 128
      %888 = vxpose.xlu0.b32.cont [13/16] 0.0, 128
      %889 = vxpose.xlu0.b32.cont [14/16] 0.0, 128
      %890 = vxpose.xlu0.b32.cont [15/16] 0.0, 128
      %891 = vxpose.xlu0.b32.end [16/16] 0.0, 128
      %v892 = vpop.trf.xlu0
      %v893 = vpop.trf.xlu0
      %v894 = vpop.trf.xlu0
      %v895 = vpop.trf.xlu0
      %v896 = vpop.trf.xlu0
      %v897 = vpop.trf.xlu0
      %v898 = vpop.trf.xlu0
      %v899 = vpop.trf.xlu0
      %v900 = vpop.trf.xlu0
      %v901 = vpop.trf.xlu0
      %v902 = vpop.trf.xlu0
      %v903 = vpop.trf.xlu0
      %v904 = vpop.trf.xlu0
      %v905 = vpop.trf.xlu0
      %v906 = vpop.trf.xlu0
      %v907 = vpop.trf.xlu0
      %908 = vxpose.xlu0.b32.start [1/16] %v690, 128
      %909 = vxpose.xlu0.b32.cont [2/16] 0.0, 128
      %910 = vxpose.xlu0.b32.cont [3/16] 0.0, 128
      %911 = vxpose.xlu0.b32.cont [4/16] 0.0, 128
      %912 = vxpose.xlu0.b32.cont [5/16] 0.0, 128
      %913 = vxpose.xlu0.b32.cont [6/16] 0.0, 128
      %914 = vxpose.xlu0.b32.cont [7/16] 0.0, 128
      %915 = vxpose.xlu0.b32.cont [8/16] 0.0, 128
      %916 = vxpose.xlu0.b32.cont [9/16] 0.0, 128
      %917 = vxpose.xlu0.b32.cont [10/16] 0.0, 128
      %918 = vxpose.xlu0.b32.cont [11/16] 0.0, 128
      %919 = vxpose.xlu0.b32.cont [12/16] 0.0, 128
      %920 = vxpose.xlu0.b32.cont [13/16] 0.0, 128
      %921 = vxpose.xlu0.b32.cont [14/16] 0.0, 128
      %922 = vxpose.xlu0.b32.cont [15/16] 0.0, 128
      %923 = vxpose.xlu0.b32.end [16/16] 0.0, 128
      %v924 = vpop.trf.xlu0
      %v925 = vpop.trf.xlu0
      %v926 = vpop.trf.xlu0
      %v927 = vpop.trf.xlu0
      %v928 = vpop.trf.xlu0
      %v929 = vpop.trf.xlu0
      %v930 = vpop.trf.xlu0
      %v931 = vpop.trf.xlu0
      %v932 = vpop.trf.xlu0
      %v933 = vpop.trf.xlu0
      %v934 = vpop.trf.xlu0
      %v935 = vpop.trf.xlu0
      %v936 = vpop.trf.xlu0
      %v937 = vpop.trf.xlu0
      %v938 = vpop.trf.xlu0
      %v939 = vpop.trf.xlu0
      %940 = vxpose.xlu0.b32.start [1/16] %v691, 128
      %941 = vxpose.xlu0.b32.cont [2/16] 0.0, 128
      %942 = vxpose.xlu0.b32.cont [3/16] 0.0, 128
      %943 = vxpose.xlu0.b32.cont [4/16] 0.0, 128
      %944 = vxpose.xlu0.b32.cont [5/16] 0.0, 128
      %945 = vxpose.xlu0.b32.cont [6/16] 0.0, 128
      %946 = vxpose.xlu0.b32.cont [7/16] 0.0, 128
      %947 = vxpose.xlu0.b32.cont [8/16] 0.0, 128
      %948 = vxpose.xlu0.b32.cont [9/16] 0.0, 128
      %949 = vxpose.xlu0.b32.cont [10/16] 0.0, 128
      %950 = vxpose.xlu0.b32.cont [11/16] 0.0, 128
      %951 = vxpose.xlu0.b32.cont [12/16] 0.0, 128
      %952 = vxpose.xlu0.b32.cont [13/16] 0.0, 128
      %953 = vxpose.xlu0.b32.cont [14/16] 0.0, 128
      %954 = vxpose.xlu0.b32.cont [15/16] 0.0, 128
      %955 = vxpose.xlu0.b32.end [16/16] 0.0, 128
      %v956 = vpop.trf.xlu0
      %v957 = vpop.trf.xlu0
      %v958 = vpop.trf.xlu0
      %v959 = vpop.trf.xlu0
      %v960 = vpop.trf.xlu0
      %v961 = vpop.trf.xlu0
      %v962 = vpop.trf.xlu0
      %v963 = vpop.trf.xlu0
      %v964 = vpop.trf.xlu0
      %v965 = vpop.trf.xlu0
      %v966 = vpop.trf.xlu0
      %v967 = vpop.trf.xlu0
      %v968 = vpop.trf.xlu0
      %v969 = vpop.trf.xlu0
      %v970 = vpop.trf.xlu0
      %v971 = vpop.trf.xlu0
      %v972 = vpack.c.bf16 %v861, %v860
      %v973 = vpack.c.bf16 %v863, %v862
      %v974 = vpack.c.bf16 %v865, %v864
      %v975 = vpack.c.bf16 %v867, %v866
      %v976 = vpack.c.bf16 %v893, %v892
      %v977 = vpack.c.bf16 %v895, %v894
      %v978 = vpack.c.bf16 %v897, %v896
      %v979 = vpack.c.bf16 %v899, %v898
      %v980 = vpack.c.bf16 %v925, %v924
      %v981 = vpack.c.bf16 %v927, %v926
      %v982 = vpack.c.bf16 %v929, %v928
      %v983 = vpack.c.bf16 %v931, %v930
      %v984 = vpack.c.bf16 %v957, %v956
      %v985 = vpack.c.bf16 %v959, %v958
      %v986 = vpack.c.bf16 %v961, %v960
      %v987 = vpack.c.bf16 %v963, %v962
      %vm988 = vcmask 64512
      %v990 = vsel %vm988, %v824, 0
      %v993 = vsel %vm988, %v825, 0
      %v996 = vsel %vm988, %v826, 0
      %v999 = vsel %vm988, %v827, 0
      %vm1001 = vcmask 1043456
      %v1003 = vsel %vm1001, %v840, 0
      %1005 = vmatprep.subr.bf16.mxu0 0
      %1006 = vmatpush1.bf16.msra.mxu0 %v1003
      %1007 = vmatprep.subr.bf16.mxu0 0
      %1008 = vmatpush1.bf16.msra.mxu0 0
      %1009 = vmatprep.subr.bf16.mxu0 0
      %1010 = vmatpush1.bf16.msra.mxu0 0
      %1011 = vmatprep.subr.bf16.mxu0 0
      %1012 = vmatpush1.bf16.msra.mxu0 0
      %1013 = vmatprep.subr.bf16.mxu0 0
      %1014 = vmatpush1.bf16.msra.mxu0 0
      %1015 = vmatprep.subr.bf16.mxu0 0
      %1016 = vmatpush1.bf16.msra.mxu0 0
      %1017 = vmatprep.subr.bf16.mxu0 0
      %1018 = vmatpush1.bf16.msra.mxu0 0
      %1019 = vmatprep.subr.bf16.mxu0 0
      %1020 = vmatpush1.bf16.msra.mxu0 0
      %1021 = vmatprep.subr.bf16.mxu0 0
      %1022 = vmatpush1.bf16.msra.mxu0 0
      %1023 = vmatprep.subr.bf16.mxu0 0
      %1024 = vmatpush1.bf16.msra.mxu0 0
      %1025 = vmatprep.subr.bf16.mxu0 0
      %1026 = vmatpush1.bf16.msra.mxu0 0
      %1027 = vmatprep.subr.bf16.mxu0 0
      %1028 = vmatpush1.bf16.msra.mxu0 0
      %1029 = vmatprep.subr.bf16.mxu0 0
      %1030 = vmatpush1.bf16.msra.mxu0 0
      %1031 = vmatprep.subr.bf16.mxu0 0
      %1032 = vmatpush1.bf16.msra.mxu0 0
      %1033 = vmatprep.subr.bf16.mxu0 0
      %1034 = vmatpush1.bf16.msra.mxu0 0
      %1035 = vmatprep.subr.bf16.mxu0 0
      %1036 = vmatpush1.bf16.msra.mxu0 0
      %1037 = vmatprep.mubr.bf16.mxu0 0
      %1038 = vmatmul.mubr.bf16.gmra.mrb[0].mxu0 %v990
      %v1039 = vpop.f32.mrb[0].mxu0
      %v1040 = vadd.f32 0.0, %v1039
      %v1041 = vpop.f32.mrb[0].mxu0
      %v1042 = vpop.f32.mrb[0].mxu0
      %v1043 = vadd.f32 0.0, %v1042
      %v1044 = vpop.f32.mrb[0].mxu0
      %1045 = vmatprep.mubr.bf16.mxu0 0
      %1046 = vmatmul.mubr.bf16.gmra.mrb[0].mxu0 %v993
      %v1047 = vpop.f32.mrb[0].mxu0
      %v1048 = vadd.f32 0.0, %v1047
      %v1049 = vpop.f32.mrb[0].mxu0
      %v1050 = vpop.f32.mrb[0].mxu0
      %v1051 = vadd.f32 0.0, %v1050
      %v1052 = vpop.f32.mrb[0].mxu0
      %1053 = vmatprep.mubr.bf16.mxu0 0
      %1054 = vmatmul.mubr.bf16.gmra.mrb[0].mxu0 %v996
      %v1055 = vpop.f32.mrb[0].mxu0
      %v1056 = vadd.f32 0.0, %v1055
      %v1057 = vpop.f32.mrb[0].mxu0
      %v1058 = vpop.f32.mrb[0].mxu0
      %v1059 = vadd.f32 0.0, %v1058
      %v1060 = vpop.f32.mrb[0].mxu0
      %1061 = vmatprep.mubr.bf16.mxu0 0
      %1062 = vmatmul.mubr.bf16.gmra.mrb[0].mxu0 %v999
      %v1063 = vpop.f32.mrb[0].mxu0
      %v1064 = vadd.f32 0.0, %v1063
      %v1065 = vpop.f32.mrb[0].mxu0
      %v1066 = vpop.f32.mrb[0].mxu0
      %v1067 = vadd.f32 0.0, %v1066
      %v1068 = vpop.f32.mrb[0].mxu0
      %1069 = vdwg.mxu0
      %v1071 = vsel %vm988, %v828, 0
      %v1074 = vsel %vm988, %v829, 0
      %v1077 = vsel %vm988, %v830, 0
      %v1080 = vsel %vm988, %v831, 0
      %v1083 = vsel %vm1001, %v841, 0
      %1085 = vmatprep.subr.bf16.mxu0 0
      %1086 = vmatpush1.bf16.msra.mxu0 %v1083
      %1087 = vmatprep.subr.bf16.mxu0 0
      %1088 = vmatpush1.bf16.msra.mxu0 0
      %1089 = vmatprep.subr.bf16.mxu0 0
      %1090 = vmatpush1.bf16.msra.mxu0 0
      %1091 = vmatprep.subr.bf16.mxu0 0
      %1092 = vmatpush1.bf16.msra.mxu0 0
      %1093 = vmatprep.subr.bf16.mxu0 0
      %1094 = vmatpush1.bf16.msra.mxu0 0
      %1095 = vmatprep.subr.bf16.mxu0 0
      %1096 = vmatpush1.bf16.msra.mxu0 0
      %1097 = vmatprep.subr.bf16.mxu0 0
      %1098 = vmatpush1.bf16.msra.mxu0 0
      %1099 = vmatprep.subr.bf16.mxu0 0
      %1100 = vmatpush1.bf16.msra.mxu0 0
      %1101 = vmatprep.subr.bf16.mxu0 0
      %1102 = vmatpush1.bf16.msra.mxu0 0
      %1103 = vmatprep.subr.bf16.mxu0 0
      %1104 = vmatpush1.bf16.msra.mxu0 0
      %1105 = vmatprep.subr.bf16.mxu0 0
      %1106 = vmatpush1.bf16.msra.mxu0 0
      %1107 = vmatprep.subr.bf16.mxu0 0
      %1108 = vmatpush1.bf16.msra.mxu0 0
      %1109 = vmatprep.subr.bf16.mxu0 0
      %1110 = vmatpush1.bf16.msra.mxu0 0
      %1111 = vmatprep.subr.bf16.mxu0 0
      %1112 = vmatpush1.bf16.msra.mxu0 0
      %1113 = vmatprep.subr.bf16.mxu0 0
      %1114 = vmatpush1.bf16.msra.mxu0 0
      %1115 = vmatprep.subr.bf16.mxu0 0
      %1116 = vmatpush1.bf16.msra.mxu0 0
      %1117 = vmatprep.mubr.bf16.mxu0 0
      %1118 = vmatmul.mubr.bf16.gmra.mrb[0].mxu0 %v1071
      %v1119 = vpop.f32.mrb[0].mxu0
      %v1120 = vadd.f32 0.0, %v1119
      %v1121 = vpop.f32.mrb[0].mxu0
      %v1122 = vpop.f32.mrb[0].mxu0
      %v1123 = vadd.f32 0.0, %v1122
      %v1124 = vpop.f32.mrb[0].mxu0
      %1125 = vmatprep.mubr.bf16.mxu0 0
      %1126 = vmatmul.mubr.bf16.gmra.mrb[0].mxu0 %v1074
      %v1127 = vpop.f32.mrb[0].mxu0
      %v1128 = vadd.f32 0.0, %v1127
      %v1129 = vpop.f32.mrb[0].mxu0
      %v1130 = vpop.f32.mrb[0].mxu0
      %v1131 = vadd.f32 0.0, %v1130
      %v1132 = vpop.f32.mrb[0].mxu0
      %1133 = vmatprep.mubr.bf16.mxu0 0
      %1134 = vmatmul.mubr.bf16.gmra.mrb[0].mxu0 %v1077
      %v1135 = vpop.f32.mrb[0].mxu0
      %v1136 = vadd.f32 0.0, %v1135
      %v1137 = vpop.f32.mrb[0].mxu0
      %v1138 = vpop.f32.mrb[0].mxu0
      %v1139 = vadd.f32 0.0, %v1138
      %v1140 = vpop.f32.mrb[0].mxu0
      %1141 = vmatprep.mubr.bf16.mxu0 0
      %1142 = vmatmul.mubr.bf16.gmra.mrb[0].mxu0 %v1080
      %v1143 = vpop.f32.mrb[0].mxu0
      %v1144 = vadd.f32 0.0, %v1143
      %v1145 = vpop.f32.mrb[0].mxu0
      %v1146 = vpop.f32.mrb[0].mxu0
      %v1147 = vadd.f32 0.0, %v1146
      %v1148 = vpop.f32.mrb[0].mxu0
      %1149 = vdwg.mxu0
      %v1151 = vsel %vm988, %v832, 0
      %v1154 = vsel %vm988, %v833, 0
      %v1157 = vsel %vm988, %v834, 0
      %v1160 = vsel %vm988, %v835, 0
      %v1163 = vsel %vm1001, %v842, 0
      %1165 = vmatprep.subr.bf16.mxu0 0
      %1166 = vmatpush1.bf16.msra.mxu0 %v1163
      %1167 = vmatprep.subr.bf16.mxu0 0
      %1168 = vmatpush1.bf16.msra.mxu0 0
      %1169 = vmatprep.subr.bf16.mxu0 0
      %1170 = vmatpush1.bf16.msra.mxu0 0
      %1171 = vmatprep.subr.bf16.mxu0 0
      %1172 = vmatpush1.bf16.msra.mxu0 0
      %1173 = vmatprep.subr.bf16.mxu0 0
      %1174 = vmatpush1.bf16.msra.mxu0 0
      %1175 = vmatprep.subr.bf16.mxu0 0
      %1176 = vmatpush1.bf16.msra.mxu0 0
      %1177 = vmatprep.subr.bf16.mxu0 0
      %1178 = vmatpush1.bf16.msra.mxu0 0
      %1179 = vmatprep.subr.bf16.mxu0 0
      %1180 = vmatpush1.bf16.msra.mxu0 0
      %1181 = vmatprep.subr.bf16.mxu0 0
      %1182 = vmatpush1.bf16.msra.mxu0 0
      %1183 = vmatprep.subr.bf16.mxu0 0
      %1184 = vmatpush1.bf16.msra.mxu0 0
      %1185 = vmatprep.subr.bf16.mxu0 0
      %1186 = vmatpush1.bf16.msra.mxu0 0
      %1187 = vmatprep.subr.bf16.mxu0 0
      %1188 = vmatpush1.bf16.msra.mxu0 0
      %1189 = vmatprep.subr.bf16.mxu0 0
      %1190 = vmatpush1.bf16.msra.mxu0 0
      %1191 = vmatprep.subr.bf16.mxu0 0
      %1192 = vmatpush1.bf16.msra.mxu0 0
      %1193 = vmatprep.subr.bf16.mxu0 0
      %1194 = vmatpush1.bf16.msra.mxu0 0
      %1195 = vmatprep.subr.bf16.mxu0 0
      %1196 = vmatpush1.bf16.msra.mxu0 0
      %1197 = vmatprep.mubr.bf16.mxu0 0
      %1198 = vmatmul.mubr.bf16.gmra.mrb[0].mxu0 %v1151
      %v1199 = vpop.f32.mrb[0].mxu0
      %v1200 = vadd.f32 0.0, %v1199
      %v1201 = vpop.f32.mrb[0].mxu0
      %v1202 = vpop.f32.mrb[0].mxu0
      %v1203 = vadd.f32 0.0, %v1202
      %v1204 = vpop.f32.mrb[0].mxu0
      %1205 = vmatprep.mubr.bf16.mxu0 0
      %1206 = vmatmul.mubr.bf16.gmra.mrb[0].mxu0 %v1154
      %v1207 = vpop.f32.mrb[0].mxu0
      %v1208 = vadd.f32 0.0, %v1207
      %v1209 = vpop.f32.mrb[0].mxu0
      %v1210 = vpop.f32.mrb[0].mxu0
      %v1211 = vadd.f32 0.0, %v1210
      %v1212 = vpop.f32.mrb[0].mxu0
      %1213 = vmatprep.mubr.bf16.mxu0 0
      %1214 = vmatmul.mubr.bf16.gmra.mrb[0].mxu0 %v1157
      %v1215 = vpop.f32.mrb[0].mxu0
      %v1216 = vadd.f32 0.0, %v1215
      %v1217 = vpop.f32.mrb[0].mxu0
      %v1218 = vpop.f32.mrb[0].mxu0
      %v1219 = vadd.f32 0.0, %v1218
      %v1220 = vpop.f32.mrb[0].mxu0
      %1221 = vmatprep.mubr.bf16.mxu0 0
      %1222 = vmatmul.mubr.bf16.gmra.mrb[0].mxu0 %v1160
      %v1223 = vpop.f32.mrb[0].mxu0
      %v1224 = vadd.f32 0.0, %v1223
      %v1225 = vpop.f32.mrb[0].mxu0
      %v1226 = vpop.f32.mrb[0].mxu0
      %v1227 = vadd.f32 0.0, %v1226
      %v1228 = vpop.f32.mrb[0].mxu0
      %1229 = vdwg.mxu0
      %v1231 = vsel %vm988, %v836, 0
      %v1234 = vsel %vm988, %v837, 0
      %v1237 = vsel %vm988, %v838, 0
      %v1240 = vsel %vm988, %v839, 0
      %v1243 = vsel %vm1001, %v843, 0
      %1245 = vmatprep.subr.bf16.mxu0 0
      %1246 = vmatpush1.bf16.msra.mxu0 %v1243
      %1247 = vmatprep.subr.bf16.mxu0 0
      %1248 = vmatpush1.bf16.msra.mxu0 0
      %1249 = vmatprep.subr.bf16.mxu0 0
      %1250 = vmatpush1.bf16.msra.mxu0 0
      %1251 = vmatprep.subr.bf16.mxu0 0
      %1252 = vmatpush1.bf16.msra.mxu0 0
      %1253 = vmatprep.subr.bf16.mxu0 0
      %1254 = vmatpush1.bf16.msra.mxu0 0
      %1255 = vmatprep.subr.bf16.mxu0 0
      %1256 = vmatpush1.bf16.msra.mxu0 0
      %1257 = vmatprep.subr.bf16.mxu0 0
      %1258 = vmatpush1.bf16.msra.mxu0 0
      %1259 = vmatprep.subr.bf16.mxu0 0
      %1260 = vmatpush1.bf16.msra.mxu0 0
      %1261 = vmatprep.subr.bf16.mxu0 0
      %1262 = vmatpush1.bf16.msra.mxu0 0
      %1263 = vmatprep.subr.bf16.mxu0 0
      %1264 = vmatpush1.bf16.msra.mxu0 0
      %1265 = vmatprep.subr.bf16.mxu0 0
      %1266 = vmatpush1.bf16.msra.mxu0 0
      %1267 = vmatprep.subr.bf16.mxu0 0
      %1268 = vmatpush1.bf16.msra.mxu0 0
      %1269 = vmatprep.subr.bf16.mxu0 0
      %1270 = vmatpush1.bf16.msra.mxu0 0
      %1271 = vmatprep.subr.bf16.mxu0 0
      %1272 = vmatpush1.bf16.msra.mxu0 0
      %1273 = vmatprep.subr.bf16.mxu0 0
      %1274 = vmatpush1.bf16.msra.mxu0 0
      %1275 = vmatprep.subr.bf16.mxu0 0
      %1276 = vmatpush1.bf16.msra.mxu0 0
      %1277 = vmatprep.mubr.bf16.mxu0 0
      %1278 = vmatmul.mubr.bf16.gmra.mrb[0].mxu0 %v1231
      %v1279 = vpop.f32.mrb[0].mxu0
      %v1280 = vadd.f32 0.0, %v1279
      %v1281 = vpop.f32.mrb[0].mxu0
      %v1282 = vpop.f32.mrb[0].mxu0
      %v1283 = vadd.f32 0.0, %v1282
      %v1284 = vpop.f32.mrb[0].mxu0
      %1285 = vmatprep.mubr.bf16.mxu0 0
      %1286 = vmatmul.mubr.bf16.gmra.mrb[0].mxu0 %v1234
      %v1287 = vpop.f32.mrb[0].mxu0
      %v1288 = vadd.f32 0.0, %v1287
      %v1289 = vpop.f32.mrb[0].mxu0
      %v1290 = vpop.f32.mrb[0].mxu0
      %v1291 = vadd.f32 0.0, %v1290
      %v1292 = vpop.f32.mrb[0].mxu0
      %1293 = vmatprep.mubr.bf16.mxu0 0
      %1294 = vmatmul.mubr.bf16.gmra.mrb[0].mxu0 %v1237
      %v1295 = vpop.f32.mrb[0].mxu0
      %v1296 = vadd.f32 0.0, %v1295
      %v1297 = vpop.f32.mrb[0].mxu0
      %v1298 = vpop.f32.mrb[0].mxu0
      %v1299 = vadd.f32 0.0, %v1298
      %v1300 = vpop.f32.mrb[0].mxu0
      %1301 = vmatprep.mubr.bf16.mxu0 0
      %1302 = vmatmul.mubr.bf16.gmra.mrb[0].mxu0 %v1240
      %v1303 = vpop.f32.mrb[0].mxu0
      %v1304 = vadd.f32 0.0, %v1303
      %v1305 = vpop.f32.mrb[0].mxu0
      %v1306 = vpop.f32.mrb[0].mxu0
      %v1307 = vadd.f32 0.0, %v1306
      %v1308 = vpop.f32.mrb[0].mxu0
      %1309 = vdwg.mxu0
      %vm1310 = vcmask 523264
      %v1311 = vsel %vm1310, %v1040, -inf
      %1312 = vmax.xlane.f32.xlu0 %v1311
      %v1313 = vpop.xlane.xlu0 %1312
      %v1314 = vsel %vm1310, %v1043, -inf
      %1315 = vmax.xlane.f32.xlu0 %v1314
      %v1316 = vpop.xlane.xlu0 %1315
      %v1317 = vsel %vm1310, %v1048, -inf
      %1318 = vmax.xlane.f32.xlu0 %v1317
      %v1319 = vpop.xlane.xlu0 %1318
      %v1320 = vsel %vm1310, %v1051, -inf
      %1321 = vmax.xlane.f32.xlu0 %v1320
      %v1322 = vpop.xlane.xlu0 %1321
      %v1323 = vsel %vm1310, %v1056, -inf
      %1324 = vmax.xlane.f32.xlu0 %v1323
      %v1325 = vpop.xlane.xlu0 %1324
      %v1326 = vsel %vm1310, %v1059, -inf
      %1327 = vmax.xlane.f32.xlu0 %v1326
      %v1328 = vpop.xlane.xlu0 %1327
      %v1329 = vsel %vm1310, %v1064, -inf
      %1330 = vmax.xlane.f32.xlu0 %v1329
      %v1331 = vpop.xlane.xlu0 %1330
      %v1332 = vsel %vm1310, %v1067, -inf
      %1333 = vmax.xlane.f32.xlu0 %v1332
      %v1334 = vpop.xlane.xlu0 %1333
      %v1335 = vsel %vm1310, %v1120, -inf
      %1336 = vmax.xlane.f32.xlu0 %v1335
      %v1337 = vpop.xlane.xlu0 %1336
      %v1338 = vsel %vm1310, %v1123, -inf
      %1339 = vmax.xlane.f32.xlu0 %v1338
      %v1340 = vpop.xlane.xlu0 %1339
      %v1341 = vsel %vm1310, %v1128, -inf
      %1342 = vmax.xlane.f32.xlu0 %v1341
      %v1343 = vpop.xlane.xlu0 %1342
      %v1344 = vsel %vm1310, %v1131, -inf
      %1345 = vmax.xlane.f32.xlu0 %v1344
      %v1346 = vpop.xlane.xlu0 %1345
      %v1347 = vsel %vm1310, %v1136, -inf
      %1348 = vmax.xlane.f32.xlu0 %v1347
      %v1349 = vpop.xlane.xlu0 %1348
      %v1350 = vsel %vm1310, %v1139, -inf
      %1351 = vmax.xlane.f32.xlu0 %v1350
      %v1352 = vpop.xlane.xlu0 %1351
      %v1353 = vsel %vm1310, %v1144, -inf
      %1354 = vmax.xlane.f32.xlu0 %v1353
      %v1355 = vpop.xlane.xlu0 %1354
      %v1356 = vsel %vm1310, %v1147, -inf
      %1357 = vmax.xlane.f32.xlu0 %v1356
      %v1358 = vpop.xlane.xlu0 %1357
      %v1359 = vsel %vm1310, %v1200, -inf
      %1360 = vmax.xlane.f32.xlu0 %v1359
      %v1361 = vpop.xlane.xlu0 %1360
      %v1362 = vsel %vm1310, %v1203, -inf
      %1363 = vmax.xlane.f32.xlu0 %v1362
      %v1364 = vpop.xlane.xlu0 %1363
      %v1365 = vsel %vm1310, %v1208, -inf
      %1366 = vmax.xlane.f32.xlu0 %v1365
      %v1367 = vpop.xlane.xlu0 %1366
      %v1368 = vsel %vm1310, %v1211, -inf
      %1369 = vmax.xlane.f32.xlu0 %v1368
      %v1370 = vpop.xlane.xlu0 %1369
      %v1371 = vsel %vm1310, %v1216, -inf
      %1372 = vmax.xlane.f32.xlu0 %v1371
      %v1373 = vpop.xlane.xlu0 %1372
      %v1374 = vsel %vm1310, %v1219, -inf
      %1375 = vmax.xlane.f32.xlu0 %v1374
      %v1376 = vpop.xlane.xlu0 %1375
      %v1377 = vsel %vm1310, %v1224, -inf
      %1378 = vmax.xlane.f32.xlu0 %v1377
      %v1379 = vpop.xlane.xlu0 %1378
      %v1380 = vsel %vm1310, %v1227, -inf
      %1381 = vmax.xlane.f32.xlu0 %v1380
      %v1382 = vpop.xlane.xlu0 %1381
      %v1383 = vsel %vm1310, %v1280, -inf
      %1384 = vmax.xlane.f32.xlu0 %v1383
      %v1385 = vpop.xlane.xlu0 %1384
      %v1386 = vsel %vm1310, %v1283, -inf
      %1387 = vmax.xlane.f32.xlu0 %v1386
      %v1388 = vpop.xlane.xlu0 %1387
      %v1389 = vsel %vm1310, %v1288, -inf
      %1390 = vmax.xlane.f32.xlu0 %v1389
      %v1391 = vpop.xlane.xlu0 %1390
      %v1392 = vsel %vm1310, %v1291, -inf
      %1393 = vmax.xlane.f32.xlu0 %v1392
      %v1394 = vpop.xlane.xlu0 %1393
      %v1395 = vsel %vm1310, %v1296, -inf
      %1396 = vmax.xlane.f32.xlu0 %v1395
      %v1397 = vpop.xlane.xlu0 %1396
      %v1398 = vsel %vm1310, %v1299, -inf
      %1399 = vmax.xlane.f32.xlu0 %v1398
      %v1400 = vpop.xlane.xlu0 %1399
      %v1401 = vsel %vm1310, %v1304, -inf
      %1402 = vmax.xlane.f32.xlu0 %v1401
      %v1403 = vpop.xlane.xlu0 %1402
      %v1404 = vsel %vm1310, %v1307, -inf
      %1405 = vmax.xlane.f32.xlu0 %v1404
      %v1406 = vpop.xlane.xlu0 %1405
      %v1407 = vsub.f32 %v1040, %v1313
      %v1408 = vsub.f32 %v1043, %v1316
      %v1409 = vsub.f32 %v1048, %v1319
      %v1410 = vsub.f32 %v1051, %v1322
      %v1411 = vsub.f32 %v1056, %v1325
      %v1412 = vsub.f32 %v1059, %v1328
      %v1413 = vsub.f32 %v1064, %v1331
      %v1414 = vsub.f32 %v1067, %v1334
      %v1415 = vsub.f32 %v1120, %v1337
      %v1416 = vsub.f32 %v1123, %v1340
      %v1417 = vsub.f32 %v1128, %v1343
      %v1418 = vsub.f32 %v1131, %v1346
      %v1419 = vsub.f32 %v1136, %v1349
      %v1420 = vsub.f32 %v1139, %v1352
      %v1421 = vsub.f32 %v1144, %v1355
      %v1422 = vsub.f32 %v1147, %v1358
      %v1423 = vsub.f32 %v1200, %v1361
      %v1424 = vsub.f32 %v1203, %v1364
      %v1425 = vsub.f32 %v1208, %v1367
      %v1426 = vsub.f32 %v1211, %v1370
      %v1427 = vsub.f32 %v1216, %v1373
      %v1428 = vsub.f32 %v1219, %v1376
      %v1429 = vsub.f32 %v1224, %v1379
      %v1430 = vsub.f32 %v1227, %v1382
      %v1431 = vsub.f32 %v1280, %v1385
      %v1432 = vsub.f32 %v1283, %v1388
      %v1433 = vsub.f32 %v1288, %v1391
      %v1434 = vsub.f32 %v1291, %v1394
      %v1435 = vsub.f32 %v1296, %v1397
      %v1436 = vsub.f32 %v1299, %v1400
      %v1437 = vsub.f32 %v1304, %v1403
      %v1438 = vsub.f32 %v1307, %v1406
      %v1439 = vmul.f32 %v1407, 1.442695
      %v1440 = vpow.pop %v1439
      %v1441 = vmul.f32 %v1408, 1.442695
      %v1442 = vpow.pop %v1441
      %v1443 = vmul.f32 %v1409, 1.442695
      %v1444 = vpow.pop %v1443
      %v1445 = vmul.f32 %v1410, 1.442695
      %v1446 = vpow.pop %v1445
      %v1447 = vmul.f32 %v1411, 1.442695
      %v1448 = vpow.pop %v1447
      %v1449 = vmul.f32 %v1412, 1.442695
      %v1450 = vpow.pop %v1449
      %v1451 = vmul.f32 %v1413, 1.442695
      %v1452 = vpow.pop %v1451
      %v1453 = vmul.f32 %v1414, 1.442695
      %v1454 = vpow.pop %v1453
      %v1455 = vmul.f32 %v1415, 1.442695
      %v1456 = vpow.pop %v1455
      %v1457 = vmul.f32 %v1416, 1.442695
      %v1458 = vpow.pop %v1457
      %v1459 = vmul.f32 %v1417, 1.442695
      %v1460 = vpow.pop %v1459
      %v1461 = vmul.f32 %v1418, 1.442695
      %v1462 = vpow.pop %v1461
      %v1463 = vmul.f32 %v1419, 1.442695
      %v1464 = vpow.pop %v1463
      %v1465 = vmul.f32 %v1420, 1.442695
      %v1466 = vpow.pop %v1465
      %v1467 = vmul.f32 %v1421, 1.442695
      %v1468 = vpow.pop %v1467
      %v1469 = vmul.f32 %v1422, 1.442695
      %v1470 = vpow.pop %v1469
      %v1471 = vmul.f32 %v1423, 1.442695
      %v1472 = vpow.pop %v1471
      %v1473 = vmul.f32 %v1424, 1.442695
      %v1474 = vpow.pop %v1473
      %v1475 = vmul.f32 %v1425, 1.442695
      %v1476 = vpow.pop %v1475
      %v1477 = vmul.f32 %v1426, 1.442695
      %v1478 = vpow.pop %v1477
      %v1479 = vmul.f32 %v1427, 1.442695
      %v1480 = vpow.pop %v1479
      %v1481 = vmul.f32 %v1428, 1.442695
      %v1482 = vpow.pop %v1481
      %v1483 = vmul.f32 %v1429, 1.442695
      %v1484 = vpow.pop %v1483
      %v1485 = vmul.f32 %v1430, 1.442695
      %v1486 = vpow.pop %v1485
      %v1487 = vmul.f32 %v1431, 1.442695
      %v1488 = vpow.pop %v1487
      %v1489 = vmul.f32 %v1432, 1.442695
      %v1490 = vpow.pop %v1489
      %v1491 = vmul.f32 %v1433, 1.442695
      %v1492 = vpow.pop %v1491
      %v1493 = vmul.f32 %v1434, 1.442695
      %v1494 = vpow.pop %v1493
      %v1495 = vmul.f32 %v1435, 1.442695
      %v1496 = vpow.pop %v1495
      %v1497 = vmul.f32 %v1436, 1.442695
      %v1498 = vpow.pop %v1497
      %v1499 = vmul.f32 %v1437, 1.442695
      %v1500 = vpow.pop %v1499
      %v1501 = vmul.f32 %v1438, 1.442695
      %v1502 = vpow.pop %v1501
      %v1503 = vsel %vm1310, %v1440, 0.0
      %1504 = vadd.xlane.f32.xlu0 %v1503
      %v1505 = vpop.xlane.xlu0 %1504
      %v1506 = vsel %vm1310, %v1442, 0.0
      %1507 = vadd.xlane.f32.xlu0 %v1506
      %v1508 = vpop.xlane.xlu0 %1507
      %v1509 = vsel %vm1310, %v1444, 0.0
      %1510 = vadd.xlane.f32.xlu0 %v1509
      %v1511 = vpop.xlane.xlu0 %1510
      %v1512 = vsel %vm1310, %v1446, 0.0
      %1513 = vadd.xlane.f32.xlu0 %v1512
      %v1514 = vpop.xlane.xlu0 %1513
      %v1515 = vsel %vm1310, %v1448, 0.0
      %1516 = vadd.xlane.f32.xlu0 %v1515
      %v1517 = vpop.xlane.xlu0 %1516
      %v1518 = vsel %vm1310, %v1450, 0.0
      %1519 = vadd.xlane.f32.xlu0 %v1518
      %v1520 = vpop.xlane.xlu0 %1519
      %v1521 = vsel %vm1310, %v1452, 0.0
      %1522 = vadd.xlane.f32.xlu0 %v1521
      %v1523 = vpop.xlane.xlu0 %1522
      %v1524 = vsel %vm1310, %v1454, 0.0
      %1525 = vadd.xlane.f32.xlu0 %v1524
      %v1526 = vpop.xlane.xlu0 %1525
      %v1527 = vsel %vm1310, %v1456, 0.0
      %1528 = vadd.xlane.f32.xlu0 %v1527
      %v1529 = vpop.xlane.xlu0 %1528
      %v1530 = vsel %vm1310, %v1458, 0.0
      %1531 = vadd.xlane.f32.xlu0 %v1530
      %v1532 = vpop.xlane.xlu0 %1531
      %v1533 = vsel %vm1310, %v1460, 0.0
      %1534 = vadd.xlane.f32.xlu0 %v1533
      %v1535 = vpop.xlane.xlu0 %1534
      %v1536 = vsel %vm1310, %v1462, 0.0
      %1537 = vadd.xlane.f32.xlu0 %v1536
      %v1538 = vpop.xlane.xlu0 %1537
      %v1539 = vsel %vm1310, %v1464, 0.0
      %1540 = vadd.xlane.f32.xlu0 %v1539
      %v1541 = vpop.xlane.xlu0 %1540
      %v1542 = vsel %vm1310, %v1466, 0.0
      %1543 = vadd.xlane.f32.xlu0 %v1542
      %v1544 = vpop.xlane.xlu0 %1543
      %v1545 = vsel %vm1310, %v1468, 0.0
      %1546 = vadd.xlane.f32.xlu0 %v1545
      %v1547 = vpop.xlane.xlu0 %1546
      %v1548 = vsel %vm1310, %v1470, 0.0
      %1549 = vadd.xlane.f32.xlu0 %v1548
      %v1550 = vpop.xlane.xlu0 %1549
      %v1551 = vsel %vm1310, %v1472, 0.0
      %1552 = vadd.xlane.f32.xlu0 %v1551
      %v1553 = vpop.xlane.xlu0 %1552
      %v1554 = vsel %vm1310, %v1474, 0.0
      %1555 = vadd.xlane.f32.xlu0 %v1554
      %v1556 = vpop.xlane.xlu0 %1555
      %v1557 = vsel %vm1310, %v1476, 0.0
      %1558 = vadd.xlane.f32.xlu0 %v1557
      %v1559 = vpop.xlane.xlu0 %1558
      %v1560 = vsel %vm1310, %v1478, 0.0
      %1561 = vadd.xlane.f32.xlu0 %v1560
      %v1562 = vpop.xlane.xlu0 %1561
      %v1563 = vsel %vm1310, %v1480, 0.0
      %1564 = vadd.xlane.f32.xlu0 %v1563
      %v1565 = vpop.xlane.xlu0 %1564
      %v1566 = vsel %vm1310, %v1482, 0.0
      %1567 = vadd.xlane.f32.xlu0 %v1566
      %v1568 = vpop.xlane.xlu0 %1567
      %v1569 = vsel %vm1310, %v1484, 0.0
      %1570 = vadd.xlane.f32.xlu0 %v1569
      %v1571 = vpop.xlane.xlu0 %1570
      %v1572 = vsel %vm1310, %v1486, 0.0
      %1573 = vadd.xlane.f32.xlu0 %v1572
      %v1574 = vpop.xlane.xlu0 %1573
      %v1575 = vsel %vm1310, %v1488, 0.0
      %1576 = vadd.xlane.f32.xlu0 %v1575
      %v1577 = vpop.xlane.xlu0 %1576
      %v1578 = vsel %vm1310, %v1490, 0.0
      %1579 = vadd.xlane.f32.xlu0 %v1578
      %v1580 = vpop.xlane.xlu0 %1579
      %v1581 = vsel %vm1310, %v1492, 0.0
      %1582 = vadd.xlane.f32.xlu0 %v1581
      %v1583 = vpop.xlane.xlu0 %1582
      %v1584 = vsel %vm1310, %v1494, 0.0
      %1585 = vadd.xlane.f32.xlu0 %v1584
      %v1586 = vpop.xlane.xlu0 %1585
      %v1587 = vsel %vm1310, %v1496, 0.0
      %1588 = vadd.xlane.f32.xlu0 %v1587
      %v1589 = vpop.xlane.xlu0 %1588
      %v1590 = vsel %vm1310, %v1498, 0.0
      %1591 = vadd.xlane.f32.xlu0 %v1590
      %v1592 = vpop.xlane.xlu0 %1591
      %v1593 = vsel %vm1310, %v1500, 0.0
      %1594 = vadd.xlane.f32.xlu0 %v1593
      %v1595 = vpop.xlane.xlu0 %1594
      %v1596 = vsel %vm1310, %v1502, 0.0
      %1597 = vadd.xlane.f32.xlu0 %v1596
      %v1598 = vpop.xlane.xlu0 %1597
      %v1599 = vrcp.pop %v1505
      %v1600 = vrcp.pop %v1508
      %v1601 = vrcp.pop %v1511
      %v1602 = vrcp.pop %v1514
      %v1603 = vrcp.pop %v1517
      %v1604 = vrcp.pop %v1520
      %v1605 = vrcp.pop %v1523
      %v1606 = vrcp.pop %v1526
      %v1607 = vrcp.pop %v1529
      %v1608 = vrcp.pop %v1532
      %v1609 = vrcp.pop %v1535
      %v1610 = vrcp.pop %v1538
      %v1611 = vrcp.pop %v1541
      %v1612 = vrcp.pop %v1544
      %v1613 = vrcp.pop %v1547
      %v1614 = vrcp.pop %v1550
      %v1615 = vrcp.pop %v1553
      %v1616 = vrcp.pop %v1556
      %v1617 = vrcp.pop %v1559
      %v1618 = vrcp.pop %v1562
      %v1619 = vrcp.pop %v1565
      %v1620 = vrcp.pop %v1568
      %v1621 = vrcp.pop %v1571
      %v1622 = vrcp.pop %v1574
      %v1623 = vrcp.pop %v1577
      %v1624 = vrcp.pop %v1580
      %v1625 = vrcp.pop %v1583
      %v1626 = vrcp.pop %v1586
      %v1627 = vrcp.pop %v1589
      %v1628 = vrcp.pop %v1592
      %v1629 = vrcp.pop %v1595
      %v1630 = vrcp.pop %v1598
      %v1631 = vmul.f32 %v1505, %v1599
      %v1632 = vmul.f32 %v1508, %v1600
      %v1633 = vmul.f32 %v1511, %v1601
      %v1634 = vmul.f32 %v1514, %v1602
      %v1635 = vmul.f32 %v1517, %v1603
      %v1636 = vmul.f32 %v1520, %v1604
      %v1637 = vmul.f32 %v1523, %v1605
      %v1638 = vmul.f32 %v1526, %v1606
      %v1639 = vmul.f32 %v1529, %v1607
      %v1640 = vmul.f32 %v1532, %v1608
      %v1641 = vmul.f32 %v1535, %v1609
      %v1642 = vmul.f32 %v1538, %v1610
      %v1643 = vmul.f32 %v1541, %v1611
      %v1644 = vmul.f32 %v1544, %v1612
      %v1645 = vmul.f32 %v1547, %v1613
      %v1646 = vmul.f32 %v1550, %v1614
      %v1647 = vmul.f32 %v1553, %v1615
      %v1648 = vmul.f32 %v1556, %v1616
      %v1649 = vmul.f32 %v1559, %v1617
      %v1650 = vmul.f32 %v1562, %v1618
      %v1651 = vmul.f32 %v1565, %v1619
      %v1652 = vmul.f32 %v1568, %v1620
      %v1653 = vmul.f32 %v1571, %v1621
      %v1654 = vmul.f32 %v1574, %v1622
      %v1655 = vmul.f32 %v1577, %v1623
      %v1656 = vmul.f32 %v1580, %v1624
      %v1657 = vmul.f32 %v1583, %v1625
      %v1658 = vmul.f32 %v1586, %v1626
      %v1659 = vmul.f32 %v1589, %v1627
      %v1660 = vmul.f32 %v1592, %v1628
      %v1661 = vmul.f32 %v1595, %v1629
      %v1662 = vmul.f32 %v1598, %v1630
      %v1663 = vsub.f32 2.0, %v1631
      %v1664 = vsub.f32 2.0, %v1632
      %v1665 = vsub.f32 2.0, %v1633
      %v1666 = vsub.f32 2.0, %v1634
      %v1667 = vsub.f32 2.0, %v1635
      %v1668 = vsub.f32 2.0, %v1636
      %v1669 = vsub.f32 2.0, %v1637
      %v1670 = vsub.f32 2.0, %v1638
      %v1671 = vsub.f32 2.0, %v1639
      %v1672 = vsub.f32 2.0, %v1640
      %v1673 = vsub.f32 2.0, %v1641
      %v1674 = vsub.f32 2.0, %v1642
      %v1675 = vsub.f32 2.0, %v1643
      %v1676 = vsub.f32 2.0, %v1644
      %v1677 = vsub.f32 2.0, %v1645
      %v1678 = vsub.f32 2.0, %v1646
      %v1679 = vsub.f32 2.0, %v1647
      %v1680 = vsub.f32 2.0, %v1648
      %v1681 = vsub.f32 2.0, %v1649
      %v1682 = vsub.f32 2.0, %v1650
      %v1683 = vsub.f32 2.0, %v1651
      %v1684 = vsub.f32 2.0, %v1652
      %v1685 = vsub.f32 2.0, %v1653
      %v1686 = vsub.f32 2.0, %v1654
      %v1687 = vsub.f32 2.0, %v1655
      %v1688 = vsub.f32 2.0, %v1656
      %v1689 = vsub.f32 2.0, %v1657
      %v1690 = vsub.f32 2.0, %v1658
      %v1691 = vsub.f32 2.0, %v1659
      %v1692 = vsub.f32 2.0, %v1660
      %v1693 = vsub.f32 2.0, %v1661
      %v1694 = vsub.f32 2.0, %v1662
      %v1695 = vmul.f32 %v1599, %v1663
      %v1696 = vmul.f32 %v1600, %v1664
      %v1697 = vmul.f32 %v1601, %v1665
      %v1698 = vmul.f32 %v1602, %v1666
      %v1699 = vmul.f32 %v1603, %v1667
      %v1700 = vmul.f32 %v1604, %v1668
      %v1701 = vmul.f32 %v1605, %v1669
      %v1702 = vmul.f32 %v1606, %v1670
      %v1703 = vmul.f32 %v1607, %v1671
      %v1704 = vmul.f32 %v1608, %v1672
      %v1705 = vmul.f32 %v1609, %v1673
      %v1706 = vmul.f32 %v1610, %v1674
      %v1707 = vmul.f32 %v1611, %v1675
      %v1708 = vmul.f32 %v1612, %v1676
      %v1709 = vmul.f32 %v1613, %v1677
      %v1710 = vmul.f32 %v1614, %v1678
      %v1711 = vmul.f32 %v1615, %v1679
      %v1712 = vmul.f32 %v1616, %v1680
      %v1713 = vmul.f32 %v1617, %v1681
      %v1714 = vmul.f32 %v1618, %v1682
      %v1715 = vmul.f32 %v1619, %v1683
      %v1716 = vmul.f32 %v1620, %v1684
      %v1717 = vmul.f32 %v1621, %v1685
      %v1718 = vmul.f32 %v1622, %v1686
      %v1719 = vmul.f32 %v1623, %v1687
      %v1720 = vmul.f32 %v1624, %v1688
      %v1721 = vmul.f32 %v1625, %v1689
      %v1722 = vmul.f32 %v1626, %v1690
      %v1723 = vmul.f32 %v1627, %v1691
      %v1724 = vmul.f32 %v1628, %v1692
      %v1725 = vmul.f32 %v1629, %v1693
      %v1726 = vmul.f32 %v1630, %v1694
      %v1727 = vmul.f32 %v1440, %v1695
      %v1728 = vmul.f32 %v1442, %v1696
      %v1729 = vmul.f32 %v1444, %v1697
      %v1730 = vmul.f32 %v1446, %v1698
      %v1731 = vmul.f32 %v1448, %v1699
      %v1732 = vmul.f32 %v1450, %v1700
      %v1733 = vmul.f32 %v1452, %v1701
      %v1734 = vmul.f32 %v1454, %v1702
      %v1735 = vmul.f32 %v1456, %v1703
      %v1736 = vmul.f32 %v1458, %v1704
      %v1737 = vmul.f32 %v1460, %v1705
      %v1738 = vmul.f32 %v1462, %v1706
      %v1739 = vmul.f32 %v1464, %v1707
      %v1740 = vmul.f32 %v1466, %v1708
      %v1741 = vmul.f32 %v1468, %v1709
      %v1742 = vmul.f32 %v1470, %v1710
      %v1743 = vmul.f32 %v1472, %v1711
      %v1744 = vmul.f32 %v1474, %v1712
      %v1745 = vmul.f32 %v1476, %v1713
      %v1746 = vmul.f32 %v1478, %v1714
      %v1747 = vmul.f32 %v1480, %v1715
      %v1748 = vmul.f32 %v1482, %v1716
      %v1749 = vmul.f32 %v1484, %v1717
      %v1750 = vmul.f32 %v1486, %v1718
      %v1751 = vmul.f32 %v1488, %v1719
      %v1752 = vmul.f32 %v1490, %v1720
      %v1753 = vmul.f32 %v1492, %v1721
      %v1754 = vmul.f32 %v1494, %v1722
      %v1755 = vmul.f32 %v1496, %v1723
      %v1756 = vmul.f32 %v1498, %v1724
      %v1757 = vmul.f32 %v1500, %v1725
      %v1758 = vmul.f32 %v1502, %v1726
      %v1759 = vpack.c.bf16 %v1728, %v1727
      %v1760 = vpack.c.bf16 %v1730, %v1729
      %v1761 = vpack.c.bf16 %v1732, %v1731
      %v1762 = vpack.c.bf16 %v1734, %v1733
      %v1763 = vpack.c.bf16 %v1736, %v1735
      %v1764 = vpack.c.bf16 %v1738, %v1737
      %v1765 = vpack.c.bf16 %v1740, %v1739
      %v1766 = vpack.c.bf16 %v1742, %v1741
      %v1767 = vpack.c.bf16 %v1744, %v1743
      %v1768 = vpack.c.bf16 %v1746, %v1745
      %v1769 = vpack.c.bf16 %v1748, %v1747
      %v1770 = vpack.c.bf16 %v1750, %v1749
      %v1771 = vpack.c.bf16 %v1752, %v1751
      %v1772 = vpack.c.bf16 %v1754, %v1753
      %v1773 = vpack.c.bf16 %v1756, %v1755
      %v1774 = vpack.c.bf16 %v1758, %v1757
      %v1776 = vsel %vm1310, %v1759, 0
      %v1779 = vsel %vm1310, %v1760, 0
      %v1782 = vsel %vm1310, %v1761, 0
      %v1785 = vsel %vm1310, %v1762, 0
      %1787 = vmatprep.subr.bf16.mxu0 0
      %1788 = vmatpush1.bf16.msra.mxu0 %v972
      %1789 = vmatprep.subr.bf16.mxu0 0
      %1790 = vmatpush1.bf16.msra.mxu0 %v973
      %1791 = vmatprep.subr.bf16.mxu0 0
      %1792 = vmatpush1.bf16.msra.mxu0 %v974
      %1793 = vmatprep.subr.bf16.mxu0 0
      %1794 = vmatpush1.bf16.msra.mxu0 %v975
      %1795 = vmatprep.subr.bf16.mxu0 0
      %1796 = vmatpush1.bf16.msra.mxu0 0
      %1797 = vmatprep.subr.bf16.mxu0 0
      %1798 = vmatpush1.bf16.msra.mxu0 0
      %1799 = vmatprep.subr.bf16.mxu0 0
      %1800 = vmatpush1.bf16.msra.mxu0 0
      %1801 = vmatprep.subr.bf16.mxu0 0
      %1802 = vmatpush1.bf16.msra.mxu0 0
      %1803 = vmatprep.subr.bf16.mxu0 0
      %1804 = vmatpush1.bf16.msra.mxu0 0
      %1805 = vmatprep.subr.bf16.mxu0 0
      %1806 = vmatpush1.bf16.msra.mxu0 0
      %1807 = vmatprep.subr.bf16.mxu0 0
      %1808 = vmatpush1.bf16.msra.mxu0 0
      %1809 = vmatprep.subr.bf16.mxu0 0
      %1810 = vmatpush1.bf16.msra.mxu0 0
      %1811 = vmatprep.subr.bf16.mxu0 0
      %1812 = vmatpush1.bf16.msra.mxu0 0
      %1813 = vmatprep.subr.bf16.mxu0 0
      %1814 = vmatpush1.bf16.msra.mxu0 0
      %1815 = vmatprep.subr.bf16.mxu0 0
      %1816 = vmatpush1.bf16.msra.mxu0 0
      %1817 = vmatprep.subr.bf16.mxu0 0
      %1818 = vmatpush1.bf16.msra.mxu0 0
      %1819 = vmatprep.mubr.bf16.mxu0 0
      %1820 = vmatmul.mubr.bf16.gmra.mrb[0].mxu0 %v1776
      %v1821 = vpop.f32.mrb[0].mxu0
      %v1822 = vadd.f32 0.0, %v1821
      %v1823 = vpop.f32.mrb[0].mxu0
      %v1824 = vpop.f32.mrb[0].mxu0
      %v1825 = vadd.f32 0.0, %v1824
      %v1826 = vpop.f32.mrb[0].mxu0
      %1827 = vmatprep.mubr.bf16.mxu0 0
      %1828 = vmatmul.mubr.bf16.gmra.mrb[0].mxu0 %v1779
      %v1829 = vpop.f32.mrb[0].mxu0
      %v1830 = vadd.f32 0.0, %v1829
      %v1831 = vpop.f32.mrb[0].mxu0
      %v1832 = vpop.f32.mrb[0].mxu0
      %v1833 = vadd.f32 0.0, %v1832
      %v1834 = vpop.f32.mrb[0].mxu0
      %1835 = vmatprep.mubr.bf16.mxu0 0
      %1836 = vmatmul.mubr.bf16.gmra.mrb[0].mxu0 %v1782
      %v1837 = vpop.f32.mrb[0].mxu0
      %v1838 = vadd.f32 0.0, %v1837
      %v1839 = vpop.f32.mrb[0].mxu0
      %v1840 = vpop.f32.mrb[0].mxu0
      %v1841 = vadd.f32 0.0, %v1840
      %v1842 = vpop.f32.mrb[0].mxu0
      %1843 = vmatprep.mubr.bf16.mxu0 0
      %1844 = vmatmul.mubr.bf16.gmra.mrb[0].mxu0 %v1785
      %v1845 = vpop.f32.mrb[0].mxu0
      %v1846 = vadd.f32 0.0, %v1845
      %v1847 = vpop.f32.mrb[0].mxu0
      %v1848 = vpop.f32.mrb[0].mxu0
      %v1849 = vadd.f32 0.0, %v1848
      %v1850 = vpop.f32.mrb[0].mxu0
      %1851 = vdwg.mxu0
      %v1853 = vsel %vm1310, %v1763, 0
      %v1856 = vsel %vm1310, %v1764, 0
      %v1859 = vsel %vm1310, %v1765, 0
      %v1862 = vsel %vm1310, %v1766, 0
      %1864 = vmatprep.subr.bf16.mxu0 0
      %1865 = vmatpush1.bf16.msra.mxu0 %v976
      %1866 = vmatprep.subr.bf16.mxu0 0
      %1867 = vmatpush1.bf16.msra.mxu0 %v977
      %1868 = vmatprep.subr.bf16.mxu0 0
      %1869 = vmatpush1.bf16.msra.mxu0 %v978
      %1870 = vmatprep.subr.bf16.mxu0 0
      %1871 = vmatpush1.bf16.msra.mxu0 %v979
      %1872 = vmatprep.subr.bf16.mxu0 0
      %1873 = vmatpush1.bf16.msra.mxu0 0
      %1874 = vmatprep.subr.bf16.mxu0 0
      %1875 = vmatpush1.bf16.msra.mxu0 0
      %1876 = vmatprep.subr.bf16.mxu0 0
      %1877 = vmatpush1.bf16.msra.mxu0 0
      %1878 = vmatprep.subr.bf16.mxu0 0
      %1879 = vmatpush1.bf16.msra.mxu0 0
      %1880 = vmatprep.subr.bf16.mxu0 0
      %1881 = vmatpush1.bf16.msra.mxu0 0
      %1882 = vmatprep.subr.bf16.mxu0 0
      %1883 = vmatpush1.bf16.msra.mxu0 0
      %1884 = vmatprep.subr.bf16.mxu0 0
      %1885 = vmatpush1.bf16.msra.mxu0 0
      %1886 = vmatprep.subr.bf16.mxu0 0
      %1887 = vmatpush1.bf16.msra.mxu0 0
      %1888 = vmatprep.subr.bf16.mxu0 0
      %1889 = vmatpush1.bf16.msra.mxu0 0
      %1890 = vmatprep.subr.bf16.mxu0 0
      %1891 = vmatpush1.bf16.msra.mxu0 0
      %1892 = vmatprep.subr.bf16.mxu0 0
      %1893 = vmatpush1.bf16.msra.mxu0 0
      %1894 = vmatprep.subr.bf16.mxu0 0
      %1895 = vmatpush1.bf16.msra.mxu0 0
      %1896 = vmatprep.mubr.bf16.mxu0 0
      %1897 = vmatmul.mubr.bf16.gmra.mrb[0].mxu0 %v1853
      %v1898 = vpop.f32.mrb[0].mxu0
      %v1899 = vadd.f32 0.0, %v1898
      %v1900 = vpop.f32.mrb[0].mxu0
      %v1901 = vpop.f32.mrb[0].mxu0
      %v1902 = vadd.f32 0.0, %v1901
      %v1903 = vpop.f32.mrb[0].mxu0
      %1904 = vmatprep.mubr.bf16.mxu0 0
      %1905 = vmatmul.mubr.bf16.gmra.mrb[0].mxu0 %v1856
      %v1906 = vpop.f32.mrb[0].mxu0
      %v1907 = vadd.f32 0.0, %v1906
      %v1908 = vpop.f32.mrb[0].mxu0
      %v1909 = vpop.f32.mrb[0].mxu0
      %v1910 = vadd.f32 0.0, %v1909
      %v1911 = vpop.f32.mrb[0].mxu0
      %1912 = vmatprep.mubr.bf16.mxu0 0
      %1913 = vmatmul.mubr.bf16.gmra.mrb[0].mxu0 %v1859
      %v1914 = vpop.f32.mrb[0].mxu0
      %v1915 = vadd.f32 0.0, %v1914
      %v1916 = vpop.f32.mrb[0].mxu0
      %v1917 = vpop.f32.mrb[0].mxu0
      %v1918 = vadd.f32 0.0, %v1917
      %v1919 = vpop.f32.mrb[0].mxu0
      %1920 = vmatprep.mubr.bf16.mxu0 0
      %1921 = vmatmul.mubr.bf16.gmra.mrb[0].mxu0 %v1862
      %v1922 = vpop.f32.mrb[0].mxu0
      %v1923 = vadd.f32 0.0, %v1922
      %v1924 = vpop.f32.mrb[0].mxu0
      %v1925 = vpop.f32.mrb[0].mxu0
      %v1926 = vadd.f32 0.0, %v1925
      %v1927 = vpop.f32.mrb[0].mxu0
      %1928 = vdwg.mxu0
      %v1930 = vsel %vm1310, %v1767, 0
      %v1933 = vsel %vm1310, %v1768, 0
      %v1936 = vsel %vm1310, %v1769, 0
      %v1939 = vsel %vm1310, %v1770, 0
      %1941 = vmatprep.subr.bf16.mxu0 0
      %1942 = vmatpush1.bf16.msra.mxu0 %v980
      %1943 = vmatprep.subr.bf16.mxu0 0
      %1944 = vmatpush1.bf16.msra.mxu0 %v981
      %1945 = vmatprep.subr.bf16.mxu0 0
      %1946 = vmatpush1.bf16.msra.mxu0 %v982
      %1947 = vmatprep.subr.bf16.mxu0 0
      %1948 = vmatpush1.bf16.msra.mxu0 %v983
      %1949 = vmatprep.subr.bf16.mxu0 0
      %1950 = vmatpush1.bf16.msra.mxu0 0
      %1951 = vmatprep.subr.bf16.mxu0 0
      %1952 = vmatpush1.bf16.msra.mxu0 0
      %1953 = vmatprep.subr.bf16.mxu0 0
      %1954 = vmatpush1.bf16.msra.mxu0 0
      %1955 = vmatprep.subr.bf16.mxu0 0
      %1956 = vmatpush1.bf16.msra.mxu0 0
      %1957 = vmatprep.subr.bf16.mxu0 0
      %1958 = vmatpush1.bf16.msra.mxu0 0
      %1959 = vmatprep.subr.bf16.mxu0 0
      %1960 = vmatpush1.bf16.msra.mxu0 0
      %1961 = vmatprep.subr.bf16.mxu0 0
      %1962 = vmatpush1.bf16.msra.mxu0 0
      %1963 = vmatprep.subr.bf16.mxu0 0
      %1964 = vmatpush1.bf16.msra.mxu0 0
      %1965 = vmatprep.subr.bf16.mxu0 0
      %1966 = vmatpush1.bf16.msra.mxu0 0
      %1967 = vmatprep.subr.bf16.mxu0 0
      %1968 = vmatpush1.bf16.msra.mxu0 0
      %1969 = vmatprep.subr.bf16.mxu0 0
      %1970 = vmatpush1.bf16.msra.mxu0 0
      %1971 = vmatprep.subr.bf16.mxu0 0
      %1972 = vmatpush1.bf16.msra.mxu0 0
      %1973 = vmatprep.mubr.bf16.mxu0 0
      %1974 = vmatmul.mubr.bf16.gmra.mrb[0].mxu0 %v1930
      %v1975 = vpop.f32.mrb[0].mxu0
      %v1976 = vadd.f32 0.0, %v1975
      %v1977 = vpop.f32.mrb[0].mxu0
      %v1978 = vpop.f32.mrb[0].mxu0
      %v1979 = vadd.f32 0.0, %v1978
      %v1980 = vpop.f32.mrb[0].mxu0
      %1981 = vmatprep.mubr.bf16.mxu0 0
      %1982 = vmatmul.mubr.bf16.gmra.mrb[0].mxu0 %v1933
      %v1983 = vpop.f32.mrb[0].mxu0
      %v1984 = vadd.f32 0.0, %v1983
      %v1985 = vpop.f32.mrb[0].mxu0
      %v1986 = vpop.f32.mrb[0].mxu0
      %v1987 = vadd.f32 0.0, %v1986
      %v1988 = vpop.f32.mrb[0].mxu0
      %1989 = vmatprep.mubr.bf16.mxu0 0
      %1990 = vmatmul.mubr.bf16.gmra.mrb[0].mxu0 %v1936
      %v1991 = vpop.f32.mrb[0].mxu0
      %v1992 = vadd.f32 0.0, %v1991
      %v1993 = vpop.f32.mrb[0].mxu0
      %v1994 = vpop.f32.mrb[0].mxu0
      %v1995 = vadd.f32 0.0, %v1994
      %v1996 = vpop.f32.mrb[0].mxu0
      %1997 = vmatprep.mubr.bf16.mxu0 0
      %1998 = vmatmul.mubr.bf16.gmra.mrb[0].mxu0 %v1939
      %v1999 = vpop.f32.mrb[0].mxu0
      %v2000 = vadd.f32 0.0, %v1999
      %v2001 = vpop.f32.mrb[0].mxu0
      %v2002 = vpop.f32.mrb[0].mxu0
      %v2003 = vadd.f32 0.0, %v2002
      %v2004 = vpop.f32.mrb[0].mxu0
      %2005 = vdwg.mxu0
      %v2007 = vsel %vm1310, %v1771, 0
      %v2010 = vsel %vm1310, %v1772, 0
      %v2013 = vsel %vm1310, %v1773, 0
      %v2016 = vsel %vm1310, %v1774, 0
      %2018 = vmatprep.subr.bf16.mxu0 0
      %2019 = vmatpush1.bf16.msra.mxu0 %v984
      %2020 = vmatprep.subr.bf16.mxu0 0
      %2021 = vmatpush1.bf16.msra.mxu0 %v985
      %2022 = vmatprep.subr.bf16.mxu0 0
      %2023 = vmatpush1.bf16.msra.mxu0 %v986
      %2024 = vmatprep.subr.bf16.mxu0 0
      %2025 = vmatpush1.bf16.msra.mxu0 %v987
      %2026 = vmatprep.subr.bf16.mxu0 0
      %2027 = vmatpush1.bf16.msra.mxu0 0
      %2028 = vmatprep.subr.bf16.mxu0 0
      %2029 = vmatpush1.bf16.msra.mxu0 0
      %2030 = vmatprep.subr.bf16.mxu0 0
      %2031 = vmatpush1.bf16.msra.mxu0 0
      %2032 = vmatprep.subr.bf16.mxu0 0
      %2033 = vmatpush1.bf16.msra.mxu0 0
      %2034 = vmatprep.subr.bf16.mxu0 0
      %2035 = vmatpush1.bf16.msra.mxu0 0
      %2036 = vmatprep.subr.bf16.mxu0 0
      %2037 = vmatpush1.bf16.msra.mxu0 0
      %2038 = vmatprep.subr.bf16.mxu0 0
      %2039 = vmatpush1.bf16.msra.mxu0 0
      %2040 = vmatprep.subr.bf16.mxu0 0
      %2041 = vmatpush1.bf16.msra.mxu0 0
      %2042 = vmatprep.subr.bf16.mxu0 0
      %2043 = vmatpush1.bf16.msra.mxu0 0
      %2044 = vmatprep.subr.bf16.mxu0 0
      %2045 = vmatpush1.bf16.msra.mxu0 0
      %2046 = vmatprep.subr.bf16.mxu0 0
      %2047 = vmatpush1.bf16.msra.mxu0 0
      %2048 = vmatprep.subr.bf16.mxu0 0
      %2049 = vmatpush1.bf16.msra.mxu0 0
      %2050 = vmatprep.mubr.bf16.mxu0 0
      %2051 = vmatmul.mubr.bf16.gmra.mrb[0].mxu0 %v2007
      %v2052 = vpop.f32.mrb[0].mxu0
      %v2053 = vadd.f32 0.0, %v2052
      %v2054 = vpop.f32.mrb[0].mxu0
      %v2055 = vpop.f32.mrb[0].mxu0
      %v2056 = vadd.f32 0.0, %v2055
      %v2057 = vpop.f32.mrb[0].mxu0
      %2058 = vmatprep.mubr.bf16.mxu0 0
      %2059 = vmatmul.mubr.bf16.gmra.mrb[0].mxu0 %v2010
      %v2060 = vpop.f32.mrb[0].mxu0
      %v2061 = vadd.f32 0.0, %v2060
      %v2062 = vpop.f32.mrb[0].mxu0
      %v2063 = vpop.f32.mrb[0].mxu0
      %v2064 = vadd.f32 0.0, %v2063
      %v2065 = vpop.f32.mrb[0].mxu0
      %2066 = vmatprep.mubr.bf16.mxu0 0
      %2067 = vmatmul.mubr.bf16.gmra.mrb[0].mxu0 %v2013
      %v2068 = vpop.f32.mrb[0].mxu0
      %v2069 = vadd.f32 0.0, %v2068
      %v2070 = vpop.f32.mrb[0].mxu0
      %v2071 = vpop.f32.mrb[0].mxu0
      %v2072 = vadd.f32 0.0, %v2071
      %v2073 = vpop.f32.mrb[0].mxu0
      %2074 = vmatprep.mubr.bf16.mxu0 0
      %2075 = vmatmul.mubr.bf16.gmra.mrb[0].mxu0 %v2016
      %v2076 = vpop.f32.mrb[0].mxu0
      %v2077 = vadd.f32 0.0, %v2076
      %v2078 = vpop.f32.mrb[0].mxu0
      %v2079 = vpop.f32.mrb[0].mxu0
      %v2080 = vadd.f32 0.0, %v2079
      %v2081 = vpop.f32.mrb[0].mxu0
      %2082 = vdwg.mxu0
      %v2083 = vpack.c.bf16 %v1825, %v1822
      %v2084 = vpack.c.bf16 %v1833, %v1830
      %v2085 = vpack.c.bf16 %v1841, %v1838
      %v2086 = vpack.c.bf16 %v1849, %v1846
      %v2087 = vpack.c.bf16 %v1902, %v1899
      %v2088 = vpack.c.bf16 %v1910, %v1907
      %v2089 = vpack.c.bf16 %v1918, %v1915
      %v2090 = vpack.c.bf16 %v1926, %v1923
      %v2091 = vpack.c.bf16 %v1979, %v1976
      %v2092 = vpack.c.bf16 %v1987, %v1984
      %v2093 = vpack.c.bf16 %v1995, %v1992
      %v2094 = vpack.c.bf16 %v2003, %v2000
      %v2095 = vpack.c.bf16 %v2056, %v2053
      %v2096 = vpack.c.bf16 %v2064, %v2061
      %v2097 = vpack.c.bf16 %v2072, %v2069
      %v2098 = vpack.c.bf16 %v2080, %v2077
      %v2099 = vld [vmem:[%s5] sm:$0xf]
      %v2100 = vld [vmem:[%s5 + $0x4] sm:$0xf]
      %v2101 = vld [vmem:[%s5 + $0x8] sm:$0xf]
      %v2102 = vld [vmem:[%s5 + $0xc] sm:$0xf]
      %v2104 = vsel %vm988, %v2083, 0
      %v2107 = vsel %vm988, %v2084, 0
      %v2110 = vsel %vm988, %v2085, 0
      %v2113 = vsel %vm988, %v2086, 0
      %v2116 = vsel %vm1001, %v2099, 0
      %2118 = vmatprep.subr.bf16.mxu0 0
      %2119 = vmatpush1.bf16.msra.mxu0 %v2116
      %2120 = vmatprep.subr.bf16.mxu0 0
      %2121 = vmatpush1.bf16.msra.mxu0 0
      %2122 = vmatprep.subr.bf16.mxu0 0
      %2123 = vmatpush1.bf16.msra.mxu0 0
      %2124 = vmatprep.subr.bf16.mxu0 0
      %2125 = vmatpush1.bf16.msra.mxu0 0
      %2126 = vmatprep.subr.bf16.mxu0 0
      %2127 = vmatpush1.bf16.msra.mxu0 0
      %2128 = vmatprep.subr.bf16.mxu0 0
      %2129 = vmatpush1.bf16.msra.mxu0 0
      %2130 = vmatprep.subr.bf16.mxu0 0
      %2131 = vmatpush1.bf16.msra.mxu0 0
      %2132 = vmatprep.subr.bf16.mxu0 0
      %2133 = vmatpush1.bf16.msra.mxu0 0
      %2134 = vmatprep.subr.bf16.mxu0 0
      %2135 = vmatpush1.bf16.msra.mxu0 0
      %2136 = vmatprep.subr.bf16.mxu0 0
      %2137 = vmatpush1.bf16.msra.mxu0 0
      %2138 = vmatprep.subr.bf16.mxu0 0
      %2139 = vmatpush1.bf16.msra.mxu0 0
      %2140 = vmatprep.subr.bf16.mxu0 0
      %2141 = vmatpush1.bf16.msra.mxu0 0
      %2142 = vmatprep.subr.bf16.mxu0 0
      %2143 = vmatpush1.bf16.msra.mxu0 0
      %2144 = vmatprep.subr.bf16.mxu0 0
      %2145 = vmatpush1.bf16.msra.mxu0 0
      %2146 = vmatprep.subr.bf16.mxu0 0
      %2147 = vmatpush1.bf16.msra.mxu0 0
      %2148 = vmatprep.subr.bf16.mxu0 0
      %2149 = vmatpush1.bf16.msra.mxu0 0
      %2150 = vmatprep.mubr.bf16.mxu0 0
      %2151 = vmatmul.mubr.bf16.gmra.mrb[0].mxu0 %v2104
      %v2152 = vpop.f32.mrb[0].mxu0
      %v2153 = vadd.f32 0.0, %v2152
      %v2154 = vpop.f32.mrb[0].mxu0
      %v2155 = vpop.f32.mrb[0].mxu0
      %v2156 = vadd.f32 0.0, %v2155
      %v2157 = vpop.f32.mrb[0].mxu0
      %2158 = vmatprep.mubr.bf16.mxu0 0
      %2159 = vmatmul.mubr.bf16.gmra.mrb[0].mxu0 %v2107
      %v2160 = vpop.f32.mrb[0].mxu0
      %v2161 = vadd.f32 0.0, %v2160
      %v2162 = vpop.f32.mrb[0].mxu0
      %v2163 = vpop.f32.mrb[0].mxu0
      %v2164 = vadd.f32 0.0, %v2163
      %v2165 = vpop.f32.mrb[0].mxu0
      %2166 = vmatprep.mubr.bf16.mxu0 0
      %2167 = vmatmul.mubr.bf16.gmra.mrb[0].mxu0 %v2110
      %v2168 = vpop.f32.mrb[0].mxu0
      %v2169 = vadd.f32 0.0, %v2168
      %v2170 = vpop.f32.mrb[0].mxu0
      %v2171 = vpop.f32.mrb[0].mxu0
      %v2172 = vadd.f32 0.0, %v2171
      %v2173 = vpop.f32.mrb[0].mxu0
      %2174 = vmatprep.mubr.bf16.mxu0 0
      %2175 = vmatmul.mubr.bf16.gmra.mrb[0].mxu0 %v2113
      %v2176 = vpop.f32.mrb[0].mxu0
      %v2177 = vadd.f32 0.0, %v2176
      %v2178 = vpop.f32.mrb[0].mxu0
      %v2179 = vpop.f32.mrb[0].mxu0
      %v2180 = vadd.f32 0.0, %v2179
      %v2181 = vpop.f32.mrb[0].mxu0
      %2182 = vdwg.mxu0
      %v2184 = vsel %vm988, %v2087, 0
      %v2187 = vsel %vm988, %v2088, 0
      %v2190 = vsel %vm988, %v2089, 0
      %v2193 = vsel %vm988, %v2090, 0
      %v2196 = vsel %vm1001, %v2100, 0
      %2198 = vmatprep.subr.bf16.mxu0 0
      %2199 = vmatpush1.bf16.msra.mxu0 %v2196
      %2200 = vmatprep.subr.bf16.mxu0 0
      %2201 = vmatpush1.bf16.msra.mxu0 0
      %2202 = vmatprep.subr.bf16.mxu0 0
      %2203 = vmatpush1.bf16.msra.mxu0 0
      %2204 = vmatprep.subr.bf16.mxu0 0
      %2205 = vmatpush1.bf16.msra.mxu0 0
      %2206 = vmatprep.subr.bf16.mxu0 0
      %2207 = vmatpush1.bf16.msra.mxu0 0
      %2208 = vmatprep.subr.bf16.mxu0 0
      %2209 = vmatpush1.bf16.msra.mxu0 0
      %2210 = vmatprep.subr.bf16.mxu0 0
      %2211 = vmatpush1.bf16.msra.mxu0 0
      %2212 = vmatprep.subr.bf16.mxu0 0
      %2213 = vmatpush1.bf16.msra.mxu0 0
      %2214 = vmatprep.subr.bf16.mxu0 0
      %2215 = vmatpush1.bf16.msra.mxu0 0
      %2216 = vmatprep.subr.bf16.mxu0 0
      %2217 = vmatpush1.bf16.msra.mxu0 0
      %2218 = vmatprep.subr.bf16.mxu0 0
      %2219 = vmatpush1.bf16.msra.mxu0 0
      %2220 = vmatprep.subr.bf16.mxu0 0
      %2221 = vmatpush1.bf16.msra.mxu0 0
      %2222 = vmatprep.subr.bf16.mxu0 0
      %2223 = vmatpush1.bf16.msra.mxu0 0
      %2224 = vmatprep.subr.bf16.mxu0 0
      %2225 = vmatpush1.bf16.msra.mxu0 0
      %2226 = vmatprep.subr.bf16.mxu0 0
      %2227 = vmatpush1.bf16.msra.mxu0 0
      %2228 = vmatprep.subr.bf16.mxu0 0
      %2229 = vmatpush1.bf16.msra.mxu0 0
      %2230 = vmatprep.mubr.bf16.mxu0 0
      %2231 = vmatmul.mubr.bf16.gmra.mrb[0].mxu0 %v2184
      %v2232 = vpop.f32.mrb[0].mxu0
      %v2233 = vadd.f32 0.0, %v2232
      %v2234 = vpop.f32.mrb[0].mxu0
      %v2235 = vpop.f32.mrb[0].mxu0
      %v2236 = vadd.f32 0.0, %v2235
      %v2237 = vpop.f32.mrb[0].mxu0
      %2238 = vmatprep.mubr.bf16.mxu0 0
      %2239 = vmatmul.mubr.bf16.gmra.mrb[0].mxu0 %v2187
      %v2240 = vpop.f32.mrb[0].mxu0
      %v2241 = vadd.f32 0.0, %v2240
      %v2242 = vpop.f32.mrb[0].mxu0
      %v2243 = vpop.f32.mrb[0].mxu0
      %v2244 = vadd.f32 0.0, %v2243
      %v2245 = vpop.f32.mrb[0].mxu0
      %2246 = vmatprep.mubr.bf16.mxu0 0
      %2247 = vmatmul.mubr.bf16.gmra.mrb[0].mxu0 %v2190
      %v2248 = vpop.f32.mrb[0].mxu0
      %v2249 = vadd.f32 0.0, %v2248
      %v2250 = vpop.f32.mrb[0].mxu0
      %v2251 = vpop.f32.mrb[0].mxu0
      %v2252 = vadd.f32 0.0, %v2251
      %v2253 = vpop.f32.mrb[0].mxu0
      %2254 = vmatprep.mubr.bf16.mxu0 0
      %2255 = vmatmul.mubr.bf16.gmra.mrb[0].mxu0 %v2193
      %v2256 = vpop.f32.mrb[0].mxu0
      %v2257 = vadd.f32 0.0, %v2256
      %v2258 = vpop.f32.mrb[0].mxu0
      %v2259 = vpop.f32.mrb[0].mxu0
      %v2260 = vadd.f32 0.0, %v2259
      %v2261 = vpop.f32.mrb[0].mxu0
      %2262 = vdwg.mxu0
      %v2264 = vsel %vm988, %v2091, 0
      %v2267 = vsel %vm988, %v2092, 0
      %v2270 = vsel %vm988, %v2093, 0
      %v2273 = vsel %vm988, %v2094, 0
      %v2276 = vsel %vm1001, %v2101, 0
      %2278 = vmatprep.subr.bf16.mxu0 0
      %2279 = vmatpush1.bf16.msra.mxu0 %v2276
      %2280 = vmatprep.subr.bf16.mxu0 0
      %2281 = vmatpush1.bf16.msra.mxu0 0
      %2282 = vmatprep.subr.bf16.mxu0 0
      %2283 = vmatpush1.bf16.msra.mxu0 0
      %2284 = vmatprep.subr.bf16.mxu0 0
      %2285 = vmatpush1.bf16.msra.mxu0 0
      %2286 = vmatprep.subr.bf16.mxu0 0
      %2287 = vmatpush1.bf16.msra.mxu0 0
      %2288 = vmatprep.subr.bf16.mxu0 0
      %2289 = vmatpush1.bf16.msra.mxu0 0
      %2290 = vmatprep.subr.bf16.mxu0 0
      %2291 = vmatpush1.bf16.msra.mxu0 0
      %2292 = vmatprep.subr.bf16.mxu0 0
      %2293 = vmatpush1.bf16.msra.mxu0 0
      %2294 = vmatprep.subr.bf16.mxu0 0
      %2295 = vmatpush1.bf16.msra.mxu0 0
      %2296 = vmatprep.subr.bf16.mxu0 0
      %2297 = vmatpush1.bf16.msra.mxu0 0
      %2298 = vmatprep.subr.bf16.mxu0 0
      %2299 = vmatpush1.bf16.msra.mxu0 0
      %2300 = vmatprep.subr.bf16.mxu0 0
      %2301 = vmatpush1.bf16.msra.mxu0 0
      %2302 = vmatprep.subr.bf16.mxu0 0
      %2303 = vmatpush1.bf16.msra.mxu0 0
      %2304 = vmatprep.subr.bf16.mxu0 0
      %2305 = vmatpush1.bf16.msra.mxu0 0
      %2306 = vmatprep.subr.bf16.mxu0 0
      %2307 = vmatpush1.bf16.msra.mxu0 0
      %2308 = vmatprep.subr.bf16.mxu0 0
      %2309 = vmatpush1.bf16.msra.mxu0 0
      %2310 = vmatprep.mubr.bf16.mxu0 0
      %2311 = vmatmul.mubr.bf16.gmra.mrb[0].mxu0 %v2264
      %v2312 = vpop.f32.mrb[0].mxu0
      %v2313 = vadd.f32 0.0, %v2312
      %v2314 = vpop.f32.mrb[0].mxu0
      %v2315 = vpop.f32.mrb[0].mxu0
      %v2316 = vadd.f32 0.0, %v2315
      %v2317 = vpop.f32.mrb[0].mxu0
      %2318 = vmatprep.mubr.bf16.mxu0 0
      %2319 = vmatmul.mubr.bf16.gmra.mrb[0].mxu0 %v2267
      %v2320 = vpop.f32.mrb[0].mxu0
      %v2321 = vadd.f32 0.0, %v2320
      %v2322 = vpop.f32.mrb[0].mxu0
      %v2323 = vpop.f32.mrb[0].mxu0
      %v2324 = vadd.f32 0.0, %v2323
      %v2325 = vpop.f32.mrb[0].mxu0
      %2326 = vmatprep.mubr.bf16.mxu0 0
      %2327 = vmatmul.mubr.bf16.gmra.mrb[0].mxu0 %v2270
      %v2328 = vpop.f32.mrb[0].mxu0
      %v2329 = vadd.f32 0.0, %v2328
      %v2330 = vpop.f32.mrb[0].mxu0
      %v2331 = vpop.f32.mrb[0].mxu0
      %v2332 = vadd.f32 0.0, %v2331
      %v2333 = vpop.f32.mrb[0].mxu0
      %2334 = vmatprep.mubr.bf16.mxu0 0
      %2335 = vmatmul.mubr.bf16.gmra.mrb[0].mxu0 %v2273
      %v2336 = vpop.f32.mrb[0].mxu0
      %v2337 = vadd.f32 0.0, %v2336
      %v2338 = vpop.f32.mrb[0].mxu0
      %v2339 = vpop.f32.mrb[0].mxu0
      %v2340 = vadd.f32 0.0, %v2339
      %v2341 = vpop.f32.mrb[0].mxu0
      %2342 = vdwg.mxu0
      %v2344 = vsel %vm988, %v2095, 0
      %v2347 = vsel %vm988, %v2096, 0
      %v2350 = vsel %vm988, %v2097, 0
      %v2353 = vsel %vm988, %v2098, 0
      %v2356 = vsel %vm1001, %v2102, 0
      %2358 = vmatprep.subr.bf16.mxu0 0
      %2359 = vmatpush1.bf16.msra.mxu0 %v2356
      %2360 = vmatprep.subr.bf16.mxu0 0
      %2361 = vmatpush1.bf16.msra.mxu0 0
      %2362 = vmatprep.subr.bf16.mxu0 0
      %2363 = vmatpush1.bf16.msra.mxu0 0
      %2364 = vmatprep.subr.bf16.mxu0 0
      %2365 = vmatpush1.bf16.msra.mxu0 0
      %2366 = vmatprep.subr.bf16.mxu0 0
      %2367 = vmatpush1.bf16.msra.mxu0 0
      %2368 = vmatprep.subr.bf16.mxu0 0
      %2369 = vmatpush1.bf16.msra.mxu0 0
      %2370 = vmatprep.subr.bf16.mxu0 0
      %2371 = vmatpush1.bf16.msra.mxu0 0
      %2372 = vmatprep.subr.bf16.mxu0 0
      %2373 = vmatpush1.bf16.msra.mxu0 0
      %2374 = vmatprep.subr.bf16.mxu0 0
      %2375 = vmatpush1.bf16.msra.mxu0 0
      %2376 = vmatprep.subr.bf16.mxu0 0
      %2377 = vmatpush1.bf16.msra.mxu0 0
      %2378 = vmatprep.subr.bf16.mxu0 0
      %2379 = vmatpush1.bf16.msra.mxu0 0
      %2380 = vmatprep.subr.bf16.mxu0 0
      %2381 = vmatpush1.bf16.msra.mxu0 0
      %2382 = vmatprep.subr.bf16.mxu0 0
      %2383 = vmatpush1.bf16.msra.mxu0 0
      %2384 = vmatprep.subr.bf16.mxu0 0
      %2385 = vmatpush1.bf16.msra.mxu0 0
      %2386 = vmatprep.subr.bf16.mxu0 0
      %2387 = vmatpush1.bf16.msra.mxu0 0
      %2388 = vmatprep.subr.bf16.mxu0 0
      %2389 = vmatpush1.bf16.msra.mxu0 0
      %2390 = vmatprep.mubr.bf16.mxu0 0
      %2391 = vmatmul.mubr.bf16.gmra.mrb[0].mxu0 %v2344
      %v2392 = vpop.f32.mrb[0].mxu0
      %v2393 = vadd.f32 0.0, %v2392
      %v2394 = vpop.f32.mrb[0].mxu0
      %v2395 = vpop.f32.mrb[0].mxu0
      %v2396 = vadd.f32 0.0, %v2395
      %v2397 = vpop.f32.mrb[0].mxu0
      %2398 = vmatprep.mubr.bf16.mxu0 0
      %2399 = vmatmul.mubr.bf16.gmra.mrb[0].mxu0 %v2347
      %v2400 = vpop.f32.mrb[0].mxu0
      %v2401 = vadd.f32 0.0, %v2400
      %v2402 = vpop.f32.mrb[0].mxu0
      %v2403 = vpop.f32.mrb[0].mxu0
      %v2404 = vadd.f32 0.0, %v2403
      %v2405 = vpop.f32.mrb[0].mxu0
      %2406 = vmatprep.mubr.bf16.mxu0 0
      %2407 = vmatmul.mubr.bf16.gmra.mrb[0].mxu0 %v2350
      %v2408 = vpop.f32.mrb[0].mxu0
      %v2409 = vadd.f32 0.0, %v2408
      %v2410 = vpop.f32.mrb[0].mxu0
      %v2411 = vpop.f32.mrb[0].mxu0
      %v2412 = vadd.f32 0.0, %v2411
      %v2413 = vpop.f32.mrb[0].mxu0
      %2414 = vmatprep.mubr.bf16.mxu0 0
      %2415 = vmatmul.mubr.bf16.gmra.mrb[0].mxu0 %v2353
      %v2416 = vpop.f32.mrb[0].mxu0
      %v2417 = vadd.f32 0.0, %v2416
      %v2418 = vpop.f32.mrb[0].mxu0
      %v2419 = vpop.f32.mrb[0].mxu0
      %v2420 = vadd.f32 0.0, %v2419
      %v2421 = vpop.f32.mrb[0].mxu0
      %2422 = vdwg.mxu0
      %v2423 = vsel %vm426, %v2153, 0.0
      %v2424 = vsel %vm426, %v2233, 0.0
      %v2425 = vadd.f32 %v2423, %v2424
      %v2426 = vsel %vm426, %v2313, 0.0
      %v2427 = vadd.f32 %v2425, %v2426
      %v2428 = vsel %vm426, %v2393, 0.0
      %v2429 = vadd.f32 %v2427, %v2428
      %v2430 = vsel %vm426, %v2156, 0.0
      %v2431 = vsel %vm426, %v2236, 0.0
      %v2432 = vadd.f32 %v2430, %v2431
      %v2433 = vsel %vm426, %v2316, 0.0
      %v2434 = vadd.f32 %v2432, %v2433
      %v2435 = vsel %vm426, %v2396, 0.0
      %v2436 = vadd.f32 %v2434, %v2435
      %v2437 = vsel %vm426, %v2161, 0.0
      %v2438 = vsel %vm426, %v2241, 0.0
      %v2439 = vadd.f32 %v2437, %v2438
      %v2440 = vsel %vm426, %v2321, 0.0
      %v2441 = vadd.f32 %v2439, %v2440
      %v2442 = vsel %vm426, %v2401, 0.0
      %v2443 = vadd.f32 %v2441, %v2442
      %v2444 = vsel %vm426, %v2164, 0.0
      %v2445 = vsel %vm426, %v2244, 0.0
      %v2446 = vadd.f32 %v2444, %v2445
      %v2447 = vsel %vm426, %v2324, 0.0
      %v2448 = vadd.f32 %v2446, %v2447
      %v2449 = vsel %vm426, %v2404, 0.0
      %v2450 = vadd.f32 %v2448, %v2449
      %v2451 = vsel %vm426, %v2169, 0.0
      %v2452 = vsel %vm426, %v2249, 0.0
      %v2453 = vadd.f32 %v2451, %v2452
      %v2454 = vsel %vm426, %v2329, 0.0
      %v2455 = vadd.f32 %v2453, %v2454
      %v2456 = vsel %vm426, %v2409, 0.0
      %v2457 = vadd.f32 %v2455, %v2456
      %v2458 = vsel %vm426, %v2172, 0.0
      %v2459 = vsel %vm426, %v2252, 0.0
      %v2460 = vadd.f32 %v2458, %v2459
      %v2461 = vsel %vm426, %v2332, 0.0
      %v2462 = vadd.f32 %v2460, %v2461
      %v2463 = vsel %vm426, %v2412, 0.0
      %v2464 = vadd.f32 %v2462, %v2463
      %v2465 = vsel %vm426, %v2177, 0.0
      %v2466 = vsel %vm426, %v2257, 0.0
      %v2467 = vadd.f32 %v2465, %v2466
      %v2468 = vsel %vm426, %v2337, 0.0
      %v2469 = vadd.f32 %v2467, %v2468
      %v2470 = vsel %vm426, %v2417, 0.0
      %v2471 = vadd.f32 %v2469, %v2470
      %v2472 = vsel %vm426, %v2180, 0.0
      %v2473 = vsel %vm426, %v2260, 0.0
      %v2474 = vadd.f32 %v2472, %v2473
      %v2475 = vsel %vm426, %v2340, 0.0
      %v2476 = vadd.f32 %v2474, %v2475
      %v2477 = vsel %vm426, %v2420, 0.0
      %v2478 = vadd.f32 %v2476, %v2477
      %v2479 = vld [vmem:[%s6] sm:$0x1]
      %v2481 = vlaneseq
      %v2482 = vshrl.u32 %v2481, 7
      %v2483 = vsub.s32 0, %v2482
      %v2484 = vrot.slane %v2479, %v2483
      %v2486 = vadd.f32 %v2429, %v2484
      %v2487 = vadd.f32 %v2436, %v2484
      %v2488 = vadd.f32 %v2443, %v2484
      %v2489 = vadd.f32 %v2450, %v2484
      %v2490 = vadd.f32 %v2457, %v2484
      %v2491 = vadd.f32 %v2464, %v2484
      %v2492 = vadd.f32 %v2471, %v2484
      %v2493 = vadd.f32 %v2478, %v2484
      %v2494 = vadd.f32 %v408, %v2486
      %v2495 = vadd.f32 %v409, %v2487
      %v2496 = vadd.f32 %v410, %v2488
      %v2497 = vadd.f32 %v411, %v2489
      %v2498 = vadd.f32 %v412, %v2490
      %v2499 = vadd.f32 %v413, %v2491
      %v2500 = vadd.f32 %v414, %v2492
      %v2501 = vadd.f32 %v415, %v2493
      %v2502 = vsel %vm426, %v2494, 0.0
      %2503 = vadd.xlane.f32.xlu0 %v2502
      %v2504 = vpop.xlane.xlu0 %2503
      %v2505 = vsel %vm426, %v2495, 0.0
      %2506 = vadd.xlane.f32.xlu0 %v2505
      %v2507 = vpop.xlane.xlu0 %2506
      %v2508 = vsel %vm426, %v2496, 0.0
      %2509 = vadd.xlane.f32.xlu0 %v2508
      %v2510 = vpop.xlane.xlu0 %2509
      %v2511 = vsel %vm426, %v2497, 0.0
      %2512 = vadd.xlane.f32.xlu0 %v2511
      %v2513 = vpop.xlane.xlu0 %2512
      %v2514 = vsel %vm426, %v2498, 0.0
      %2515 = vadd.xlane.f32.xlu0 %v2514
      %v2516 = vpop.xlane.xlu0 %2515
      %v2517 = vsel %vm426, %v2499, 0.0
      %2518 = vadd.xlane.f32.xlu0 %v2517
      %v2519 = vpop.xlane.xlu0 %2518
      %v2520 = vsel %vm426, %v2500, 0.0
      %2521 = vadd.xlane.f32.xlu0 %v2520
      %v2522 = vpop.xlane.xlu0 %2521
      %v2523 = vsel %vm426, %v2501, 0.0
      %2524 = vadd.xlane.f32.xlu0 %v2523
      %v2525 = vpop.xlane.xlu0 %2524
      %v2526 = vmul.f32 %v2504, %v451
      %v2527 = vmul.f32 %v2507, %v451
      %v2528 = vmul.f32 %v2510, %v451
      %v2529 = vmul.f32 %v2513, %v451
      %v2530 = vmul.f32 %v2516, %v451
      %v2531 = vmul.f32 %v2519, %v451
      %v2532 = vmul.f32 %v2522, %v451
      %v2533 = vmul.f32 %v2525, %v451
      %v2534 = vsub.f32 %v2494, %v2526
      %v2535 = vsub.f32 %v2495, %v2527
      %v2536 = vsub.f32 %v2496, %v2528
      %v2537 = vsub.f32 %v2497, %v2529
      %v2538 = vsub.f32 %v2498, %v2530
      %v2539 = vsub.f32 %v2499, %v2531
      %v2540 = vsub.f32 %v2500, %v2532
      %v2541 = vsub.f32 %v2501, %v2533
      %v2542 = vmul.f32 %v2534, %v2534
      %v2543 = vmul.f32 %v2535, %v2535
      %v2544 = vmul.f32 %v2536, %v2536
      %v2545 = vmul.f32 %v2537, %v2537
      %v2546 = vmul.f32 %v2538, %v2538
      %v2547 = vmul.f32 %v2539, %v2539
      %v2548 = vmul.f32 %v2540, %v2540
      %v2549 = vmul.f32 %v2541, %v2541
      %v2550 = vsel %vm426, %v2542, 0.0
      %2551 = vadd.xlane.f32.xlu0 %v2550
      %v2552 = vpop.xlane.xlu0 %2551
      %v2553 = vsel %vm426, %v2543, 0.0
      %2554 = vadd.xlane.f32.xlu0 %v2553
      %v2555 = vpop.xlane.xlu0 %2554
      %v2556 = vsel %vm426, %v2544, 0.0
      %2557 = vadd.xlane.f32.xlu0 %v2556
      %v2558 = vpop.xlane.xlu0 %2557
      %v2559 = vsel %vm426, %v2545, 0.0
      %2560 = vadd.xlane.f32.xlu0 %v2559
      %v2561 = vpop.xlane.xlu0 %2560
      %v2562 = vsel %vm426, %v2546, 0.0
      %2563 = vadd.xlane.f32.xlu0 %v2562
      %v2564 = vpop.xlane.xlu0 %2563
      %v2565 = vsel %vm426, %v2547, 0.0
      %2566 = vadd.xlane.f32.xlu0 %v2565
      %v2567 = vpop.xlane.xlu0 %2566
      %v2568 = vsel %vm426, %v2548, 0.0
      %2569 = vadd.xlane.f32.xlu0 %v2568
      %v2570 = vpop.xlane.xlu0 %2569
      %v2571 = vsel %vm426, %v2549, 0.0
      %2572 = vadd.xlane.f32.xlu0 %v2571
      %v2573 = vpop.xlane.xlu0 %2572
      %v2574 = vmul.f32 %v2552, %v451
      %v2575 = vmul.f32 %v2555, %v451
      %v2576 = vmul.f32 %v2558, %v451
      %v2577 = vmul.f32 %v2561, %v451
      %v2578 = vmul.f32 %v2564, %v451
      %v2579 = vmul.f32 %v2567, %v451
      %v2580 = vmul.f32 %v2570, %v451
      %v2581 = vmul.f32 %v2573, %v451
      %v2582 = vadd.f32 %v2574, 1e-05
      %v2583 = vadd.f32 %v2575, 1e-05
      %v2584 = vadd.f32 %v2576, 1e-05
      %v2585 = vadd.f32 %v2577, 1e-05
      %v2586 = vadd.f32 %v2578, 1e-05
      %v2587 = vadd.f32 %v2579, 1e-05
      %v2588 = vadd.f32 %v2580, 1e-05
      %v2589 = vadd.f32 %v2581, 1e-05
      %v2590 = vrsqrt.pop %v2582
      %v2591 = vrsqrt.pop %v2583
      %v2592 = vrsqrt.pop %v2584
      %v2593 = vrsqrt.pop %v2585
      %v2594 = vrsqrt.pop %v2586
      %v2595 = vrsqrt.pop %v2587
      %v2596 = vrsqrt.pop %v2588
      %v2597 = vrsqrt.pop %v2589
      %v2598 = vmul.f32 %v2534, %v2590
      %v2599 = vmul.f32 %v2535, %v2591
      %v2600 = vmul.f32 %v2536, %v2592
      %v2601 = vmul.f32 %v2537, %v2593
      %v2602 = vmul.f32 %v2538, %v2594
      %v2603 = vmul.f32 %v2539, %v2595
      %v2604 = vmul.f32 %v2540, %v2596
      %v2605 = vmul.f32 %v2541, %v2597
      %v2606 = vmul.f32 %v2598, %v536
      %v2607 = vmul.f32 %v2599, %v536
      %v2608 = vmul.f32 %v2600, %v536
      %v2609 = vmul.f32 %v2601, %v536
      %v2610 = vmul.f32 %v2602, %v536
      %v2611 = vmul.f32 %v2603, %v536
      %v2612 = vmul.f32 %v2604, %v536
      %v2613 = vmul.f32 %v2605, %v536
      %v2614 = vadd.f32 %v2606, %v550
      %v2615 = vadd.f32 %v2607, %v550
      %v2616 = vadd.f32 %v2608, %v550
      %v2617 = vadd.f32 %v2609, %v550
      %v2618 = vadd.f32 %v2610, %v550
      %v2619 = vadd.f32 %v2611, %v550
      %v2620 = vadd.f32 %v2612, %v550
      %v2621 = vadd.f32 %v2613, %v550
      %v2622 = vpack.c.bf16 %v2615, %v2614
      %v2623 = vpack.c.bf16 %v2617, %v2616
      %v2624 = vpack.c.bf16 %v2619, %v2618
      %v2625 = vpack.c.bf16 %v2621, %v2620
      %v2626 = vld [vmem:[%s7] sm:$0xf]
      %v2627 = vld [vmem:[%s7 + $0x4] sm:$0xf]
      %v2628 = vld [vmem:[%s7 + $0x8] sm:$0xf]
      %v2629 = vld [vmem:[%s7 + $0xc] sm:$0xf]
      %v2630 = vld [vmem:[%s8] sm:$0x1]
      %v2632 = vlaneseq
      %v2633 = vshrl.u32 %v2632, 7
      %v2634 = vsub.s32 0, %v2633
      %v2635 = vrot.slane %v2630, %v2634
      %v2641 = vunpack.c.l.b16 %v2626
      %v2642 = vunpack.c.l.b16 %v2627
      %v2643 = vunpack.c.l.b16 %v2628
      %v2644 = vunpack.c.l.b16 %v2629
      %v2645 = vpack.c.b16 %v2642, %v2641
      %v2646 = vpack.c.b16 %v2644, %v2643
      %v2650 = vsel %vm426, %v2622, 0
      %v2653 = vsel %vm426, %v2623, 0
      %v2656 = vsel %vm426, %v2624, 0
      %v2659 = vsel %vm426, %v2625, 0
      %2661 = vmatprep.subr.bf16.mxu0 0
      %2662 = vmatpush1.bf16.msra.mxu0 %v2645
      %2663 = vmatprep.subr.bf16.mxu0 0
      %2664 = vmatpush1.bf16.msra.mxu0 %v2646
      %2665 = vmatprep.subr.bf16.mxu0 0
      %2666 = vmatpush1.bf16.msra.mxu0 0
      %2667 = vmatprep.subr.bf16.mxu0 0
      %2668 = vmatpush1.bf16.msra.mxu0 0
      %2669 = vmatprep.subr.bf16.mxu0 0
      %2670 = vmatpush1.bf16.msra.mxu0 0
      %2671 = vmatprep.subr.bf16.mxu0 0
      %2672 = vmatpush1.bf16.msra.mxu0 0
      %2673 = vmatprep.subr.bf16.mxu0 0
      %2674 = vmatpush1.bf16.msra.mxu0 0
      %2675 = vmatprep.subr.bf16.mxu0 0
      %2676 = vmatpush1.bf16.msra.mxu0 0
      %2677 = vmatprep.subr.bf16.mxu0 0
      %2678 = vmatpush1.bf16.msra.mxu0 0
      %2679 = vmatprep.subr.bf16.mxu0 0
      %2680 = vmatpush1.bf16.msra.mxu0 0
      %2681 = vmatprep.subr.bf16.mxu0 0
      %2682 = vmatpush1.bf16.msra.mxu0 0
      %2683 = vmatprep.subr.bf16.mxu0 0
      %2684 = vmatpush1.bf16.msra.mxu0 0
      %2685 = vmatprep.subr.bf16.mxu0 0
      %2686 = vmatpush1.bf16.msra.mxu0 0
      %2687 = vmatprep.subr.bf16.mxu0 0
      %2688 = vmatpush1.bf16.msra.mxu0 0
      %2689 = vmatprep.subr.bf16.mxu0 0
      %2690 = vmatpush1.bf16.msra.mxu0 0
      %2691 = vmatprep.subr.bf16.mxu0 0
      %2692 = vmatpush1.bf16.msra.mxu0 0
      %2693 = vmatprep.mubr.bf16.mxu0 0
      %2694 = vmatmul.mubr.bf16.gmra.mrb[0].mxu0 %v2650
      %v2695 = vpop.f32.mrb[0].mxu0
      %v2696 = vadd.f32 %v2635, %v2695
      %v2697 = vpop.f32.mrb[0].mxu0
      %v2698 = vpop.f32.mrb[0].mxu0
      %v2699 = vadd.f32 %v2635, %v2698
      %v2700 = vpop.f32.mrb[0].mxu0
      %2701 = vmatprep.mubr.bf16.mxu0 0
      %2702 = vmatmul.mubr.bf16.gmra.mrb[0].mxu0 %v2653
      %v2703 = vpop.f32.mrb[0].mxu0
      %v2704 = vadd.f32 %v2635, %v2703
      %v2705 = vpop.f32.mrb[0].mxu0
      %v2706 = vpop.f32.mrb[0].mxu0
      %v2707 = vadd.f32 %v2635, %v2706
      %v2708 = vpop.f32.mrb[0].mxu0
      %2709 = vmatprep.mubr.bf16.mxu0 0
      %2710 = vmatmul.mubr.bf16.gmra.mrb[0].mxu0 %v2656
      %v2711 = vpop.f32.mrb[0].mxu0
      %v2712 = vadd.f32 %v2635, %v2711
      %v2713 = vpop.f32.mrb[0].mxu0
      %v2714 = vpop.f32.mrb[0].mxu0
      %v2715 = vadd.f32 %v2635, %v2714
      %v2716 = vpop.f32.mrb[0].mxu0
      %2717 = vmatprep.mubr.bf16.mxu0 0
      %2718 = vmatmul.mubr.bf16.gmra.mrb[0].mxu0 %v2659
      %v2719 = vpop.f32.mrb[0].mxu0
      %v2720 = vadd.f32 %v2635, %v2719
      %v2721 = vpop.f32.mrb[0].mxu0
      %v2722 = vpop.f32.mrb[0].mxu0
      %v2723 = vadd.f32 %v2635, %v2722
      %v2724 = vpop.f32.mrb[0].mxu0
      %2725 = vdwg.mxu0
      %v2726 = vmul.f32 %v2696, 0.5
      %v2727 = vmul.f32 %v2699, 0.5
      %v2728 = vmul.f32 %v2704, 0.5
      %v2729 = vmul.f32 %v2707, 0.5
      %v2730 = vmul.f32 %v2712, 0.5
      %v2731 = vmul.f32 %v2715, 0.5
      %v2732 = vmul.f32 %v2720, 0.5
      %v2733 = vmul.f32 %v2723, 0.5
      %v2734 = vmul.f32 %v2696, 0.70710677
      %v2735 = vmul.f32 %v2699, 0.70710677
      %v2736 = vmul.f32 %v2704, 0.70710677
      %v2737 = vmul.f32 %v2707, 0.70710677
      %v2738 = vmul.f32 %v2712, 0.70710677
      %v2739 = vmul.f32 %v2715, 0.70710677
      %v2740 = vmul.f32 %v2720, 0.70710677
      %v2741 = vmul.f32 %v2723, 0.70710677
      %v2742 = verf.f32.pop %v2734
      %v2743 = verf.f32.pop %v2735
      %v2744 = verf.f32.pop %v2736
      %v2745 = verf.f32.pop %v2737
      %v2746 = verf.f32.pop %v2738
      %v2747 = verf.f32.pop %v2739
      %v2748 = verf.f32.pop %v2740
      %v2749 = verf.f32.pop %v2741
      %v2750 = vadd.f32 %v2742, 1.0
      %v2751 = vadd.f32 %v2743, 1.0
      %v2752 = vadd.f32 %v2744, 1.0
      %v2753 = vadd.f32 %v2745, 1.0
      %v2754 = vadd.f32 %v2746, 1.0
      %v2755 = vadd.f32 %v2747, 1.0
      %v2756 = vadd.f32 %v2748, 1.0
      %v2757 = vadd.f32 %v2749, 1.0
      %v2758 = vmul.f32 %v2726, %v2750
      %v2759 = vmul.f32 %v2727, %v2751
      %v2760 = vmul.f32 %v2728, %v2752
      %v2761 = vmul.f32 %v2729, %v2753
      %v2762 = vmul.f32 %v2730, %v2754
      %v2763 = vmul.f32 %v2731, %v2755
      %v2764 = vmul.f32 %v2732, %v2756
      %v2765 = vmul.f32 %v2733, %v2757
      %v2766 = vpack.c.bf16 %v2759, %v2758
      %v2767 = vpack.c.bf16 %v2761, %v2760
      %v2768 = vpack.c.bf16 %v2763, %v2762
      %v2769 = vpack.c.bf16 %v2765, %v2764
      %v2770 = vld [vmem:[%s9] sm:$0xf]
      %v2771 = vld [vmem:[%s9 + $0x4] sm:$0xf]
      %v2772 = vld [vmem:[%s9 + $0x8] sm:$0xf]
      %v2773 = vld [vmem:[%s9 + $0xc] sm:$0xf]
      %v2774 = vld [vmem:[%s9 + $0x10] sm:$0xf]
      %v2775 = vld [vmem:[%s9 + $0x14] sm:$0xf]
      %v2776 = vld [vmem:[%s9 + $0x18] sm:$0xf]
      %v2777 = vld [vmem:[%s9 + $0x1c] sm:$0xf]
      %v2778 = vld [vmem:[%s9 + $0x20] sm:$0xf]
      %v2779 = vld [vmem:[%s9 + $0x24] sm:$0xf]
      %v2780 = vld [vmem:[%s9 + $0x28] sm:$0xf]
      %v2781 = vld [vmem:[%s9 + $0x2c] sm:$0xf]
      %v2782 = vld [vmem:[%s9 + $0x30] sm:$0xf]
      %v2783 = vld [vmem:[%s9 + $0x34] sm:$0xf]
      %v2784 = vld [vmem:[%s9 + $0x38] sm:$0xf]
      %v2785 = vld [vmem:[%s9 + $0x3c] sm:$0xf]
      %v2802 = vunpack.c.l.b16 %v2770
      %v2803 = vunpack.c.l.b16 %v2771
      %v2804 = vunpack.c.l.b16 %v2772
      %v2805 = vunpack.c.l.b16 %v2773
      %v2806 = vunpack.c.l.b16 %v2774
      %v2807 = vunpack.c.l.b16 %v2775
      %v2808 = vunpack.c.l.b16 %v2776
      %v2809 = vunpack.c.l.b16 %v2777
      %v2810 = vunpack.c.l.b16 %v2778
      %v2811 = vunpack.c.l.b16 %v2779
      %v2812 = vunpack.c.l.b16 %v2780
      %v2813 = vunpack.c.l.b16 %v2781
      %v2814 = vunpack.c.l.b16 %v2782
      %v2815 = vunpack.c.l.b16 %v2783
      %v2816 = vunpack.c.l.b16 %v2784
      %v2817 = vunpack.c.l.b16 %v2785
      %v2818 = vpack.c.b16 %v2803, %v2802
      %v2819 = vpack.c.b16 %v2805, %v2804
      %v2820 = vpack.c.b16 %v2807, %v2806
      %v2821 = vpack.c.b16 %v2809, %v2808
      %v2822 = vpack.c.b16 %v2811, %v2810
      %v2823 = vpack.c.b16 %v2813, %v2812
      %v2824 = vpack.c.b16 %v2815, %v2814
      %v2825 = vpack.c.b16 %v2817, %v2816
      %2834 = vmatprep.subr.bf16.mxu0 0
      %2835 = vmatpush1.bf16.msra.mxu0 %v2818
      %2836 = vmatprep.subr.bf16.mxu0 0
      %2837 = vmatpush1.bf16.msra.mxu0 %v2819
      %2838 = vmatprep.subr.bf16.mxu0 0
      %2839 = vmatpush1.bf16.msra.mxu0 %v2820
      %2840 = vmatprep.subr.bf16.mxu0 0
      %2841 = vmatpush1.bf16.msra.mxu0 %v2821
      %2842 = vmatprep.subr.bf16.mxu0 0
      %2843 = vmatpush1.bf16.msra.mxu0 %v2822
      %2844 = vmatprep.subr.bf16.mxu0 0
      %2845 = vmatpush1.bf16.msra.mxu0 %v2823
      %2846 = vmatprep.subr.bf16.mxu0 0
      %2847 = vmatpush1.bf16.msra.mxu0 %v2824
      %2848 = vmatprep.subr.bf16.mxu0 0
      %2849 = vmatpush1.bf16.msra.mxu0 %v2825
      %2850 = vmatprep.subr.bf16.mxu0 0
      %2851 = vmatpush1.bf16.msra.mxu0 0
      %2852 = vmatprep.subr.bf16.mxu0 0
      %2853 = vmatpush1.bf16.msra.mxu0 0
      %2854 = vmatprep.subr.bf16.mxu0 0
      %2855 = vmatpush1.bf16.msra.mxu0 0
      %2856 = vmatprep.subr.bf16.mxu0 0
      %2857 = vmatpush1.bf16.msra.mxu0 0
      %2858 = vmatprep.subr.bf16.mxu0 0
      %2859 = vmatpush1.bf16.msra.mxu0 0
      %2860 = vmatprep.subr.bf16.mxu0 0
      %2861 = vmatpush1.bf16.msra.mxu0 0
      %2862 = vmatprep.subr.bf16.mxu0 0
      %2863 = vmatpush1.bf16.msra.mxu0 0
      %2864 = vmatprep.subr.bf16.mxu0 0
      %2865 = vmatpush1.bf16.msra.mxu0 0
      %2866 = vmatprep.mubr.bf16.mxu0 0
      %2867 = vmatmul.mubr.bf16.gmra.mrb[0].mxu0 %v2766
      %v2868 = vpop.f32.mrb[0].mxu0
      %v2869 = vadd.f32 0.0, %v2868
      %v2870 = vpop.f32.mrb[0].mxu0
      %v2871 = vpop.f32.mrb[0].mxu0
      %v2872 = vadd.f32 0.0, %v2871
      %v2873 = vpop.f32.mrb[0].mxu0
      %2874 = vmatprep.mubr.bf16.mxu0 0
      %2875 = vmatmul.mubr.bf16.gmra.mrb[0].mxu0 %v2767
      %v2876 = vpop.f32.mrb[0].mxu0
      %v2877 = vadd.f32 0.0, %v2876
      %v2878 = vpop.f32.mrb[0].mxu0
      %v2879 = vpop.f32.mrb[0].mxu0
      %v2880 = vadd.f32 0.0, %v2879
      %v2881 = vpop.f32.mrb[0].mxu0
      %2882 = vmatprep.mubr.bf16.mxu0 0
      %2883 = vmatmul.mubr.bf16.gmra.mrb[0].mxu0 %v2768
      %v2884 = vpop.f32.mrb[0].mxu0
      %v2885 = vadd.f32 0.0, %v2884
      %v2886 = vpop.f32.mrb[0].mxu0
      %v2887 = vpop.f32.mrb[0].mxu0
      %v2888 = vadd.f32 0.0, %v2887
      %v2889 = vpop.f32.mrb[0].mxu0
      %2890 = vmatprep.mubr.bf16.mxu0 0
      %2891 = vmatmul.mubr.bf16.gmra.mrb[0].mxu0 %v2769
      %v2892 = vpop.f32.mrb[0].mxu0
      %v2893 = vadd.f32 0.0, %v2892
      %v2894 = vpop.f32.mrb[0].mxu0
      %v2895 = vpop.f32.mrb[0].mxu0
      %v2896 = vadd.f32 0.0, %v2895
      %v2897 = vpop.f32.mrb[0].mxu0
      %2898 = vdwg.mxu0
      %v2899 = vadd.f32 %v2494, %v2869
      %v2900 = vadd.f32 %v2495, %v2872
      %v2901 = vadd.f32 %v2496, %v2877
      %v2902 = vadd.f32 %v2497, %v2880
      %v2903 = vadd.f32 %v2498, %v2885
      %v2904 = vadd.f32 %v2499, %v2888
      %v2905 = vadd.f32 %v2500, %v2893
      %v2906 = vadd.f32 %v2501, %v2896
      %v2907 = vld [vmem:[%s10] sm:$0x1]
      %v2909 = vlaneseq
      %v2910 = vshrl.u32 %v2909, 7
      %v2911 = vsub.s32 0, %v2910
      %v2912 = vrot.slane %v2907, %v2911
      %v2914 = vadd.f32 %v2899, %v2912
      %v2915 = vadd.f32 %v2900, %v2912
      %v2916 = vadd.f32 %v2901, %v2912
      %v2917 = vadd.f32 %v2902, %v2912
      %v2918 = vadd.f32 %v2903, %v2912
      %v2919 = vadd.f32 %v2904, %v2912
      %v2920 = vadd.f32 %v2905, %v2912
      %v2921 = vadd.f32 %v2906, %v2912
      %2922 = vxpose.xlu0.b32.start [1/16] %v2914, 128
      %2923 = vxpose.xlu0.b32.cont [2/16] %v2915, 128
      %2924 = vxpose.xlu0.b32.cont [3/16] %v2916, 128
      %2925 = vxpose.xlu0.b32.cont [4/16] %v2917, 128
      %2926 = vxpose.xlu0.b32.cont [5/16] %v2918, 128
      %2927 = vxpose.xlu0.b32.cont [6/16] %v2919, 128
      %2928 = vxpose.xlu0.b32.cont [7/16] %v2920, 128
      %2929 = vxpose.xlu0.b32.cont [8/16] %v2921, 128
      %2930 = vxpose.xlu0.b32.cont [9/16] 0.0, 128
      %2931 = vxpose.xlu0.b32.cont [10/16] 0.0, 128
      %2932 = vxpose.xlu0.b32.cont [11/16] 0.0, 128
      %2933 = vxpose.xlu0.b32.cont [12/16] 0.0, 128
      %2934 = vxpose.xlu0.b32.cont [13/16] 0.0, 128
      %2935 = vxpose.xlu0.b32.cont [14/16] 0.0, 128
      %2936 = vxpose.xlu0.b32.cont [15/16] 0.0, 128
      %2937 = vxpose.xlu0.b32.end [16/16] 0.0, 128
      %v2938 = vpop.trf.xlu0
      %v2939 = vpop.trf.xlu0
      %v2940 = vpop.trf.xlu0
      %v2941 = vpop.trf.xlu0
      %v2942 = vpop.trf.xlu0
      %v2943 = vpop.trf.xlu0
      %v2944 = vpop.trf.xlu0
      %v2945 = vpop.trf.xlu0
      %v2946 = vpop.trf.xlu0
      %v2947 = vpop.trf.xlu0
      %v2948 = vpop.trf.xlu0
      %v2949 = vpop.trf.xlu0
      %v2950 = vpop.trf.xlu0
      %v2951 = vpop.trf.xlu0
      %v2952 = vpop.trf.xlu0
      %v2953 = vpop.trf.xlu0
      %2954 = vst.msk [vmem:[%s386] sm:$0xff] %vm1310, %v2938
      %2955 = vst.msk [vmem:[%s386 + $0x8] sm:$0xff] %vm1310, %v2939
      %2956 = vst.msk [vmem:[%s386 + $0x10] sm:$0xff] %vm1310, %v2940
      %2957 = vst.msk [vmem:[%s386 + $0x18] sm:$0xff] %vm1310, %v2941
      %p2958 = scmp.lt.s32.totalorder %s22, 1
      %s2959 = scalar_select %p2958, %s22, 1
      %s2960 = smul.addr %s2959, 4
      %s2961 = smul.addr %s2960, 8
      %s2962 = scalar_lea.vmem %s11, %s2961
      // Predicated region
      $region65: #{transformer_block.1} parent=63 // pred_check
        %p2963 = pneg %p276
      $region66: #{transformer_block.1} parent=63 // pred_check_branch
        %2965 = sbr.rel (%p2963) target = $region68
      $region67: #{transformer_block.1} parent=63 // pred_region
        _
      $region68: #{transformer_block.1} parent=63 // pred_fallthru
        _
    $region64: #{transformer_block.1} parent=5 // pred_fallthru
      _
    %p2966 = scmp.le.s32.totalorder 2, %s17
    // Predicated region
    $region69: #{transformer_block.1} parent=5 // pred_check
      %p2967 = pneg %p2966
    $region70: #{transformer_block.1} parent=5 // pred_check_branch
      %2969 = sbr.rel (%p2967) target = $region72
    $region71: #{transformer_block.1} parent=5 // pred_region
      %s2970 = ssub.s32 %s17, 2
      // Predicated region
      $region73: #{transformer_block.1} parent=71 // pred_check
        %p2971 = pneg %p282
      $region74: #{transformer_block.1} parent=71 // pred_check_branch
        %2973 = sbr.rel (%p2971) target = $region76
      $region75: #{transformer_block.1} parent=71 // pred_region
        %p2974 = scmp.lt.s32.totalorder %s23, 1
        %s2975 = scalar_select %p2974, %s23, 1
        %s2976 = smul.addr %s2975, 4
        %s2977 = smul.addr %s2976, 8
        %s2978 = scalar_lea.vmem %s11, %s2977
      $region76: #{transformer_block.1} parent=71 // pred_fallthru
        _
    $region72: #{transformer_block.1} parent=5 // pred_fallthru
      _
  $region6: #{transformer_block.1} parent=0 // loop_footer
    %s21 = sadd.s32 1, %s17
  $region7: #{transformer_block.1} parent=0 // loop_footer_branch
    %16 = sbr.rel target = $region3
  $region8: #{transformer_block.1} parent=0 // loop_exit
    _

</llo_original>
